<compile_context>
chip_gen: v7x
topology: tpu7x:2x2x1
jax: 0.10.0
libtpu: 0.0.40
codegen_flags: <defaults>
</compile_context>

<pallas_src>
import functools

import jax
import jax.numpy as jnp
from jax import lax
from jax.experimental import pallas as pl
from jax.experimental.pallas import tpu as pltpu

# ---------------- config (small, consistent with Decoder.forward) -------------
VOCAB = 64      # vocab_size
EMBED = 32      # embed_dim
HIDDEN = 32     # hidden_size
LAYERS = 2      # GRU layers
BATCH = 1       # forward() default batch_size=1 (the supported path)
MAX_N = 8       # max decode length
PAD, SOS, EOS, UNK = 0, 1, 2, 3

HP = 128        # lane-padded width used for hidden / embed / vocab / gate slabs
NEG = -1e30     # "-inf" for masked / padded logits


def _hidden_windows(layers):
    """Lane window (offset) where layer l's hidden state lives.

    Layer 0's x-input is the vocab one-hot (lanes 0:VOCAB), so its hidden goes
    to lanes VOCAB:VOCAB+H.  Deeper layers alternate between windows 0 and 32
    so that each layer's x-input (= previous layer's hidden window) and its own
    hidden window never overlap -> lhs = x + h needs no shuffles.
    """
    win = []
    for l in range(layers):
        if l == 0:
            win.append(VOCAB)
        else:
            win.append(0 if win[l - 1] != 0 else HIDDEN)
    return win


WIN = _hidden_windows(LAYERS)


def _sigmoid(x):
    # single-EUP sigmoid via tanh (mathematically == 1/(1+exp(-x)))
    return 0.5 * (jnp.tanh(0.5 * x) + 1.0)


# ---------------- Pallas kernel: full fused greedy decode ----------------------
def _make_decode_kernel(L, max_n):
    assert max_n <= HP

    def kernel(h0_ref, wcat_ref, bcat_ref, wout_ref, bout_ref, toks_ref, hout_ref):
        idx = lax.broadcasted_iota(jnp.int32, (1, HP), 1)   # lane ids 0..127

        # ---- register-carried state (a handful of vregs), no VMEM round trips
        h = [h0_ref[l] for l in range(L)]                   # each (1, HP)
        sel = (idx == SOS).astype(jnp.float32)               # one-hot of last token
        done = jnp.zeros((1, 1), jnp.bool_)                  # EOS/PAD already hit?
        toks = jnp.full((1, HP), -1, jnp.int32)               # -1 = "not produced"

        bias = [bcat_ref[l] for l in range(L)]               # small, hoisted
        b_first = bout_ref[0]                                 # step 0: no UNK mask
        b_rest = bout_ref[1]                                  # steps>=1: UNK lane = -1e30

        for i in range(max_n):                                # fully unrolled
            act = jnp.logical_not(done)                       # (1,1) bool

            # ---- stacked GRU cell: ONE K=128 fused dot per layer -------------
            # Layer 0's x-rows of wcat already contain emb @ W_ih (embedding
            # gather fused into the gate matmul).
            x_in = sel                                        # lanes 0:VOCAB
            for l in range(L):
                lhs = x_in + h[l]                             # disjoint lane windows
                g = jnp.dot(lhs, wcat_ref[l],
                            preferred_element_type=jnp.float32) + bias[l]  # (1, 4*HP)
                r = _sigmoid(g[:, 0:HP])                      # x@Wr + h@Ur + (b_ir+b_hr)
                z = _sigmoid(g[:, HP:2 * HP])                 # x@Wz + h@Uz + (b_iz+b_hz)
                n_g = jnp.tanh(g[:, 2 * HP:3 * HP]            # x@Wn + b_in
                               + r * g[:, 3 * HP:4 * HP])     # + r*(h@Un + b_hn)
                h_new = (1.0 - z) * n_g + z * h[l]
                h[l] = jnp.where(act, h_new, h[l])            # freeze once done
                x_in = h_new

            # ---- output projection; padded vocab lanes carry -1e30 bias ------
            # For i >= 1 the UNK lane also carries -1e30, which is exactly
            # equivalent to torch's "if argmax==UNK: zero it and re-argmax".
            logits = jnp.dot(x_in, wout_ref[...],
                             preferred_element_type=jnp.float32) \
                     + (b_first if i == 0 else b_rest)

            # greedy argmax (first max index, like torch.argmax): 1 max + 1 min
            lmax = jnp.max(logits, axis=-1, keepdims=True)
            amin = jnp.min(jnp.where(logits >= lmax, idx, jnp.int32(HP)),
                           axis=-1, keepdims=True)            # (1,1) int32
            # TODO(synk): the host-side `print(pred)` debug print is omitted.

            # ---- commit state only while active ------------------------------
            sel = jnp.where(act, (idx == amin).astype(jnp.float32), sel)
            toks = jnp.where(jnp.logical_and(idx == i, act), amin, toks)
            hit = jnp.logical_or(amin == EOS, amin == PAD)    # (1,1) bool
            done = jnp.logical_or(done, jnp.logical_and(act, hit))

        # ---- single VMEM writeback of outputs --------------------------------
        toks_ref[...] = toks
        for l in range(L):
            hout_ref[l] = h[l]

    return kernel


def _decode_call(h0_pad, wcat, bcat, wout_pad, bout_pad, *, max_n):
    kernel = _make_decode_kernel(LAYERS, max_n)
    vmem = lambda: pl.BlockSpec(memory_space=pltpu.MemorySpace.VMEM)
    return pl.pallas_call(
        kernel,
        out_shape=(jax.ShapeDtypeStruct((1, HP), jnp.int32),            # tokens row
                   jax.ShapeDtypeStruct((LAYERS, 1, HP), jnp.float32)), # final hidden
        in_specs=[vmem() for _ in range(5)],
        out_specs=(vmem(), vmem()),
    )(h0_pad, wcat, bcat, wout_pad, bout_pad)


# ---------------- deterministic parameter init (PyTorch-default style) --------
def init_params(key):
    keys = jax.random.split(key, 16)
    emb = jax.random.normal(keys[0], (VOCAB, EMBED), jnp.float32)
    emb = emb.at[PAD].set(0.0)                       # padding_idx=pad
    k = 1.0 / float(HIDDEN) ** 0.5
    raw = []
    ki = 1
    for l in range(LAYERS):
        in_dim = EMBED if l == 0 else HIDDEN
        w_ih = jax.random.uniform(keys[ki], (3 * HIDDEN, in_dim), jnp.float32, -k, k); ki += 1
        w_hh = jax.random.uniform(keys[ki], (3 * HIDDEN, HIDDEN), jnp.float32, -k, k); ki += 1
        b_ih = jax.random.uniform(keys[ki], (3 * HIDDEN,), jnp.float32, -k, k); ki += 1
        b_hh = jax.random.uniform(keys[ki], (3 * HIDDEN,), jnp.float32, -k, k); ki += 1
        raw.append((w_ih, w_hh, b_ih, b_hh))
    w_out = jax.random.uniform(keys[ki], (VOCAB, HIDDEN), jnp.float32, -k, k); ki += 1
    b_out = jax.random.uniform(keys[ki], (VOCAB,), jnp.float32, -k, k)
    raw.append((w_out, b_out))
    return emb, raw


def pack_params(emb, raw):
    """Pack PyTorch-layout GRU/Linear weights into lane-windowed kernel slabs.

    Per layer: one (HP, 4*HP) weight whose rows are indexed by the lanes of the
    combined lhs (x window + h window) and whose columns are four 128-lane gate
    slabs [r | z | n_x | n_h], each holding its values in the layer's hidden
    window.  Layer 0's x-rows are pre-multiplied by the embedding (E0 = emb @
    W_ih0), fusing the embedding gather into the gate matmul.
    """
    H = HIDDEN
    wcat, bcat = [], []
    for l in range(LAYERS):
        w_ih, w_hh, b_ih, b_hh = raw[l]
        go = WIN[l]                                   # this layer's hidden/gate window
        W = jnp.zeros((HP, 4 * HP), jnp.float32)
        if l == 0:
            xs = [emb @ w_ih[0:H].T, emb @ w_ih[H:2 * H].T, emb @ w_ih[2 * H:3 * H].T]
            x0, xw = 0, VOCAB                         # x = vocab one-hot, lanes 0:VOCAB
        else:
            xs = [w_ih[0:H].T, w_ih[H:2 * H].T, w_ih[2 * H:3 * H].T]
            x0, xw = WIN[l - 1], H                    # x = prev layer's hidden window
        W = W.at[x0:x0 + xw, 0 * HP + go:0 * HP + go + H].set(xs[0])          # r (x)
        W = W.at[x0:x0 + xw, 1 * HP + go:1 * HP + go + H].set(xs[1])          # z (x)
        W = W.at[x0:x0 + xw, 2 * HP + go:2 * HP + go + H].set(xs[2])          # n (x)
        W = W.at[go:go + H, 0 * HP + go:0 * HP + go + H].set(w_hh[0:H].T)      # r (h)
        W = W.at[go:go + H, 1 * HP + go:1 * HP + go + H].set(w_hh[H:2 * H].T)  # z (h)
        W = W.at[go:go + H, 3 * HP + go:3 * HP + go + H].set(w_hh[2 * H:3 * H].T)  # n (h)
        wcat.append(W)
        b = jnp.zeros((1, 4 * HP), jnp.float32)
        b = b.at[0, 0 * HP + go:0 * HP + go + H].set(b_ih[0:H] + b_hh[0:H])          # r
        b = b.at[0, 1 * HP + go:1 * HP + go + H].set(b_ih[H:2 * H] + b_hh[H:2 * H])  # z
        b = b.at[0, 2 * HP + go:2 * HP + go + H].set(b_ih[2 * H:3 * H])              # n (x)
        b = b.at[0, 3 * HP + go:3 * HP + go + H].set(b_hh[2 * H:3 * H])              # n (h)
        bcat.append(b)
    w_out, b_out = raw[LAYERS]
    go = WIN[LAYERS - 1]
    wout_pad = jnp.zeros((HP, HP), jnp.float32).at[go:go + HIDDEN, :VOCAB].set(w_out.T)
    # row 0: step-0 logits bias (padded vocab lanes -> -1e30)
    # row 1: steps>=1 bias (UNK lane additionally -> -1e30  ==  UNK re-argmax rule)
    bout_pad = jnp.full((2, 1, HP), NEG, jnp.float32)
    bout_pad = bout_pad.at[:, 0, :VOCAB].set(b_out)
    bout_pad = bout_pad.at[1, 0, UNK].set(NEG)
    return (jnp.stack(wcat), jnp.stack(bcat), wout_pad, bout_pad)


# ---------------- greedy decode = Decoder.forward (batch_size == 1 path) ------
@functools.partial(jax.jit, static_argnames=("max_n",))
def greedy_decode(h0, packed, *, max_n):
    # TODO(synk): teacher_force() and the batch_size>1 branch of forward() are
    # not implemented; only the default greedy batch_size==1 path is fused.
    wcat, bcat, wout_pad, bout_pad = packed
    h0_pad = jnp.zeros((LAYERS, 1, HP), jnp.float32)
    for l in range(LAYERS):
        h0_pad = h0_pad.at[l, :, WIN[l]:WIN[l] + HIDDEN].set(h0[l])
    toks_row, h_pad = _decode_call(h0_pad, wcat, bcat, wout_pad, bout_pad, max_n=max_n)
    toks = toks_row[0, :max_n]                        # (max_n,) int32, -1 padded
    n = jnp.sum((toks >= 0).astype(jnp.int32))        # number of tokens produced
    h_t = jnp.stack([h_pad[l, :, WIN[l]:WIN[l] + HIDDEN] for l in range(LAYERS)])
    return toks, n, h_t                               # h_t: (layers, 1, hidden)


if __name__ == "__main__":
    key = jax.random.PRNGKey(0)
    pkey, hkey = jax.random.split(key)
    emb, raw = init_params(pkey)
    packed = pack_params(emb, raw)
    # encoder context h_0: (layers, batch, hidden)
    h0 = jax.random.normal(hkey, (LAYERS, BATCH, HIDDEN), jnp.float32)

    outputs, n, h_t = greedy_decode(h0, packed, max_n=MAX_N)
    jax.block_until_ready((outputs, n, h_t))
    print("KERNEL_OK")
</pallas_src>

<mosaic_0001>
module attributes {stable_mosaic.version = 11 : i64} {
  func.func @kernel(%arg0: memref<2x1x128xf32, #tpu.memory_space<vmem>>, %arg1: memref<2x128x512xf32, #tpu.memory_space<vmem>>, %arg2: memref<2x1x512xf32, #tpu.memory_space<vmem>>, %arg3: memref<128x128xf32, #tpu.memory_space<vmem>>, %arg4: memref<2x1x128xf32, #tpu.memory_space<vmem>>, %arg5: memref<1x128xi32, #tpu.memory_space<vmem>>, %arg6: memref<2x1x128xf32, #tpu.memory_space<vmem>>) attributes {dimension_semantics = [], scalar_prefetch = 0 : i64, scratch_operands = 0 : i64, tpu.core_type = #tpu.core_type<tc>} {
    %0 = tpu.iota {dimensions = array<i32: 1>} : vector<1x128xi32>
    %c0 = arith.constant 0 : index
    %c0_0 = arith.constant 0 : index
    %c0_1 = arith.constant 0 : index
    %1 = vector.load %arg0[%c0, %c0_0, %c0_1] : memref<2x1x128xf32, #tpu.memory_space<vmem>>, vector<1x1x128xf32>
    %2 = vector.shape_cast %1 : vector<1x1x128xf32> to vector<1x128xf32>
    %c1 = arith.constant 1 : index
    %c0_2 = arith.constant 0 : index
    %c0_3 = arith.constant 0 : index
    %3 = vector.load %arg0[%c1, %c0_2, %c0_3] : memref<2x1x128xf32, #tpu.memory_space<vmem>>, vector<1x1x128xf32>
    %4 = vector.shape_cast %3 : vector<1x1x128xf32> to vector<1x128xf32>
    %c1_i32 = arith.constant 1 : i32
    %5 = vector.broadcast %c1_i32 : i32 to vector<1x128xi32>
    %6 = arith.cmpi eq, %0, %5 : vector<1x128xi32>
    %7 = arith.extui %6 : vector<1x128xi1> to vector<1x128xi32>
    %8 = arith.sitofp %7 : vector<1x128xi32> to vector<1x128xf32>
    %false = arith.constant false
    %9 = vector.broadcast %false : i1 to vector<1x1xi1>
    %c-1_i32 = arith.constant -1 : i32
    %10 = vector.broadcast %c-1_i32 : i32 to vector<1x128xi32>
    %c0_4 = arith.constant 0 : index
    %c0_5 = arith.constant 0 : index
    %c0_6 = arith.constant 0 : index
    %11 = vector.load %arg2[%c0_4, %c0_5, %c0_6] : memref<2x1x512xf32, #tpu.memory_space<vmem>>, vector<1x1x512xf32>
    %12 = vector.shape_cast %11 : vector<1x1x512xf32> to vector<1x512xf32>
    %c1_7 = arith.constant 1 : index
    %c0_8 = arith.constant 0 : index
    %c0_9 = arith.constant 0 : index
    %13 = vector.load %arg2[%c1_7, %c0_8, %c0_9] : memref<2x1x512xf32, #tpu.memory_space<vmem>>, vector<1x1x512xf32>
    %14 = vector.shape_cast %13 : vector<1x1x512xf32> to vector<1x512xf32>
    %c0_10 = arith.constant 0 : index
    %c0_11 = arith.constant 0 : index
    %c0_12 = arith.constant 0 : index
    %15 = vector.load %arg4[%c0_10, %c0_11, %c0_12] : memref<2x1x128xf32, #tpu.memory_space<vmem>>, vector<1x1x128xf32>
    %16 = vector.shape_cast %15 : vector<1x1x128xf32> to vector<1x128xf32>
    %c1_13 = arith.constant 1 : index
    %c0_14 = arith.constant 0 : index
    %c0_15 = arith.constant 0 : index
    %17 = vector.load %arg4[%c1_13, %c0_14, %c0_15] : memref<2x1x128xf32, #tpu.memory_space<vmem>>, vector<1x1x128xf32>
    %18 = vector.shape_cast %17 : vector<1x1x128xf32> to vector<1x128xf32>
    %cst = arith.constant dense<true> : vector<1x1xi1>
    %19 = arith.xori %9, %cst : vector<1x1xi1>
    %20 = arith.addf %8, %2 : vector<1x128xf32>
    %c0_16 = arith.constant 0 : index
    %c0_17 = arith.constant 0 : index
    %c0_18 = arith.constant 0 : index
    %21 = vector.load %arg1[%c0_16, %c0_17, %c0_18] : memref<2x128x512xf32, #tpu.memory_space<vmem>>, vector<1x128x512xf32>
    %22 = vector.shape_cast %21 : vector<1x128x512xf32> to vector<128x512xf32>
    %cst_19 = arith.constant dense<0.000000e+00> : vector<1x512xf32>
    %23 = tpu.matmul %20, %22, %cst_19 {dimension_numbers = #tpu.dot_dimension_numbers<[1], [0], [0], [1], [0, 0, 1, 1], [], []>} : vector<1x128xf32>, vector<128x512xf32>, vector<1x512xf32> -> vector<1x512xf32>
    %24 = arith.addf %23, %12 : vector<1x512xf32>
    %25 = vector.extract_strided_slice %24 {offsets = [0, 0], sizes = [1, 128], strides = [1, 1]} : vector<1x512xf32> to vector<1x128xf32>
    %cst_20 = arith.constant 5.000000e-01 : f32
    %26 = vector.broadcast %cst_20 : f32 to vector<1x128xf32>
    %27 = arith.mulf %26, %25 : vector<1x128xf32>
    %28 = math.tanh %27 : vector<1x128xf32>
    %cst_21 = arith.constant 1.000000e+00 : f32
    %29 = vector.broadcast %cst_21 : f32 to vector<1x128xf32>
    %30 = arith.addf %28, %29 : vector<1x128xf32>
    %cst_22 = arith.constant 5.000000e-01 : f32
    %31 = vector.broadcast %cst_22 : f32 to vector<1x128xf32>
    %32 = arith.mulf %31, %30 : vector<1x128xf32>
    %33 = vector.extract_strided_slice %24 {offsets = [0, 128], sizes = [1, 128], strides = [1, 1]} : vector<1x512xf32> to vector<1x128xf32>
    %cst_23 = arith.constant 5.000000e-01 : f32
    %34 = vector.broadcast %cst_23 : f32 to vector<1x128xf32>
    %35 = arith.mulf %34, %33 : vector<1x128xf32>
    %36 = math.tanh %35 : vector<1x128xf32>
    %cst_24 = arith.constant 1.000000e+00 : f32
    %37 = vector.broadcast %cst_24 : f32 to vector<1x128xf32>
    %38 = arith.addf %36, %37 : vector<1x128xf32>
    %cst_25 = arith.constant 5.000000e-01 : f32
    %39 = vector.broadcast %cst_25 : f32 to vector<1x128xf32>
    %40 = arith.mulf %39, %38 : vector<1x128xf32>
    %41 = vector.extract_strided_slice %24 {offsets = [0, 256], sizes = [1, 128], strides = [1, 1]} : vector<1x512xf32> to vector<1x128xf32>
    %42 = vector.extract_strided_slice %24 {offsets = [0, 384], sizes = [1, 128], strides = [1, 1]} : vector<1x512xf32> to vector<1x128xf32>
    %43 = arith.mulf %32, %42 : vector<1x128xf32>
    %44 = arith.addf %41, %43 : vector<1x128xf32>
    %45 = math.tanh %44 : vector<1x128xf32>
    %cst_26 = arith.constant 1.000000e+00 : f32
    %46 = vector.broadcast %cst_26 : f32 to vector<1x128xf32>
    %47 = arith.subf %46, %40 : vector<1x128xf32>
    %48 = arith.mulf %47, %45 : vector<1x128xf32>
    %49 = arith.mulf %40, %2 : vector<1x128xf32>
    %50 = arith.addf %48, %49 : vector<1x128xf32>
    %51 = vector.shape_cast %19 : vector<1x1xi1> to vector<1x1xi1>
    %52 = vector.broadcast %51 : vector<1x1xi1> to vector<1x128xi1>
    %53 = arith.select %52, %50, %2 : vector<1x128xi1>, vector<1x128xf32>
    %54 = arith.addf %50, %4 : vector<1x128xf32>
    %c1_27 = arith.constant 1 : index
    %c0_28 = arith.constant 0 : index
    %c0_29 = arith.constant 0 : index
    %55 = vector.load %arg1[%c1_27, %c0_28, %c0_29] : memref<2x128x512xf32, #tpu.memory_space<vmem>>, vector<1x128x512xf32>
    %56 = vector.shape_cast %55 : vector<1x128x512xf32> to vector<128x512xf32>
    %cst_30 = arith.constant dense<0.000000e+00> : vector<1x512xf32>
    %57 = tpu.matmul %54, %56, %cst_30 {dimension_numbers = #tpu.dot_dimension_numbers<[1], [0], [0], [1], [0, 0, 1, 1], [], []>} : vector<1x128xf32>, vector<128x512xf32>, vector<1x512xf32> -> vector<1x512xf32>
    %58 = arith.addf %57, %14 : vector<1x512xf32>
    %59 = vector.extract_strided_slice %58 {offsets = [0, 0], sizes = [1, 128], strides = [1, 1]} : vector<1x512xf32> to vector<1x128xf32>
    %cst_31 = arith.constant 5.000000e-01 : f32
    %60 = vector.broadcast %cst_31 : f32 to vector<1x128xf32>
    %61 = arith.mulf %60, %59 : vector<1x128xf32>
    %62 = math.tanh %61 : vector<1x128xf32>
    %cst_32 = arith.constant 1.000000e+00 : f32
    %63 = vector.broadcast %cst_32 : f32 to vector<1x128xf32>
    %64 = arith.addf %62, %63 : vector<1x128xf32>
    %cst_33 = arith.constant 5.000000e-01 : f32
    %65 = vector.broadcast %cst_33 : f32 to vector<1x128xf32>
    %66 = arith.mulf %65, %64 : vector<1x128xf32>
    %67 = vector.extract_strided_slice %58 {offsets = [0, 128], sizes = [1, 128], strides = [1, 1]} : vector<1x512xf32> to vector<1x128xf32>
    %cst_34 = arith.constant 5.000000e-01 : f32
    %68 = vector.broadcast %cst_34 : f32 to vector<1x128xf32>
    %69 = arith.mulf %68, %67 : vector<1x128xf32>
    %70 = math.tanh %69 : vector<1x128xf32>
    %cst_35 = arith.constant 1.000000e+00 : f32
    %71 = vector.broadcast %cst_35 : f32 to vector<1x128xf32>
    %72 = arith.addf %70, %71 : vector<1x128xf32>
    %cst_36 = arith.constant 5.000000e-01 : f32
    %73 = vector.broadcast %cst_36 : f32 to vector<1x128xf32>
    %74 = arith.mulf %73, %72 : vector<1x128xf32>
    %75 = vector.extract_strided_slice %58 {offsets = [0, 256], sizes = [1, 128], strides = [1, 1]} : vector<1x512xf32> to vector<1x128xf32>
    %76 = vector.extract_strided_slice %58 {offsets = [0, 384], sizes = [1, 128], strides = [1, 1]} : vector<1x512xf32> to vector<1x128xf32>
    %77 = arith.mulf %66, %76 : vector<1x128xf32>
    %78 = arith.addf %75, %77 : vector<1x128xf32>
    %79 = math.tanh %78 : vector<1x128xf32>
    %cst_37 = arith.constant 1.000000e+00 : f32
    %80 = vector.broadcast %cst_37 : f32 to vector<1x128xf32>
    %81 = arith.subf %80, %74 : vector<1x128xf32>
    %82 = arith.mulf %81, %79 : vector<1x128xf32>
    %83 = arith.mulf %74, %4 : vector<1x128xf32>
    %84 = arith.addf %82, %83 : vector<1x128xf32>
    %85 = vector.shape_cast %19 : vector<1x1xi1> to vector<1x1xi1>
    %86 = vector.broadcast %85 : vector<1x1xi1> to vector<1x128xi1>
    %87 = arith.select %86, %84, %4 : vector<1x128xi1>, vector<1x128xf32>
    %c0_38 = arith.constant 0 : index
    %c0_39 = arith.constant 0 : index
    %88 = vector.load %arg3[%c0_38, %c0_39] : memref<128x128xf32, #tpu.memory_space<vmem>>, vector<128x128xf32>
    %cst_40 = arith.constant dense<0.000000e+00> : vector<1x128xf32>
    %89 = tpu.matmul %84, %88, %cst_40 {dimension_numbers = #tpu.dot_dimension_numbers<[1], [0], [0], [1], [0, 0, 1, 1], [], []>} : vector<1x128xf32>, vector<128x128xf32>, vector<1x128xf32> -> vector<1x128xf32>
    %90 = arith.addf %89, %16 : vector<1x128xf32>
    %cst_41 = arith.constant dense<0xFF800000> : vector<1xf32>
    %91 = vector.multi_reduction <maximumf>, %90, %cst_41 [1] : vector<1x128xf32> to vector<1xf32>
    %92 = vector.shape_cast %91 : vector<1xf32> to vector<1x1xf32>
    %93 = vector.broadcast %92 : vector<1x1xf32> to vector<1x128xf32>
    %94 = arith.cmpf oge, %90, %93 : vector<1x128xf32>
    %c128_i32 = arith.constant 128 : i32
    %95 = vector.broadcast %c128_i32 : i32 to vector<1x128xi32>
    %96 = arith.select %94, %0, %95 : vector<1x128xi1>, vector<1x128xi32>
    %cst_42 = arith.constant dense<2147483647> : vector<1xi32>
    %97 = vector.multi_reduction <minsi>, %96, %cst_42 [1] : vector<1x128xi32> to vector<1xi32>
    %98 = vector.shape_cast %97 : vector<1xi32> to vector<1x1xi32>
    %99 = vector.broadcast %98 : vector<1x1xi32> to vector<1x128xi32>
    %100 = arith.cmpi eq, %0, %99 : vector<1x128xi32>
    %101 = arith.extui %100 : vector<1x128xi1> to vector<1x128xi32>
    %102 = arith.sitofp %101 : vector<1x128xi32> to vector<1x128xf32>
    %103 = vector.shape_cast %19 : vector<1x1xi1> to vector<1x1xi1>
    %104 = vector.broadcast %103 : vector<1x1xi1> to vector<1x128xi1>
    %105 = arith.select %104, %102, %8 : vector<1x128xi1>, vector<1x128xf32>
    %c0_i32 = arith.constant 0 : i32
    %106 = vector.broadcast %c0_i32 : i32 to vector<1x128xi32>
    %107 = arith.cmpi eq, %0, %106 : vector<1x128xi32>
    %108 = vector.broadcast %19 : vector<1x1xi1> to vector<1x128xi1>
    %109 = arith.andi %107, %108 : vector<1x128xi1>
    %110 = vector.shape_cast %98 : vector<1x1xi32> to vector<1x1xi32>
    %111 = vector.broadcast %110 : vector<1x1xi32> to vector<1x128xi32>
    %112 = arith.select %109, %111, %10 : vector<1x128xi1>, vector<1x128xi32>
    %c2_i32 = arith.constant 2 : i32
    %113 = vector.broadcast %c2_i32 : i32 to vector<1x1xi32>
    %114 = arith.cmpi eq, %98, %113 : vector<1x1xi32>
    %c0_i32_43 = arith.constant 0 : i32
    %115 = vector.broadcast %c0_i32_43 : i32 to vector<1x1xi32>
    %116 = arith.cmpi eq, %98, %115 : vector<1x1xi32>
    %117 = arith.ori %114, %116 : vector<1x1xi1>
    %118 = arith.andi %19, %117 : vector<1x1xi1>
    %119 = arith.ori %9, %118 : vector<1x1xi1>
    %cst_44 = arith.constant dense<true> : vector<1x1xi1>
    %120 = arith.xori %119, %cst_44 : vector<1x1xi1>
    %121 = arith.addf %105, %53 : vector<1x128xf32>
    %c0_45 = arith.constant 0 : index
    %c0_46 = arith.constant 0 : index
    %c0_47 = arith.constant 0 : index
    %122 = vector.load %arg1[%c0_45, %c0_46, %c0_47] : memref<2x128x512xf32, #tpu.memory_space<vmem>>, vector<1x128x512xf32>
    %123 = vector.shape_cast %122 : vector<1x128x512xf32> to vector<128x512xf32>
    %cst_48 = arith.constant dense<0.000000e+00> : vector<1x512xf32>
    %124 = tpu.matmul %121, %123, %cst_48 {dimension_numbers = #tpu.dot_dimension_numbers<[1], [0], [0], [1], [0, 0, 1, 1], [], []>} : vector<1x128xf32>, vector<128x512xf32>, vector<1x512xf32> -> vector<1x512xf32>
    %125 = arith.addf %124, %12 : vector<1x512xf32>
    %126 = vector.extract_strided_slice %125 {offsets = [0, 0], sizes = [1, 128], strides = [1, 1]} : vector<1x512xf32> to vector<1x128xf32>
    %cst_49 = arith.constant 5.000000e-01 : f32
    %127 = vector.broadcast %cst_49 : f32 to vector<1x128xf32>
    %128 = arith.mulf %127, %126 : vector<1x128xf32>
    %129 = math.tanh %128 : vector<1x128xf32>
    %cst_50 = arith.constant 1.000000e+00 : f32
    %130 = vector.broadcast %cst_50 : f32 to vector<1x128xf32>
    %131 = arith.addf %129, %130 : vector<1x128xf32>
    %cst_51 = arith.constant 5.000000e-01 : f32
    %132 = vector.broadcast %cst_51 : f32 to vector<1x128xf32>
    %133 = arith.mulf %132, %131 : vector<1x128xf32>
    %134 = vector.extract_strided_slice %125 {offsets = [0, 128], sizes = [1, 128], strides = [1, 1]} : vector<1x512xf32> to vector<1x128xf32>
    %cst_52 = arith.constant 5.000000e-01 : f32
    %135 = vector.broadcast %cst_52 : f32 to vector<1x128xf32>
    %136 = arith.mulf %135, %134 : vector<1x128xf32>
    %137 = math.tanh %136 : vector<1x128xf32>
    %cst_53 = arith.constant 1.000000e+00 : f32
    %138 = vector.broadcast %cst_53 : f32 to vector<1x128xf32>
    %139 = arith.addf %137, %138 : vector<1x128xf32>
    %cst_54 = arith.constant 5.000000e-01 : f32
    %140 = vector.broadcast %cst_54 : f32 to vector<1x128xf32>
    %141 = arith.mulf %140, %139 : vector<1x128xf32>
    %142 = vector.extract_strided_slice %125 {offsets = [0, 256], sizes = [1, 128], strides = [1, 1]} : vector<1x512xf32> to vector<1x128xf32>
    %143 = vector.extract_strided_slice %125 {offsets = [0, 384], sizes = [1, 128], strides = [1, 1]} : vector<1x512xf32> to vector<1x128xf32>
    %144 = arith.mulf %133, %143 : vector<1x128xf32>
    %145 = arith.addf %142, %144 : vector<1x128xf32>
    %146 = math.tanh %145 : vector<1x128xf32>
    %cst_55 = arith.constant 1.000000e+00 : f32
    %147 = vector.broadcast %cst_55 : f32 to vector<1x128xf32>
    %148 = arith.subf %147, %141 : vector<1x128xf32>
    %149 = arith.mulf %148, %146 : vector<1x128xf32>
    %150 = arith.mulf %141, %53 : vector<1x128xf32>
    %151 = arith.addf %149, %150 : vector<1x128xf32>
    %152 = vector.shape_cast %120 : vector<1x1xi1> to vector<1x1xi1>
    %153 = vector.broadcast %152 : vector<1x1xi1> to vector<1x128xi1>
    %154 = arith.select %153, %151, %53 : vector<1x128xi1>, vector<1x128xf32>
    %155 = arith.addf %151, %87 : vector<1x128xf32>
    %c1_56 = arith.constant 1 : index
    %c0_57 = arith.constant 0 : index
    %c0_58 = arith.constant 0 : index
    %156 = vector.load %arg1[%c1_56, %c0_57, %c0_58] : memref<2x128x512xf32, #tpu.memory_space<vmem>>, vector<1x128x512xf32>
    %157 = vector.shape_cast %156 : vector<1x128x512xf32> to vector<128x512xf32>
    %cst_59 = arith.constant dense<0.000000e+00> : vector<1x512xf32>
    %158 = tpu.matmul %155, %157, %cst_59 {dimension_numbers = #tpu.dot_dimension_numbers<[1], [0], [0], [1], [0, 0, 1, 1], [], []>} : vector<1x128xf32>, vector<128x512xf32>, vector<1x512xf32> -> vector<1x512xf32>
    %159 = arith.addf %158, %14 : vector<1x512xf32>
    %160 = vector.extract_strided_slice %159 {offsets = [0, 0], sizes = [1, 128], strides = [1, 1]} : vector<1x512xf32> to vector<1x128xf32>
    %cst_60 = arith.constant 5.000000e-01 : f32
    %161 = vector.broadcast %cst_60 : f32 to vector<1x128xf32>
    %162 = arith.mulf %161, %160 : vector<1x128xf32>
    %163 = math.tanh %162 : vector<1x128xf32>
    %cst_61 = arith.constant 1.000000e+00 : f32
    %164 = vector.broadcast %cst_61 : f32 to vector<1x128xf32>
    %165 = arith.addf %163, %164 : vector<1x128xf32>
    %cst_62 = arith.constant 5.000000e-01 : f32
    %166 = vector.broadcast %cst_62 : f32 to vector<1x128xf32>
    %167 = arith.mulf %166, %165 : vector<1x128xf32>
    %168 = vector.extract_strided_slice %159 {offsets = [0, 128], sizes = [1, 128], strides = [1, 1]} : vector<1x512xf32> to vector<1x128xf32>
    %cst_63 = arith.constant 5.000000e-01 : f32
    %169 = vector.broadcast %cst_63 : f32 to vector<1x128xf32>
    %170 = arith.mulf %169, %168 : vector<1x128xf32>
    %171 = math.tanh %170 : vector<1x128xf32>
    %cst_64 = arith.constant 1.000000e+00 : f32
    %172 = vector.broadcast %cst_64 : f32 to vector<1x128xf32>
    %173 = arith.addf %171, %172 : vector<1x128xf32>
    %cst_65 = arith.constant 5.000000e-01 : f32
    %174 = vector.broadcast %cst_65 : f32 to vector<1x128xf32>
    %175 = arith.mulf %174, %173 : vector<1x128xf32>
    %176 = vector.extract_strided_slice %159 {offsets = [0, 256], sizes = [1, 128], strides = [1, 1]} : vector<1x512xf32> to vector<1x128xf32>
    %177 = vector.extract_strided_slice %159 {offsets = [0, 384], sizes = [1, 128], strides = [1, 1]} : vector<1x512xf32> to vector<1x128xf32>
    %178 = arith.mulf %167, %177 : vector<1x128xf32>
    %179 = arith.addf %176, %178 : vector<1x128xf32>
    %180 = math.tanh %179 : vector<1x128xf32>
    %cst_66 = arith.constant 1.000000e+00 : f32
    %181 = vector.broadcast %cst_66 : f32 to vector<1x128xf32>
    %182 = arith.subf %181, %175 : vector<1x128xf32>
    %183 = arith.mulf %182, %180 : vector<1x128xf32>
    %184 = arith.mulf %175, %87 : vector<1x128xf32>
    %185 = arith.addf %183, %184 : vector<1x128xf32>
    %186 = vector.shape_cast %120 : vector<1x1xi1> to vector<1x1xi1>
    %187 = vector.broadcast %186 : vector<1x1xi1> to vector<1x128xi1>
    %188 = arith.select %187, %185, %87 : vector<1x128xi1>, vector<1x128xf32>
    %c0_67 = arith.constant 0 : index
    %c0_68 = arith.constant 0 : index
    %189 = vector.load %arg3[%c0_67, %c0_68] : memref<128x128xf32, #tpu.memory_space<vmem>>, vector<128x128xf32>
    %cst_69 = arith.constant dense<0.000000e+00> : vector<1x128xf32>
    %190 = tpu.matmul %185, %189, %cst_69 {dimension_numbers = #tpu.dot_dimension_numbers<[1], [0], [0], [1], [0, 0, 1, 1], [], []>} : vector<1x128xf32>, vector<128x128xf32>, vector<1x128xf32> -> vector<1x128xf32>
    %191 = arith.addf %190, %18 : vector<1x128xf32>
    %cst_70 = arith.constant dense<0xFF800000> : vector<1xf32>
    %192 = vector.multi_reduction <maximumf>, %191, %cst_70 [1] : vector<1x128xf32> to vector<1xf32>
    %193 = vector.shape_cast %192 : vector<1xf32> to vector<1x1xf32>
    %194 = vector.broadcast %193 : vector<1x1xf32> to vector<1x128xf32>
    %195 = arith.cmpf oge, %191, %194 : vector<1x128xf32>
    %c128_i32_71 = arith.constant 128 : i32
    %196 = vector.broadcast %c128_i32_71 : i32 to vector<1x128xi32>
    %197 = arith.select %195, %0, %196 : vector<1x128xi1>, vector<1x128xi32>
    %cst_72 = arith.constant dense<2147483647> : vector<1xi32>
    %198 = vector.multi_reduction <minsi>, %197, %cst_72 [1] : vector<1x128xi32> to vector<1xi32>
    %199 = vector.shape_cast %198 : vector<1xi32> to vector<1x1xi32>
    %200 = vector.broadcast %199 : vector<1x1xi32> to vector<1x128xi32>
    %201 = arith.cmpi eq, %0, %200 : vector<1x128xi32>
    %202 = arith.extui %201 : vector<1x128xi1> to vector<1x128xi32>
    %203 = arith.sitofp %202 : vector<1x128xi32> to vector<1x128xf32>
    %204 = vector.shape_cast %120 : vector<1x1xi1> to vector<1x1xi1>
    %205 = vector.broadcast %204 : vector<1x1xi1> to vector<1x128xi1>
    %206 = arith.select %205, %203, %105 : vector<1x128xi1>, vector<1x128xf32>
    %c1_i32_73 = arith.constant 1 : i32
    %207 = vector.broadcast %c1_i32_73 : i32 to vector<1x128xi32>
    %208 = arith.cmpi eq, %0, %207 : vector<1x128xi32>
    %209 = vector.broadcast %120 : vector<1x1xi1> to vector<1x128xi1>
    %210 = arith.andi %208, %209 : vector<1x128xi1>
    %211 = vector.shape_cast %199 : vector<1x1xi32> to vector<1x1xi32>
    %212 = vector.broadcast %211 : vector<1x1xi32> to vector<1x128xi32>
    %213 = arith.select %210, %212, %112 : vector<1x128xi1>, vector<1x128xi32>
    %c2_i32_74 = arith.constant 2 : i32
    %214 = vector.broadcast %c2_i32_74 : i32 to vector<1x1xi32>
    %215 = arith.cmpi eq, %199, %214 : vector<1x1xi32>
    %c0_i32_75 = arith.constant 0 : i32
    %216 = vector.broadcast %c0_i32_75 : i32 to vector<1x1xi32>
    %217 = arith.cmpi eq, %199, %216 : vector<1x1xi32>
    %218 = arith.ori %215, %217 : vector<1x1xi1>
    %219 = arith.andi %120, %218 : vector<1x1xi1>
    %220 = arith.ori %119, %219 : vector<1x1xi1>
    %cst_76 = arith.constant dense<true> : vector<1x1xi1>
    %221 = arith.xori %220, %cst_76 : vector<1x1xi1>
    %222 = arith.addf %206, %154 : vector<1x128xf32>
    %c0_77 = arith.constant 0 : index
    %c0_78 = arith.constant 0 : index
    %c0_79 = arith.constant 0 : index
    %223 = vector.load %arg1[%c0_77, %c0_78, %c0_79] : memref<2x128x512xf32, #tpu.memory_space<vmem>>, vector<1x128x512xf32>
    %224 = vector.shape_cast %223 : vector<1x128x512xf32> to vector<128x512xf32>
    %cst_80 = arith.constant dense<0.000000e+00> : vector<1x512xf32>
    %225 = tpu.matmul %222, %224, %cst_80 {dimension_numbers = #tpu.dot_dimension_numbers<[1], [0], [0], [1], [0, 0, 1, 1], [], []>} : vector<1x128xf32>, vector<128x512xf32>, vector<1x512xf32> -> vector<1x512xf32>
    %226 = arith.addf %225, %12 : vector<1x512xf32>
    %227 = vector.extract_strided_slice %226 {offsets = [0, 0], sizes = [1, 128], strides = [1, 1]} : vector<1x512xf32> to vector<1x128xf32>
    %cst_81 = arith.constant 5.000000e-01 : f32
    %228 = vector.broadcast %cst_81 : f32 to vector<1x128xf32>
    %229 = arith.mulf %228, %227 : vector<1x128xf32>
    %230 = math.tanh %229 : vector<1x128xf32>
    %cst_82 = arith.constant 1.000000e+00 : f32
    %231 = vector.broadcast %cst_82 : f32 to vector<1x128xf32>
    %232 = arith.addf %230, %231 : vector<1x128xf32>
    %cst_83 = arith.constant 5.000000e-01 : f32
    %233 = vector.broadcast %cst_83 : f32 to vector<1x128xf32>
    %234 = arith.mulf %233, %232 : vector<1x128xf32>
    %235 = vector.extract_strided_slice %226 {offsets = [0, 128], sizes = [1, 128], strides = [1, 1]} : vector<1x512xf32> to vector<1x128xf32>
    %cst_84 = arith.constant 5.000000e-01 : f32
    %236 = vector.broadcast %cst_84 : f32 to vector<1x128xf32>
    %237 = arith.mulf %236, %235 : vector<1x128xf32>
    %238 = math.tanh %237 : vector<1x128xf32>
    %cst_85 = arith.constant 1.000000e+00 : f32
    %239 = vector.broadcast %cst_85 : f32 to vector<1x128xf32>
    %240 = arith.addf %238, %239 : vector<1x128xf32>
    %cst_86 = arith.constant 5.000000e-01 : f32
    %241 = vector.broadcast %cst_86 : f32 to vector<1x128xf32>
    %242 = arith.mulf %241, %240 : vector<1x128xf32>
    %243 = vector.extract_strided_slice %226 {offsets = [0, 256], sizes = [1, 128], strides = [1, 1]} : vector<1x512xf32> to vector<1x128xf32>
    %244 = vector.extract_strided_slice %226 {offsets = [0, 384], sizes = [1, 128], strides = [1, 1]} : vector<1x512xf32> to vector<1x128xf32>
    %245 = arith.mulf %234, %244 : vector<1x128xf32>
    %246 = arith.addf %243, %245 : vector<1x128xf32>
    %247 = math.tanh %246 : vector<1x128xf32>
    %cst_87 = arith.constant 1.000000e+00 : f32
    %248 = vector.broadcast %cst_87 : f32 to vector<1x128xf32>
    %249 = arith.subf %248, %242 : vector<1x128xf32>
    %250 = arith.mulf %249, %247 : vector<1x128xf32>
    %251 = arith.mulf %242, %154 : vector<1x128xf32>
    %252 = arith.addf %250, %251 : vector<1x128xf32>
    %253 = vector.shape_cast %221 : vector<1x1xi1> to vector<1x1xi1>
    %254 = vector.broadcast %253 : vector<1x1xi1> to vector<1x128xi1>
    %255 = arith.select %254, %252, %154 : vector<1x128xi1>, vector<1x128xf32>
    %256 = arith.addf %252, %188 : vector<1x128xf32>
    %c1_88 = arith.constant 1 : index
    %c0_89 = arith.constant 0 : index
    %c0_90 = arith.constant 0 : index
    %257 = vector.load %arg1[%c1_88, %c0_89, %c0_90] : memref<2x128x512xf32, #tpu.memory_space<vmem>>, vector<1x128x512xf32>
    %258 = vector.shape_cast %257 : vector<1x128x512xf32> to vector<128x512xf32>
    %cst_91 = arith.constant dense<0.000000e+00> : vector<1x512xf32>
    %259 = tpu.matmul %256, %258, %cst_91 {dimension_numbers = #tpu.dot_dimension_numbers<[1], [0], [0], [1], [0, 0, 1, 1], [], []>} : vector<1x128xf32>, vector<128x512xf32>, vector<1x512xf32> -> vector<1x512xf32>
    %260 = arith.addf %259, %14 : vector<1x512xf32>
    %261 = vector.extract_strided_slice %260 {offsets = [0, 0], sizes = [1, 128], strides = [1, 1]} : vector<1x512xf32> to vector<1x128xf32>
    %cst_92 = arith.constant 5.000000e-01 : f32
    %262 = vector.broadcast %cst_92 : f32 to vector<1x128xf32>
    %263 = arith.mulf %262, %261 : vector<1x128xf32>
    %264 = math.tanh %263 : vector<1x128xf32>
    %cst_93 = arith.constant 1.000000e+00 : f32
    %265 = vector.broadcast %cst_93 : f32 to vector<1x128xf32>
    %266 = arith.addf %264, %265 : vector<1x128xf32>
    %cst_94 = arith.constant 5.000000e-01 : f32
    %267 = vector.broadcast %cst_94 : f32 to vector<1x128xf32>
    %268 = arith.mulf %267, %266 : vector<1x128xf32>
    %269 = vector.extract_strided_slice %260 {offsets = [0, 128], sizes = [1, 128], strides = [1, 1]} : vector<1x512xf32> to vector<1x128xf32>
    %cst_95 = arith.constant 5.000000e-01 : f32
    %270 = vector.broadcast %cst_95 : f32 to vector<1x128xf32>
    %271 = arith.mulf %270, %269 : vector<1x128xf32>
    %272 = math.tanh %271 : vector<1x128xf32>
    %cst_96 = arith.constant 1.000000e+00 : f32
    %273 = vector.broadcast %cst_96 : f32 to vector<1x128xf32>
    %274 = arith.addf %272, %273 : vector<1x128xf32>
    %cst_97 = arith.constant 5.000000e-01 : f32
    %275 = vector.broadcast %cst_97 : f32 to vector<1x128xf32>
    %276 = arith.mulf %275, %274 : vector<1x128xf32>
    %277 = vector.extract_strided_slice %260 {offsets = [0, 256], sizes = [1, 128], strides = [1, 1]} : vector<1x512xf32> to vector<1x128xf32>
    %278 = vector.extract_strided_slice %260 {offsets = [0, 384], sizes = [1, 128], strides = [1, 1]} : vector<1x512xf32> to vector<1x128xf32>
    %279 = arith.mulf %268, %278 : vector<1x128xf32>
    %280 = arith.addf %277, %279 : vector<1x128xf32>
    %281 = math.tanh %280 : vector<1x128xf32>
    %cst_98 = arith.constant 1.000000e+00 : f32
    %282 = vector.broadcast %cst_98 : f32 to vector<1x128xf32>
    %283 = arith.subf %282, %276 : vector<1x128xf32>
    %284 = arith.mulf %283, %281 : vector<1x128xf32>
    %285 = arith.mulf %276, %188 : vector<1x128xf32>
    %286 = arith.addf %284, %285 : vector<1x128xf32>
    %287 = vector.shape_cast %221 : vector<1x1xi1> to vector<1x1xi1>
    %288 = vector.broadcast %287 : vector<1x1xi1> to vector<1x128xi1>
    %289 = arith.select %288, %286, %188 : vector<1x128xi1>, vector<1x128xf32>
    %c0_99 = arith.constant 0 : index
    %c0_100 = arith.constant 0 : index
    %290 = vector.load %arg3[%c0_99, %c0_100] : memref<128x128xf32, #tpu.memory_space<vmem>>, vector<128x128xf32>
    %cst_101 = arith.constant dense<0.000000e+00> : vector<1x128xf32>
    %291 = tpu.matmul %286, %290, %cst_101 {dimension_numbers = #tpu.dot_dimension_numbers<[1], [0], [0], [1], [0, 0, 1, 1], [], []>} : vector<1x128xf32>, vector<128x128xf32>, vector<1x128xf32> -> vector<1x128xf32>
    %292 = arith.addf %291, %18 : vector<1x128xf32>
    %cst_102 = arith.constant dense<0xFF800000> : vector<1xf32>
    %293 = vector.multi_reduction <maximumf>, %292, %cst_102 [1] : vector<1x128xf32> to vector<1xf32>
    %294 = vector.shape_cast %293 : vector<1xf32> to vector<1x1xf32>
    %295 = vector.broadcast %294 : vector<1x1xf32> to vector<1x128xf32>
    %296 = arith.cmpf oge, %292, %295 : vector<1x128xf32>
    %c128_i32_103 = arith.constant 128 : i32
    %297 = vector.broadcast %c128_i32_103 : i32 to vector<1x128xi32>
    %298 = arith.select %296, %0, %297 : vector<1x128xi1>, vector<1x128xi32>
    %cst_104 = arith.constant dense<2147483647> : vector<1xi32>
    %299 = vector.multi_reduction <minsi>, %298, %cst_104 [1] : vector<1x128xi32> to vector<1xi32>
    %300 = vector.shape_cast %299 : vector<1xi32> to vector<1x1xi32>
    %301 = vector.broadcast %300 : vector<1x1xi32> to vector<1x128xi32>
    %302 = arith.cmpi eq, %0, %301 : vector<1x128xi32>
    %303 = arith.extui %302 : vector<1x128xi1> to vector<1x128xi32>
    %304 = arith.sitofp %303 : vector<1x128xi32> to vector<1x128xf32>
    %305 = vector.shape_cast %221 : vector<1x1xi1> to vector<1x1xi1>
    %306 = vector.broadcast %305 : vector<1x1xi1> to vector<1x128xi1>
    %307 = arith.select %306, %304, %206 : vector<1x128xi1>, vector<1x128xf32>
    %c2_i32_105 = arith.constant 2 : i32
    %308 = vector.broadcast %c2_i32_105 : i32 to vector<1x128xi32>
    %309 = arith.cmpi eq, %0, %308 : vector<1x128xi32>
    %310 = vector.broadcast %221 : vector<1x1xi1> to vector<1x128xi1>
    %311 = arith.andi %309, %310 : vector<1x128xi1>
    %312 = vector.shape_cast %300 : vector<1x1xi32> to vector<1x1xi32>
    %313 = vector.broadcast %312 : vector<1x1xi32> to vector<1x128xi32>
    %314 = arith.select %311, %313, %213 : vector<1x128xi1>, vector<1x128xi32>
    %c2_i32_106 = arith.constant 2 : i32
    %315 = vector.broadcast %c2_i32_106 : i32 to vector<1x1xi32>
    %316 = arith.cmpi eq, %300, %315 : vector<1x1xi32>
    %c0_i32_107 = arith.constant 0 : i32
    %317 = vector.broadcast %c0_i32_107 : i32 to vector<1x1xi32>
    %318 = arith.cmpi eq, %300, %317 : vector<1x1xi32>
    %319 = arith.ori %316, %318 : vector<1x1xi1>
    %320 = arith.andi %221, %319 : vector<1x1xi1>
    %321 = arith.ori %220, %320 : vector<1x1xi1>
    %cst_108 = arith.constant dense<true> : vector<1x1xi1>
    %322 = arith.xori %321, %cst_108 : vector<1x1xi1>
    %323 = arith.addf %307, %255 : vector<1x128xf32>
    %c0_109 = arith.constant 0 : index
    %c0_110 = arith.constant 0 : index
    %c0_111 = arith.constant 0 : index
    %324 = vector.load %arg1[%c0_109, %c0_110, %c0_111] : memref<2x128x512xf32, #tpu.memory_space<vmem>>, vector<1x128x512xf32>
    %325 = vector.shape_cast %324 : vector<1x128x512xf32> to vector<128x512xf32>
    %cst_112 = arith.constant dense<0.000000e+00> : vector<1x512xf32>
    %326 = tpu.matmul %323, %325, %cst_112 {dimension_numbers = #tpu.dot_dimension_numbers<[1], [0], [0], [1], [0, 0, 1, 1], [], []>} : vector<1x128xf32>, vector<128x512xf32>, vector<1x512xf32> -> vector<1x512xf32>
    %327 = arith.addf %326, %12 : vector<1x512xf32>
    %328 = vector.extract_strided_slice %327 {offsets = [0, 0], sizes = [1, 128], strides = [1, 1]} : vector<1x512xf32> to vector<1x128xf32>
    %cst_113 = arith.constant 5.000000e-01 : f32
    %329 = vector.broadcast %cst_113 : f32 to vector<1x128xf32>
    %330 = arith.mulf %329, %328 : vector<1x128xf32>
    %331 = math.tanh %330 : vector<1x128xf32>
    %cst_114 = arith.constant 1.000000e+00 : f32
    %332 = vector.broadcast %cst_114 : f32 to vector<1x128xf32>
    %333 = arith.addf %331, %332 : vector<1x128xf32>
    %cst_115 = arith.constant 5.000000e-01 : f32
    %334 = vector.broadcast %cst_115 : f32 to vector<1x128xf32>
    %335 = arith.mulf %334, %333 : vector<1x128xf32>
    %336 = vector.extract_strided_slice %327 {offsets = [0, 128], sizes = [1, 128], strides = [1, 1]} : vector<1x512xf32> to vector<1x128xf32>
    %cst_116 = arith.constant 5.000000e-01 : f32
    %337 = vector.broadcast %cst_116 : f32 to vector<1x128xf32>
    %338 = arith.mulf %337, %336 : vector<1x128xf32>
    %339 = math.tanh %338 : vector<1x128xf32>
    %cst_117 = arith.constant 1.000000e+00 : f32
    %340 = vector.broadcast %cst_117 : f32 to vector<1x128xf32>
    %341 = arith.addf %339, %340 : vector<1x128xf32>
    %cst_118 = arith.constant 5.000000e-01 : f32
    %342 = vector.broadcast %cst_118 : f32 to vector<1x128xf32>
    %343 = arith.mulf %342, %341 : vector<1x128xf32>
    %344 = vector.extract_strided_slice %327 {offsets = [0, 256], sizes = [1, 128], strides = [1, 1]} : vector<1x512xf32> to vector<1x128xf32>
    %345 = vector.extract_strided_slice %327 {offsets = [0, 384], sizes = [1, 128], strides = [1, 1]} : vector<1x512xf32> to vector<1x128xf32>
    %346 = arith.mulf %335, %345 : vector<1x128xf32>
    %347 = arith.addf %344, %346 : vector<1x128xf32>
    %348 = math.tanh %347 : vector<1x128xf32>
    %cst_119 = arith.constant 1.000000e+00 : f32
    %349 = vector.broadcast %cst_119 : f32 to vector<1x128xf32>
    %350 = arith.subf %349, %343 : vector<1x128xf32>
    %351 = arith.mulf %350, %348 : vector<1x128xf32>
    %352 = arith.mulf %343, %255 : vector<1x128xf32>
    %353 = arith.addf %351, %352 : vector<1x128xf32>
    %354 = vector.shape_cast %322 : vector<1x1xi1> to vector<1x1xi1>
    %355 = vector.broadcast %354 : vector<1x1xi1> to vector<1x128xi1>
    %356 = arith.select %355, %353, %255 : vector<1x128xi1>, vector<1x128xf32>
    %357 = arith.addf %353, %289 : vector<1x128xf32>
    %c1_120 = arith.constant 1 : index
    %c0_121 = arith.constant 0 : index
    %c0_122 = arith.constant 0 : index
    %358 = vector.load %arg1[%c1_120, %c0_121, %c0_122] : memref<2x128x512xf32, #tpu.memory_space<vmem>>, vector<1x128x512xf32>
    %359 = vector.shape_cast %358 : vector<1x128x512xf32> to vector<128x512xf32>
    %cst_123 = arith.constant dense<0.000000e+00> : vector<1x512xf32>
    %360 = tpu.matmul %357, %359, %cst_123 {dimension_numbers = #tpu.dot_dimension_numbers<[1], [0], [0], [1], [0, 0, 1, 1], [], []>} : vector<1x128xf32>, vector<128x512xf32>, vector<1x512xf32> -> vector<1x512xf32>
    %361 = arith.addf %360, %14 : vector<1x512xf32>
    %362 = vector.extract_strided_slice %361 {offsets = [0, 0], sizes = [1, 128], strides = [1, 1]} : vector<1x512xf32> to vector<1x128xf32>
    %cst_124 = arith.constant 5.000000e-01 : f32
    %363 = vector.broadcast %cst_124 : f32 to vector<1x128xf32>
    %364 = arith.mulf %363, %362 : vector<1x128xf32>
    %365 = math.tanh %364 : vector<1x128xf32>
    %cst_125 = arith.constant 1.000000e+00 : f32
    %366 = vector.broadcast %cst_125 : f32 to vector<1x128xf32>
    %367 = arith.addf %365, %366 : vector<1x128xf32>
    %cst_126 = arith.constant 5.000000e-01 : f32
    %368 = vector.broadcast %cst_126 : f32 to vector<1x128xf32>
    %369 = arith.mulf %368, %367 : vector<1x128xf32>
    %370 = vector.extract_strided_slice %361 {offsets = [0, 128], sizes = [1, 128], strides = [1, 1]} : vector<1x512xf32> to vector<1x128xf32>
    %cst_127 = arith.constant 5.000000e-01 : f32
    %371 = vector.broadcast %cst_127 : f32 to vector<1x128xf32>
    %372 = arith.mulf %371, %370 : vector<1x128xf32>
    %373 = math.tanh %372 : vector<1x128xf32>
    %cst_128 = arith.constant 1.000000e+00 : f32
    %374 = vector.broadcast %cst_128 : f32 to vector<1x128xf32>
    %375 = arith.addf %373, %374 : vector<1x128xf32>
    %cst_129 = arith.constant 5.000000e-01 : f32
    %376 = vector.broadcast %cst_129 : f32 to vector<1x128xf32>
    %377 = arith.mulf %376, %375 : vector<1x128xf32>
    %378 = vector.extract_strided_slice %361 {offsets = [0, 256], sizes = [1, 128], strides = [1, 1]} : vector<1x512xf32> to vector<1x128xf32>
    %379 = vector.extract_strided_slice %361 {offsets = [0, 384], sizes = [1, 128], strides = [1, 1]} : vector<1x512xf32> to vector<1x128xf32>
    %380 = arith.mulf %369, %379 : vector<1x128xf32>
    %381 = arith.addf %378, %380 : vector<1x128xf32>
    %382 = math.tanh %381 : vector<1x128xf32>
    %cst_130 = arith.constant 1.000000e+00 : f32
    %383 = vector.broadcast %cst_130 : f32 to vector<1x128xf32>
    %384 = arith.subf %383, %377 : vector<1x128xf32>
    %385 = arith.mulf %384, %382 : vector<1x128xf32>
    %386 = arith.mulf %377, %289 : vector<1x128xf32>
    %387 = arith.addf %385, %386 : vector<1x128xf32>
    %388 = vector.shape_cast %322 : vector<1x1xi1> to vector<1x1xi1>
    %389 = vector.broadcast %388 : vector<1x1xi1> to vector<1x128xi1>
    %390 = arith.select %389, %387, %289 : vector<1x128xi1>, vector<1x128xf32>
    %c0_131 = arith.constant 0 : index
    %c0_132 = arith.constant 0 : index
    %391 = vector.load %arg3[%c0_131, %c0_132] : memref<128x128xf32, #tpu.memory_space<vmem>>, vector<128x128xf32>
    %cst_133 = arith.constant dense<0.000000e+00> : vector<1x128xf32>
    %392 = tpu.matmul %387, %391, %cst_133 {dimension_numbers = #tpu.dot_dimension_numbers<[1], [0], [0], [1], [0, 0, 1, 1], [], []>} : vector<1x128xf32>, vector<128x128xf32>, vector<1x128xf32> -> vector<1x128xf32>
    %393 = arith.addf %392, %18 : vector<1x128xf32>
    %cst_134 = arith.constant dense<0xFF800000> : vector<1xf32>
    %394 = vector.multi_reduction <maximumf>, %393, %cst_134 [1] : vector<1x128xf32> to vector<1xf32>
    %395 = vector.shape_cast %394 : vector<1xf32> to vector<1x1xf32>
    %396 = vector.broadcast %395 : vector<1x1xf32> to vector<1x128xf32>
    %397 = arith.cmpf oge, %393, %396 : vector<1x128xf32>
    %c128_i32_135 = arith.constant 128 : i32
    %398 = vector.broadcast %c128_i32_135 : i32 to vector<1x128xi32>
    %399 = arith.select %397, %0, %398 : vector<1x128xi1>, vector<1x128xi32>
    %cst_136 = arith.constant dense<2147483647> : vector<1xi32>
    %400 = vector.multi_reduction <minsi>, %399, %cst_136 [1] : vector<1x128xi32> to vector<1xi32>
    %401 = vector.shape_cast %400 : vector<1xi32> to vector<1x1xi32>
    %402 = vector.broadcast %401 : vector<1x1xi32> to vector<1x128xi32>
    %403 = arith.cmpi eq, %0, %402 : vector<1x128xi32>
    %404 = arith.extui %403 : vector<1x128xi1> to vector<1x128xi32>
    %405 = arith.sitofp %404 : vector<1x128xi32> to vector<1x128xf32>
    %406 = vector.shape_cast %322 : vector<1x1xi1> to vector<1x1xi1>
    %407 = vector.broadcast %406 : vector<1x1xi1> to vector<1x128xi1>
    %408 = arith.select %407, %405, %307 : vector<1x128xi1>, vector<1x128xf32>
    %c3_i32 = arith.constant 3 : i32
    %409 = vector.broadcast %c3_i32 : i32 to vector<1x128xi32>
    %410 = arith.cmpi eq, %0, %409 : vector<1x128xi32>
    %411 = vector.broadcast %322 : vector<1x1xi1> to vector<1x128xi1>
    %412 = arith.andi %410, %411 : vector<1x128xi1>
    %413 = vector.shape_cast %401 : vector<1x1xi32> to vector<1x1xi32>
    %414 = vector.broadcast %413 : vector<1x1xi32> to vector<1x128xi32>
    %415 = arith.select %412, %414, %314 : vector<1x128xi1>, vector<1x128xi32>
    %c2_i32_137 = arith.constant 2 : i32
    %416 = vector.broadcast %c2_i32_137 : i32 to vector<1x1xi32>
    %417 = arith.cmpi eq, %401, %416 : vector<1x1xi32>
    %c0_i32_138 = arith.constant 0 : i32
    %418 = vector.broadcast %c0_i32_138 : i32 to vector<1x1xi32>
    %419 = arith.cmpi eq, %401, %418 : vector<1x1xi32>
    %420 = arith.ori %417, %419 : vector<1x1xi1>
    %421 = arith.andi %322, %420 : vector<1x1xi1>
    %422 = arith.ori %321, %421 : vector<1x1xi1>
    %cst_139 = arith.constant dense<true> : vector<1x1xi1>
    %423 = arith.xori %422, %cst_139 : vector<1x1xi1>
    %424 = arith.addf %408, %356 : vector<1x128xf32>
    %c0_140 = arith.constant 0 : index
    %c0_141 = arith.constant 0 : index
    %c0_142 = arith.constant 0 : index
    %425 = vector.load %arg1[%c0_140, %c0_141, %c0_142] : memref<2x128x512xf32, #tpu.memory_space<vmem>>, vector<1x128x512xf32>
    %426 = vector.shape_cast %425 : vector<1x128x512xf32> to vector<128x512xf32>
    %cst_143 = arith.constant dense<0.000000e+00> : vector<1x512xf32>
    %427 = tpu.matmul %424, %426, %cst_143 {dimension_numbers = #tpu.dot_dimension_numbers<[1], [0], [0], [1], [0, 0, 1, 1], [], []>} : vector<1x128xf32>, vector<128x512xf32>, vector<1x512xf32> -> vector<1x512xf32>
    %428 = arith.addf %427, %12 : vector<1x512xf32>
    %429 = vector.extract_strided_slice %428 {offsets = [0, 0], sizes = [1, 128], strides = [1, 1]} : vector<1x512xf32> to vector<1x128xf32>
    %cst_144 = arith.constant 5.000000e-01 : f32
    %430 = vector.broadcast %cst_144 : f32 to vector<1x128xf32>
    %431 = arith.mulf %430, %429 : vector<1x128xf32>
    %432 = math.tanh %431 : vector<1x128xf32>
    %cst_145 = arith.constant 1.000000e+00 : f32
    %433 = vector.broadcast %cst_145 : f32 to vector<1x128xf32>
    %434 = arith.addf %432, %433 : vector<1x128xf32>
    %cst_146 = arith.constant 5.000000e-01 : f32
    %435 = vector.broadcast %cst_146 : f32 to vector<1x128xf32>
    %436 = arith.mulf %435, %434 : vector<1x128xf32>
    %437 = vector.extract_strided_slice %428 {offsets = [0, 128], sizes = [1, 128], strides = [1, 1]} : vector<1x512xf32> to vector<1x128xf32>
    %cst_147 = arith.constant 5.000000e-01 : f32
    %438 = vector.broadcast %cst_147 : f32 to vector<1x128xf32>
    %439 = arith.mulf %438, %437 : vector<1x128xf32>
    %440 = math.tanh %439 : vector<1x128xf32>
    %cst_148 = arith.constant 1.000000e+00 : f32
    %441 = vector.broadcast %cst_148 : f32 to vector<1x128xf32>
    %442 = arith.addf %440, %441 : vector<1x128xf32>
    %cst_149 = arith.constant 5.000000e-01 : f32
    %443 = vector.broadcast %cst_149 : f32 to vector<1x128xf32>
    %444 = arith.mulf %443, %442 : vector<1x128xf32>
    %445 = vector.extract_strided_slice %428 {offsets = [0, 256], sizes = [1, 128], strides = [1, 1]} : vector<1x512xf32> to vector<1x128xf32>
    %446 = vector.extract_strided_slice %428 {offsets = [0, 384], sizes = [1, 128], strides = [1, 1]} : vector<1x512xf32> to vector<1x128xf32>
    %447 = arith.mulf %436, %446 : vector<1x128xf32>
    %448 = arith.addf %445, %447 : vector<1x128xf32>
    %449 = math.tanh %448 : vector<1x128xf32>
    %cst_150 = arith.constant 1.000000e+00 : f32
    %450 = vector.broadcast %cst_150 : f32 to vector<1x128xf32>
    %451 = arith.subf %450, %444 : vector<1x128xf32>
    %452 = arith.mulf %451, %449 : vector<1x128xf32>
    %453 = arith.mulf %444, %356 : vector<1x128xf32>
    %454 = arith.addf %452, %453 : vector<1x128xf32>
    %455 = vector.shape_cast %423 : vector<1x1xi1> to vector<1x1xi1>
    %456 = vector.broadcast %455 : vector<1x1xi1> to vector<1x128xi1>
    %457 = arith.select %456, %454, %356 : vector<1x128xi1>, vector<1x128xf32>
    %458 = arith.addf %454, %390 : vector<1x128xf32>
    %c1_151 = arith.constant 1 : index
    %c0_152 = arith.constant 0 : index
    %c0_153 = arith.constant 0 : index
    %459 = vector.load %arg1[%c1_151, %c0_152, %c0_153] : memref<2x128x512xf32, #tpu.memory_space<vmem>>, vector<1x128x512xf32>
    %460 = vector.shape_cast %459 : vector<1x128x512xf32> to vector<128x512xf32>
    %cst_154 = arith.constant dense<0.000000e+00> : vector<1x512xf32>
    %461 = tpu.matmul %458, %460, %cst_154 {dimension_numbers = #tpu.dot_dimension_numbers<[1], [0], [0], [1], [0, 0, 1, 1], [], []>} : vector<1x128xf32>, vector<128x512xf32>, vector<1x512xf32> -> vector<1x512xf32>
    %462 = arith.addf %461, %14 : vector<1x512xf32>
    %463 = vector.extract_strided_slice %462 {offsets = [0, 0], sizes = [1, 128], strides = [1, 1]} : vector<1x512xf32> to vector<1x128xf32>
    %cst_155 = arith.constant 5.000000e-01 : f32
    %464 = vector.broadcast %cst_155 : f32 to vector<1x128xf32>
    %465 = arith.mulf %464, %463 : vector<1x128xf32>
    %466 = math.tanh %465 : vector<1x128xf32>
    %cst_156 = arith.constant 1.000000e+00 : f32
    %467 = vector.broadcast %cst_156 : f32 to vector<1x128xf32>
    %468 = arith.addf %466, %467 : vector<1x128xf32>
    %cst_157 = arith.constant 5.000000e-01 : f32
    %469 = vector.broadcast %cst_157 : f32 to vector<1x128xf32>
    %470 = arith.mulf %469, %468 : vector<1x128xf32>
    %471 = vector.extract_strided_slice %462 {offsets = [0, 128], sizes = [1, 128], strides = [1, 1]} : vector<1x512xf32> to vector<1x128xf32>
    %cst_158 = arith.constant 5.000000e-01 : f32
    %472 = vector.broadcast %cst_158 : f32 to vector<1x128xf32>
    %473 = arith.mulf %472, %471 : vector<1x128xf32>
    %474 = math.tanh %473 : vector<1x128xf32>
    %cst_159 = arith.constant 1.000000e+00 : f32
    %475 = vector.broadcast %cst_159 : f32 to vector<1x128xf32>
    %476 = arith.addf %474, %475 : vector<1x128xf32>
    %cst_160 = arith.constant 5.000000e-01 : f32
    %477 = vector.broadcast %cst_160 : f32 to vector<1x128xf32>
    %478 = arith.mulf %477, %476 : vector<1x128xf32>
    %479 = vector.extract_strided_slice %462 {offsets = [0, 256], sizes = [1, 128], strides = [1, 1]} : vector<1x512xf32> to vector<1x128xf32>
    %480 = vector.extract_strided_slice %462 {offsets = [0, 384], sizes = [1, 128], strides = [1, 1]} : vector<1x512xf32> to vector<1x128xf32>
    %481 = arith.mulf %470, %480 : vector<1x128xf32>
    %482 = arith.addf %479, %481 : vector<1x128xf32>
    %483 = math.tanh %482 : vector<1x128xf32>
    %cst_161 = arith.constant 1.000000e+00 : f32
    %484 = vector.broadcast %cst_161 : f32 to vector<1x128xf32>
    %485 = arith.subf %484, %478 : vector<1x128xf32>
    %486 = arith.mulf %485, %483 : vector<1x128xf32>
    %487 = arith.mulf %478, %390 : vector<1x128xf32>
    %488 = arith.addf %486, %487 : vector<1x128xf32>
    %489 = vector.shape_cast %423 : vector<1x1xi1> to vector<1x1xi1>
    %490 = vector.broadcast %489 : vector<1x1xi1> to vector<1x128xi1>
    %491 = arith.select %490, %488, %390 : vector<1x128xi1>, vector<1x128xf32>
    %c0_162 = arith.constant 0 : index
    %c0_163 = arith.constant 0 : index
    %492 = vector.load %arg3[%c0_162, %c0_163] : memref<128x128xf32, #tpu.memory_space<vmem>>, vector<128x128xf32>
    %cst_164 = arith.constant dense<0.000000e+00> : vector<1x128xf32>
    %493 = tpu.matmul %488, %492, %cst_164 {dimension_numbers = #tpu.dot_dimension_numbers<[1], [0], [0], [1], [0, 0, 1, 1], [], []>} : vector<1x128xf32>, vector<128x128xf32>, vector<1x128xf32> -> vector<1x128xf32>
    %494 = arith.addf %493, %18 : vector<1x128xf32>
    %cst_165 = arith.constant dense<0xFF800000> : vector<1xf32>
    %495 = vector.multi_reduction <maximumf>, %494, %cst_165 [1] : vector<1x128xf32> to vector<1xf32>
    %496 = vector.shape_cast %495 : vector<1xf32> to vector<1x1xf32>
    %497 = vector.broadcast %496 : vector<1x1xf32> to vector<1x128xf32>
    %498 = arith.cmpf oge, %494, %497 : vector<1x128xf32>
    %c128_i32_166 = arith.constant 128 : i32
    %499 = vector.broadcast %c128_i32_166 : i32 to vector<1x128xi32>
    %500 = arith.select %498, %0, %499 : vector<1x128xi1>, vector<1x128xi32>
    %cst_167 = arith.constant dense<2147483647> : vector<1xi32>
    %501 = vector.multi_reduction <minsi>, %500, %cst_167 [1] : vector<1x128xi32> to vector<1xi32>
    %502 = vector.shape_cast %501 : vector<1xi32> to vector<1x1xi32>
    %503 = vector.broadcast %502 : vector<1x1xi32> to vector<1x128xi32>
    %504 = arith.cmpi eq, %0, %503 : vector<1x128xi32>
    %505 = arith.extui %504 : vector<1x128xi1> to vector<1x128xi32>
    %506 = arith.sitofp %505 : vector<1x128xi32> to vector<1x128xf32>
    %507 = vector.shape_cast %423 : vector<1x1xi1> to vector<1x1xi1>
    %508 = vector.broadcast %507 : vector<1x1xi1> to vector<1x128xi1>
    %509 = arith.select %508, %506, %408 : vector<1x128xi1>, vector<1x128xf32>
    %c4_i32 = arith.constant 4 : i32
    %510 = vector.broadcast %c4_i32 : i32 to vector<1x128xi32>
    %511 = arith.cmpi eq, %0, %510 : vector<1x128xi32>
    %512 = vector.broadcast %423 : vector<1x1xi1> to vector<1x128xi1>
    %513 = arith.andi %511, %512 : vector<1x128xi1>
    %514 = vector.shape_cast %502 : vector<1x1xi32> to vector<1x1xi32>
    %515 = vector.broadcast %514 : vector<1x1xi32> to vector<1x128xi32>
    %516 = arith.select %513, %515, %415 : vector<1x128xi1>, vector<1x128xi32>
    %c2_i32_168 = arith.constant 2 : i32
    %517 = vector.broadcast %c2_i32_168 : i32 to vector<1x1xi32>
    %518 = arith.cmpi eq, %502, %517 : vector<1x1xi32>
    %c0_i32_169 = arith.constant 0 : i32
    %519 = vector.broadcast %c0_i32_169 : i32 to vector<1x1xi32>
    %520 = arith.cmpi eq, %502, %519 : vector<1x1xi32>
    %521 = arith.ori %518, %520 : vector<1x1xi1>
    %522 = arith.andi %423, %521 : vector<1x1xi1>
    %523 = arith.ori %422, %522 : vector<1x1xi1>
    %cst_170 = arith.constant dense<true> : vector<1x1xi1>
    %524 = arith.xori %523, %cst_170 : vector<1x1xi1>
    %525 = arith.addf %509, %457 : vector<1x128xf32>
    %c0_171 = arith.constant 0 : index
    %c0_172 = arith.constant 0 : index
    %c0_173 = arith.constant 0 : index
    %526 = vector.load %arg1[%c0_171, %c0_172, %c0_173] : memref<2x128x512xf32, #tpu.memory_space<vmem>>, vector<1x128x512xf32>
    %527 = vector.shape_cast %526 : vector<1x128x512xf32> to vector<128x512xf32>
    %cst_174 = arith.constant dense<0.000000e+00> : vector<1x512xf32>
    %528 = tpu.matmul %525, %527, %cst_174 {dimension_numbers = #tpu.dot_dimension_numbers<[1], [0], [0], [1], [0, 0, 1, 1], [], []>} : vector<1x128xf32>, vector<128x512xf32>, vector<1x512xf32> -> vector<1x512xf32>
    %529 = arith.addf %528, %12 : vector<1x512xf32>
    %530 = vector.extract_strided_slice %529 {offsets = [0, 0], sizes = [1, 128], strides = [1, 1]} : vector<1x512xf32> to vector<1x128xf32>
    %cst_175 = arith.constant 5.000000e-01 : f32
    %531 = vector.broadcast %cst_175 : f32 to vector<1x128xf32>
    %532 = arith.mulf %531, %530 : vector<1x128xf32>
    %533 = math.tanh %532 : vector<1x128xf32>
    %cst_176 = arith.constant 1.000000e+00 : f32
    %534 = vector.broadcast %cst_176 : f32 to vector<1x128xf32>
    %535 = arith.addf %533, %534 : vector<1x128xf32>
    %cst_177 = arith.constant 5.000000e-01 : f32
    %536 = vector.broadcast %cst_177 : f32 to vector<1x128xf32>
    %537 = arith.mulf %536, %535 : vector<1x128xf32>
    %538 = vector.extract_strided_slice %529 {offsets = [0, 128], sizes = [1, 128], strides = [1, 1]} : vector<1x512xf32> to vector<1x128xf32>
    %cst_178 = arith.constant 5.000000e-01 : f32
    %539 = vector.broadcast %cst_178 : f32 to vector<1x128xf32>
    %540 = arith.mulf %539, %538 : vector<1x128xf32>
    %541 = math.tanh %540 : vector<1x128xf32>
    %cst_179 = arith.constant 1.000000e+00 : f32
    %542 = vector.broadcast %cst_179 : f32 to vector<1x128xf32>
    %543 = arith.addf %541, %542 : vector<1x128xf32>
    %cst_180 = arith.constant 5.000000e-01 : f32
    %544 = vector.broadcast %cst_180 : f32 to vector<1x128xf32>
    %545 = arith.mulf %544, %543 : vector<1x128xf32>
    %546 = vector.extract_strided_slice %529 {offsets = [0, 256], sizes = [1, 128], strides = [1, 1]} : vector<1x512xf32> to vector<1x128xf32>
    %547 = vector.extract_strided_slice %529 {offsets = [0, 384], sizes = [1, 128], strides = [1, 1]} : vector<1x512xf32> to vector<1x128xf32>
    %548 = arith.mulf %537, %547 : vector<1x128xf32>
    %549 = arith.addf %546, %548 : vector<1x128xf32>
    %550 = math.tanh %549 : vector<1x128xf32>
    %cst_181 = arith.constant 1.000000e+00 : f32
    %551 = vector.broadcast %cst_181 : f32 to vector<1x128xf32>
    %552 = arith.subf %551, %545 : vector<1x128xf32>
    %553 = arith.mulf %552, %550 : vector<1x128xf32>
    %554 = arith.mulf %545, %457 : vector<1x128xf32>
    %555 = arith.addf %553, %554 : vector<1x128xf32>
    %556 = vector.shape_cast %524 : vector<1x1xi1> to vector<1x1xi1>
    %557 = vector.broadcast %556 : vector<1x1xi1> to vector<1x128xi1>
    %558 = arith.select %557, %555, %457 : vector<1x128xi1>, vector<1x128xf32>
    %559 = arith.addf %555, %491 : vector<1x128xf32>
    %c1_182 = arith.constant 1 : index
    %c0_183 = arith.constant 0 : index
    %c0_184 = arith.constant 0 : index
    %560 = vector.load %arg1[%c1_182, %c0_183, %c0_184] : memref<2x128x512xf32, #tpu.memory_space<vmem>>, vector<1x128x512xf32>
    %561 = vector.shape_cast %560 : vector<1x128x512xf32> to vector<128x512xf32>
    %cst_185 = arith.constant dense<0.000000e+00> : vector<1x512xf32>
    %562 = tpu.matmul %559, %561, %cst_185 {dimension_numbers = #tpu.dot_dimension_numbers<[1], [0], [0], [1], [0, 0, 1, 1], [], []>} : vector<1x128xf32>, vector<128x512xf32>, vector<1x512xf32> -> vector<1x512xf32>
    %563 = arith.addf %562, %14 : vector<1x512xf32>
    %564 = vector.extract_strided_slice %563 {offsets = [0, 0], sizes = [1, 128], strides = [1, 1]} : vector<1x512xf32> to vector<1x128xf32>
    %cst_186 = arith.constant 5.000000e-01 : f32
    %565 = vector.broadcast %cst_186 : f32 to vector<1x128xf32>
    %566 = arith.mulf %565, %564 : vector<1x128xf32>
    %567 = math.tanh %566 : vector<1x128xf32>
    %cst_187 = arith.constant 1.000000e+00 : f32
    %568 = vector.broadcast %cst_187 : f32 to vector<1x128xf32>
    %569 = arith.addf %567, %568 : vector<1x128xf32>
    %cst_188 = arith.constant 5.000000e-01 : f32
    %570 = vector.broadcast %cst_188 : f32 to vector<1x128xf32>
    %571 = arith.mulf %570, %569 : vector<1x128xf32>
    %572 = vector.extract_strided_slice %563 {offsets = [0, 128], sizes = [1, 128], strides = [1, 1]} : vector<1x512xf32> to vector<1x128xf32>
    %cst_189 = arith.constant 5.000000e-01 : f32
    %573 = vector.broadcast %cst_189 : f32 to vector<1x128xf32>
    %574 = arith.mulf %573, %572 : vector<1x128xf32>
    %575 = math.tanh %574 : vector<1x128xf32>
    %cst_190 = arith.constant 1.000000e+00 : f32
    %576 = vector.broadcast %cst_190 : f32 to vector<1x128xf32>
    %577 = arith.addf %575, %576 : vector<1x128xf32>
    %cst_191 = arith.constant 5.000000e-01 : f32
    %578 = vector.broadcast %cst_191 : f32 to vector<1x128xf32>
    %579 = arith.mulf %578, %577 : vector<1x128xf32>
    %580 = vector.extract_strided_slice %563 {offsets = [0, 256], sizes = [1, 128], strides = [1, 1]} : vector<1x512xf32> to vector<1x128xf32>
    %581 = vector.extract_strided_slice %563 {offsets = [0, 384], sizes = [1, 128], strides = [1, 1]} : vector<1x512xf32> to vector<1x128xf32>
    %582 = arith.mulf %571, %581 : vector<1x128xf32>
    %583 = arith.addf %580, %582 : vector<1x128xf32>
    %584 = math.tanh %583 : vector<1x128xf32>
    %cst_192 = arith.constant 1.000000e+00 : f32
    %585 = vector.broadcast %cst_192 : f32 to vector<1x128xf32>
    %586 = arith.subf %585, %579 : vector<1x128xf32>
    %587 = arith.mulf %586, %584 : vector<1x128xf32>
    %588 = arith.mulf %579, %491 : vector<1x128xf32>
    %589 = arith.addf %587, %588 : vector<1x128xf32>
    %590 = vector.shape_cast %524 : vector<1x1xi1> to vector<1x1xi1>
    %591 = vector.broadcast %590 : vector<1x1xi1> to vector<1x128xi1>
    %592 = arith.select %591, %589, %491 : vector<1x128xi1>, vector<1x128xf32>
    %c0_193 = arith.constant 0 : index
    %c0_194 = arith.constant 0 : index
    %593 = vector.load %arg3[%c0_193, %c0_194] : memref<128x128xf32, #tpu.memory_space<vmem>>, vector<128x128xf32>
    %cst_195 = arith.constant dense<0.000000e+00> : vector<1x128xf32>
    %594 = tpu.matmul %589, %593, %cst_195 {dimension_numbers = #tpu.dot_dimension_numbers<[1], [0], [0], [1], [0, 0, 1, 1], [], []>} : vector<1x128xf32>, vector<128x128xf32>, vector<1x128xf32> -> vector<1x128xf32>
    %595 = arith.addf %594, %18 : vector<1x128xf32>
    %cst_196 = arith.constant dense<0xFF800000> : vector<1xf32>
    %596 = vector.multi_reduction <maximumf>, %595, %cst_196 [1] : vector<1x128xf32> to vector<1xf32>
    %597 = vector.shape_cast %596 : vector<1xf32> to vector<1x1xf32>
    %598 = vector.broadcast %597 : vector<1x1xf32> to vector<1x128xf32>
    %599 = arith.cmpf oge, %595, %598 : vector<1x128xf32>
    %c128_i32_197 = arith.constant 128 : i32
    %600 = vector.broadcast %c128_i32_197 : i32 to vector<1x128xi32>
    %601 = arith.select %599, %0, %600 : vector<1x128xi1>, vector<1x128xi32>
    %cst_198 = arith.constant dense<2147483647> : vector<1xi32>
    %602 = vector.multi_reduction <minsi>, %601, %cst_198 [1] : vector<1x128xi32> to vector<1xi32>
    %603 = vector.shape_cast %602 : vector<1xi32> to vector<1x1xi32>
    %604 = vector.broadcast %603 : vector<1x1xi32> to vector<1x128xi32>
    %605 = arith.cmpi eq, %0, %604 : vector<1x128xi32>
    %606 = arith.extui %605 : vector<1x128xi1> to vector<1x128xi32>
    %607 = arith.sitofp %606 : vector<1x128xi32> to vector<1x128xf32>
    %608 = vector.shape_cast %524 : vector<1x1xi1> to vector<1x1xi1>
    %609 = vector.broadcast %608 : vector<1x1xi1> to vector<1x128xi1>
    %610 = arith.select %609, %607, %509 : vector<1x128xi1>, vector<1x128xf32>
    %c5_i32 = arith.constant 5 : i32
    %611 = vector.broadcast %c5_i32 : i32 to vector<1x128xi32>
    %612 = arith.cmpi eq, %0, %611 : vector<1x128xi32>
    %613 = vector.broadcast %524 : vector<1x1xi1> to vector<1x128xi1>
    %614 = arith.andi %612, %613 : vector<1x128xi1>
    %615 = vector.shape_cast %603 : vector<1x1xi32> to vector<1x1xi32>
    %616 = vector.broadcast %615 : vector<1x1xi32> to vector<1x128xi32>
    %617 = arith.select %614, %616, %516 : vector<1x128xi1>, vector<1x128xi32>
    %c2_i32_199 = arith.constant 2 : i32
    %618 = vector.broadcast %c2_i32_199 : i32 to vector<1x1xi32>
    %619 = arith.cmpi eq, %603, %618 : vector<1x1xi32>
    %c0_i32_200 = arith.constant 0 : i32
    %620 = vector.broadcast %c0_i32_200 : i32 to vector<1x1xi32>
    %621 = arith.cmpi eq, %603, %620 : vector<1x1xi32>
    %622 = arith.ori %619, %621 : vector<1x1xi1>
    %623 = arith.andi %524, %622 : vector<1x1xi1>
    %624 = arith.ori %523, %623 : vector<1x1xi1>
    %cst_201 = arith.constant dense<true> : vector<1x1xi1>
    %625 = arith.xori %624, %cst_201 : vector<1x1xi1>
    %626 = arith.addf %610, %558 : vector<1x128xf32>
    %c0_202 = arith.constant 0 : index
    %c0_203 = arith.constant 0 : index
    %c0_204 = arith.constant 0 : index
    %627 = vector.load %arg1[%c0_202, %c0_203, %c0_204] : memref<2x128x512xf32, #tpu.memory_space<vmem>>, vector<1x128x512xf32>
    %628 = vector.shape_cast %627 : vector<1x128x512xf32> to vector<128x512xf32>
    %cst_205 = arith.constant dense<0.000000e+00> : vector<1x512xf32>
    %629 = tpu.matmul %626, %628, %cst_205 {dimension_numbers = #tpu.dot_dimension_numbers<[1], [0], [0], [1], [0, 0, 1, 1], [], []>} : vector<1x128xf32>, vector<128x512xf32>, vector<1x512xf32> -> vector<1x512xf32>
    %630 = arith.addf %629, %12 : vector<1x512xf32>
    %631 = vector.extract_strided_slice %630 {offsets = [0, 0], sizes = [1, 128], strides = [1, 1]} : vector<1x512xf32> to vector<1x128xf32>
    %cst_206 = arith.constant 5.000000e-01 : f32
    %632 = vector.broadcast %cst_206 : f32 to vector<1x128xf32>
    %633 = arith.mulf %632, %631 : vector<1x128xf32>
    %634 = math.tanh %633 : vector<1x128xf32>
    %cst_207 = arith.constant 1.000000e+00 : f32
    %635 = vector.broadcast %cst_207 : f32 to vector<1x128xf32>
    %636 = arith.addf %634, %635 : vector<1x128xf32>
    %cst_208 = arith.constant 5.000000e-01 : f32
    %637 = vector.broadcast %cst_208 : f32 to vector<1x128xf32>
    %638 = arith.mulf %637, %636 : vector<1x128xf32>
    %639 = vector.extract_strided_slice %630 {offsets = [0, 128], sizes = [1, 128], strides = [1, 1]} : vector<1x512xf32> to vector<1x128xf32>
    %cst_209 = arith.constant 5.000000e-01 : f32
    %640 = vector.broadcast %cst_209 : f32 to vector<1x128xf32>
    %641 = arith.mulf %640, %639 : vector<1x128xf32>
    %642 = math.tanh %641 : vector<1x128xf32>
    %cst_210 = arith.constant 1.000000e+00 : f32
    %643 = vector.broadcast %cst_210 : f32 to vector<1x128xf32>
    %644 = arith.addf %642, %643 : vector<1x128xf32>
    %cst_211 = arith.constant 5.000000e-01 : f32
    %645 = vector.broadcast %cst_211 : f32 to vector<1x128xf32>
    %646 = arith.mulf %645, %644 : vector<1x128xf32>
    %647 = vector.extract_strided_slice %630 {offsets = [0, 256], sizes = [1, 128], strides = [1, 1]} : vector<1x512xf32> to vector<1x128xf32>
    %648 = vector.extract_strided_slice %630 {offsets = [0, 384], sizes = [1, 128], strides = [1, 1]} : vector<1x512xf32> to vector<1x128xf32>
    %649 = arith.mulf %638, %648 : vector<1x128xf32>
    %650 = arith.addf %647, %649 : vector<1x128xf32>
    %651 = math.tanh %650 : vector<1x128xf32>
    %cst_212 = arith.constant 1.000000e+00 : f32
    %652 = vector.broadcast %cst_212 : f32 to vector<1x128xf32>
    %653 = arith.subf %652, %646 : vector<1x128xf32>
    %654 = arith.mulf %653, %651 : vector<1x128xf32>
    %655 = arith.mulf %646, %558 : vector<1x128xf32>
    %656 = arith.addf %654, %655 : vector<1x128xf32>
    %657 = vector.shape_cast %625 : vector<1x1xi1> to vector<1x1xi1>
    %658 = vector.broadcast %657 : vector<1x1xi1> to vector<1x128xi1>
    %659 = arith.select %658, %656, %558 : vector<1x128xi1>, vector<1x128xf32>
    %660 = arith.addf %656, %592 : vector<1x128xf32>
    %c1_213 = arith.constant 1 : index
    %c0_214 = arith.constant 0 : index
    %c0_215 = arith.constant 0 : index
    %661 = vector.load %arg1[%c1_213, %c0_214, %c0_215] : memref<2x128x512xf32, #tpu.memory_space<vmem>>, vector<1x128x512xf32>
    %662 = vector.shape_cast %661 : vector<1x128x512xf32> to vector<128x512xf32>
    %cst_216 = arith.constant dense<0.000000e+00> : vector<1x512xf32>
    %663 = tpu.matmul %660, %662, %cst_216 {dimension_numbers = #tpu.dot_dimension_numbers<[1], [0], [0], [1], [0, 0, 1, 1], [], []>} : vector<1x128xf32>, vector<128x512xf32>, vector<1x512xf32> -> vector<1x512xf32>
    %664 = arith.addf %663, %14 : vector<1x512xf32>
    %665 = vector.extract_strided_slice %664 {offsets = [0, 0], sizes = [1, 128], strides = [1, 1]} : vector<1x512xf32> to vector<1x128xf32>
    %cst_217 = arith.constant 5.000000e-01 : f32
    %666 = vector.broadcast %cst_217 : f32 to vector<1x128xf32>
    %667 = arith.mulf %666, %665 : vector<1x128xf32>
    %668 = math.tanh %667 : vector<1x128xf32>
    %cst_218 = arith.constant 1.000000e+00 : f32
    %669 = vector.broadcast %cst_218 : f32 to vector<1x128xf32>
    %670 = arith.addf %668, %669 : vector<1x128xf32>
    %cst_219 = arith.constant 5.000000e-01 : f32
    %671 = vector.broadcast %cst_219 : f32 to vector<1x128xf32>
    %672 = arith.mulf %671, %670 : vector<1x128xf32>
    %673 = vector.extract_strided_slice %664 {offsets = [0, 128], sizes = [1, 128], strides = [1, 1]} : vector<1x512xf32> to vector<1x128xf32>
    %cst_220 = arith.constant 5.000000e-01 : f32
    %674 = vector.broadcast %cst_220 : f32 to vector<1x128xf32>
    %675 = arith.mulf %674, %673 : vector<1x128xf32>
    %676 = math.tanh %675 : vector<1x128xf32>
    %cst_221 = arith.constant 1.000000e+00 : f32
    %677 = vector.broadcast %cst_221 : f32 to vector<1x128xf32>
    %678 = arith.addf %676, %677 : vector<1x128xf32>
    %cst_222 = arith.constant 5.000000e-01 : f32
    %679 = vector.broadcast %cst_222 : f32 to vector<1x128xf32>
    %680 = arith.mulf %679, %678 : vector<1x128xf32>
    %681 = vector.extract_strided_slice %664 {offsets = [0, 256], sizes = [1, 128], strides = [1, 1]} : vector<1x512xf32> to vector<1x128xf32>
    %682 = vector.extract_strided_slice %664 {offsets = [0, 384], sizes = [1, 128], strides = [1, 1]} : vector<1x512xf32> to vector<1x128xf32>
    %683 = arith.mulf %672, %682 : vector<1x128xf32>
    %684 = arith.addf %681, %683 : vector<1x128xf32>
    %685 = math.tanh %684 : vector<1x128xf32>
    %cst_223 = arith.constant 1.000000e+00 : f32
    %686 = vector.broadcast %cst_223 : f32 to vector<1x128xf32>
    %687 = arith.subf %686, %680 : vector<1x128xf32>
    %688 = arith.mulf %687, %685 : vector<1x128xf32>
    %689 = arith.mulf %680, %592 : vector<1x128xf32>
    %690 = arith.addf %688, %689 : vector<1x128xf32>
    %691 = vector.shape_cast %625 : vector<1x1xi1> to vector<1x1xi1>
    %692 = vector.broadcast %691 : vector<1x1xi1> to vector<1x128xi1>
    %693 = arith.select %692, %690, %592 : vector<1x128xi1>, vector<1x128xf32>
    %c0_224 = arith.constant 0 : index
    %c0_225 = arith.constant 0 : index
    %694 = vector.load %arg3[%c0_224, %c0_225] : memref<128x128xf32, #tpu.memory_space<vmem>>, vector<128x128xf32>
    %cst_226 = arith.constant dense<0.000000e+00> : vector<1x128xf32>
    %695 = tpu.matmul %690, %694, %cst_226 {dimension_numbers = #tpu.dot_dimension_numbers<[1], [0], [0], [1], [0, 0, 1, 1], [], []>} : vector<1x128xf32>, vector<128x128xf32>, vector<1x128xf32> -> vector<1x128xf32>
    %696 = arith.addf %695, %18 : vector<1x128xf32>
    %cst_227 = arith.constant dense<0xFF800000> : vector<1xf32>
    %697 = vector.multi_reduction <maximumf>, %696, %cst_227 [1] : vector<1x128xf32> to vector<1xf32>
    %698 = vector.shape_cast %697 : vector<1xf32> to vector<1x1xf32>
    %699 = vector.broadcast %698 : vector<1x1xf32> to vector<1x128xf32>
    %700 = arith.cmpf oge, %696, %699 : vector<1x128xf32>
    %c128_i32_228 = arith.constant 128 : i32
    %701 = vector.broadcast %c128_i32_228 : i32 to vector<1x128xi32>
    %702 = arith.select %700, %0, %701 : vector<1x128xi1>, vector<1x128xi32>
    %cst_229 = arith.constant dense<2147483647> : vector<1xi32>
    %703 = vector.multi_reduction <minsi>, %702, %cst_229 [1] : vector<1x128xi32> to vector<1xi32>
    %704 = vector.shape_cast %703 : vector<1xi32> to vector<1x1xi32>
    %705 = vector.broadcast %704 : vector<1x1xi32> to vector<1x128xi32>
    %706 = arith.cmpi eq, %0, %705 : vector<1x128xi32>
    %707 = arith.extui %706 : vector<1x128xi1> to vector<1x128xi32>
    %708 = arith.sitofp %707 : vector<1x128xi32> to vector<1x128xf32>
    %709 = vector.shape_cast %625 : vector<1x1xi1> to vector<1x1xi1>
    %710 = vector.broadcast %709 : vector<1x1xi1> to vector<1x128xi1>
    %711 = arith.select %710, %708, %610 : vector<1x128xi1>, vector<1x128xf32>
    %c6_i32 = arith.constant 6 : i32
    %712 = vector.broadcast %c6_i32 : i32 to vector<1x128xi32>
    %713 = arith.cmpi eq, %0, %712 : vector<1x128xi32>
    %714 = vector.broadcast %625 : vector<1x1xi1> to vector<1x128xi1>
    %715 = arith.andi %713, %714 : vector<1x128xi1>
    %716 = vector.shape_cast %704 : vector<1x1xi32> to vector<1x1xi32>
    %717 = vector.broadcast %716 : vector<1x1xi32> to vector<1x128xi32>
    %718 = arith.select %715, %717, %617 : vector<1x128xi1>, vector<1x128xi32>
    %c2_i32_230 = arith.constant 2 : i32
    %719 = vector.broadcast %c2_i32_230 : i32 to vector<1x1xi32>
    %720 = arith.cmpi eq, %704, %719 : vector<1x1xi32>
    %c0_i32_231 = arith.constant 0 : i32
    %721 = vector.broadcast %c0_i32_231 : i32 to vector<1x1xi32>
    %722 = arith.cmpi eq, %704, %721 : vector<1x1xi32>
    %723 = arith.ori %720, %722 : vector<1x1xi1>
    %724 = arith.andi %625, %723 : vector<1x1xi1>
    %725 = arith.ori %624, %724 : vector<1x1xi1>
    %cst_232 = arith.constant dense<true> : vector<1x1xi1>
    %726 = arith.xori %725, %cst_232 : vector<1x1xi1>
    %727 = arith.addf %711, %659 : vector<1x128xf32>
    %c0_233 = arith.constant 0 : index
    %c0_234 = arith.constant 0 : index
    %c0_235 = arith.constant 0 : index
    %728 = vector.load %arg1[%c0_233, %c0_234, %c0_235] : memref<2x128x512xf32, #tpu.memory_space<vmem>>, vector<1x128x512xf32>
    %729 = vector.shape_cast %728 : vector<1x128x512xf32> to vector<128x512xf32>
    %cst_236 = arith.constant dense<0.000000e+00> : vector<1x512xf32>
    %730 = tpu.matmul %727, %729, %cst_236 {dimension_numbers = #tpu.dot_dimension_numbers<[1], [0], [0], [1], [0, 0, 1, 1], [], []>} : vector<1x128xf32>, vector<128x512xf32>, vector<1x512xf32> -> vector<1x512xf32>
    %731 = arith.addf %730, %12 : vector<1x512xf32>
    %732 = vector.extract_strided_slice %731 {offsets = [0, 0], sizes = [1, 128], strides = [1, 1]} : vector<1x512xf32> to vector<1x128xf32>
    %cst_237 = arith.constant 5.000000e-01 : f32
    %733 = vector.broadcast %cst_237 : f32 to vector<1x128xf32>
    %734 = arith.mulf %733, %732 : vector<1x128xf32>
    %735 = math.tanh %734 : vector<1x128xf32>
    %cst_238 = arith.constant 1.000000e+00 : f32
    %736 = vector.broadcast %cst_238 : f32 to vector<1x128xf32>
    %737 = arith.addf %735, %736 : vector<1x128xf32>
    %cst_239 = arith.constant 5.000000e-01 : f32
    %738 = vector.broadcast %cst_239 : f32 to vector<1x128xf32>
    %739 = arith.mulf %738, %737 : vector<1x128xf32>
    %740 = vector.extract_strided_slice %731 {offsets = [0, 128], sizes = [1, 128], strides = [1, 1]} : vector<1x512xf32> to vector<1x128xf32>
    %cst_240 = arith.constant 5.000000e-01 : f32
    %741 = vector.broadcast %cst_240 : f32 to vector<1x128xf32>
    %742 = arith.mulf %741, %740 : vector<1x128xf32>
    %743 = math.tanh %742 : vector<1x128xf32>
    %cst_241 = arith.constant 1.000000e+00 : f32
    %744 = vector.broadcast %cst_241 : f32 to vector<1x128xf32>
    %745 = arith.addf %743, %744 : vector<1x128xf32>
    %cst_242 = arith.constant 5.000000e-01 : f32
    %746 = vector.broadcast %cst_242 : f32 to vector<1x128xf32>
    %747 = arith.mulf %746, %745 : vector<1x128xf32>
    %748 = vector.extract_strided_slice %731 {offsets = [0, 256], sizes = [1, 128], strides = [1, 1]} : vector<1x512xf32> to vector<1x128xf32>
    %749 = vector.extract_strided_slice %731 {offsets = [0, 384], sizes = [1, 128], strides = [1, 1]} : vector<1x512xf32> to vector<1x128xf32>
    %750 = arith.mulf %739, %749 : vector<1x128xf32>
    %751 = arith.addf %748, %750 : vector<1x128xf32>
    %752 = math.tanh %751 : vector<1x128xf32>
    %cst_243 = arith.constant 1.000000e+00 : f32
    %753 = vector.broadcast %cst_243 : f32 to vector<1x128xf32>
    %754 = arith.subf %753, %747 : vector<1x128xf32>
    %755 = arith.mulf %754, %752 : vector<1x128xf32>
    %756 = arith.mulf %747, %659 : vector<1x128xf32>
    %757 = arith.addf %755, %756 : vector<1x128xf32>
    %758 = vector.shape_cast %726 : vector<1x1xi1> to vector<1x1xi1>
    %759 = vector.broadcast %758 : vector<1x1xi1> to vector<1x128xi1>
    %760 = arith.select %759, %757, %659 : vector<1x128xi1>, vector<1x128xf32>
    %761 = arith.addf %757, %693 : vector<1x128xf32>
    %c1_244 = arith.constant 1 : index
    %c0_245 = arith.constant 0 : index
    %c0_246 = arith.constant 0 : index
    %762 = vector.load %arg1[%c1_244, %c0_245, %c0_246] : memref<2x128x512xf32, #tpu.memory_space<vmem>>, vector<1x128x512xf32>
    %763 = vector.shape_cast %762 : vector<1x128x512xf32> to vector<128x512xf32>
    %cst_247 = arith.constant dense<0.000000e+00> : vector<1x512xf32>
    %764 = tpu.matmul %761, %763, %cst_247 {dimension_numbers = #tpu.dot_dimension_numbers<[1], [0], [0], [1], [0, 0, 1, 1], [], []>} : vector<1x128xf32>, vector<128x512xf32>, vector<1x512xf32> -> vector<1x512xf32>
    %765 = arith.addf %764, %14 : vector<1x512xf32>
    %766 = vector.extract_strided_slice %765 {offsets = [0, 0], sizes = [1, 128], strides = [1, 1]} : vector<1x512xf32> to vector<1x128xf32>
    %cst_248 = arith.constant 5.000000e-01 : f32
    %767 = vector.broadcast %cst_248 : f32 to vector<1x128xf32>
    %768 = arith.mulf %767, %766 : vector<1x128xf32>
    %769 = math.tanh %768 : vector<1x128xf32>
    %cst_249 = arith.constant 1.000000e+00 : f32
    %770 = vector.broadcast %cst_249 : f32 to vector<1x128xf32>
    %771 = arith.addf %769, %770 : vector<1x128xf32>
    %cst_250 = arith.constant 5.000000e-01 : f32
    %772 = vector.broadcast %cst_250 : f32 to vector<1x128xf32>
    %773 = arith.mulf %772, %771 : vector<1x128xf32>
    %774 = vector.extract_strided_slice %765 {offsets = [0, 128], sizes = [1, 128], strides = [1, 1]} : vector<1x512xf32> to vector<1x128xf32>
    %cst_251 = arith.constant 5.000000e-01 : f32
    %775 = vector.broadcast %cst_251 : f32 to vector<1x128xf32>
    %776 = arith.mulf %775, %774 : vector<1x128xf32>
    %777 = math.tanh %776 : vector<1x128xf32>
    %cst_252 = arith.constant 1.000000e+00 : f32
    %778 = vector.broadcast %cst_252 : f32 to vector<1x128xf32>
    %779 = arith.addf %777, %778 : vector<1x128xf32>
    %cst_253 = arith.constant 5.000000e-01 : f32
    %780 = vector.broadcast %cst_253 : f32 to vector<1x128xf32>
    %781 = arith.mulf %780, %779 : vector<1x128xf32>
    %782 = vector.extract_strided_slice %765 {offsets = [0, 256], sizes = [1, 128], strides = [1, 1]} : vector<1x512xf32> to vector<1x128xf32>
    %783 = vector.extract_strided_slice %765 {offsets = [0, 384], sizes = [1, 128], strides = [1, 1]} : vector<1x512xf32> to vector<1x128xf32>
    %784 = arith.mulf %773, %783 : vector<1x128xf32>
    %785 = arith.addf %782, %784 : vector<1x128xf32>
    %786 = math.tanh %785 : vector<1x128xf32>
    %cst_254 = arith.constant 1.000000e+00 : f32
    %787 = vector.broadcast %cst_254 : f32 to vector<1x128xf32>
    %788 = arith.subf %787, %781 : vector<1x128xf32>
    %789 = arith.mulf %788, %786 : vector<1x128xf32>
    %790 = arith.mulf %781, %693 : vector<1x128xf32>
    %791 = arith.addf %789, %790 : vector<1x128xf32>
    %792 = vector.shape_cast %726 : vector<1x1xi1> to vector<1x1xi1>
    %793 = vector.broadcast %792 : vector<1x1xi1> to vector<1x128xi1>
    %794 = arith.select %793, %791, %693 : vector<1x128xi1>, vector<1x128xf32>
    %c0_255 = arith.constant 0 : index
    %c0_256 = arith.constant 0 : index
    %795 = vector.load %arg3[%c0_255, %c0_256] : memref<128x128xf32, #tpu.memory_space<vmem>>, vector<128x128xf32>
    %cst_257 = arith.constant dense<0.000000e+00> : vector<1x128xf32>
    %796 = tpu.matmul %791, %795, %cst_257 {dimension_numbers = #tpu.dot_dimension_numbers<[1], [0], [0], [1], [0, 0, 1, 1], [], []>} : vector<1x128xf32>, vector<128x128xf32>, vector<1x128xf32> -> vector<1x128xf32>
    %797 = arith.addf %796, %18 : vector<1x128xf32>
    %cst_258 = arith.constant dense<0xFF800000> : vector<1xf32>
    %798 = vector.multi_reduction <maximumf>, %797, %cst_258 [1] : vector<1x128xf32> to vector<1xf32>
    %799 = vector.shape_cast %798 : vector<1xf32> to vector<1x1xf32>
    %800 = vector.broadcast %799 : vector<1x1xf32> to vector<1x128xf32>
    %801 = arith.cmpf oge, %797, %800 : vector<1x128xf32>
    %c128_i32_259 = arith.constant 128 : i32
    %802 = vector.broadcast %c128_i32_259 : i32 to vector<1x128xi32>
    %803 = arith.select %801, %0, %802 : vector<1x128xi1>, vector<1x128xi32>
    %cst_260 = arith.constant dense<2147483647> : vector<1xi32>
    %804 = vector.multi_reduction <minsi>, %803, %cst_260 [1] : vector<1x128xi32> to vector<1xi32>
    %805 = vector.shape_cast %804 : vector<1xi32> to vector<1x1xi32>
    %c7_i32 = arith.constant 7 : i32
    %806 = vector.broadcast %c7_i32 : i32 to vector<1x128xi32>
    %807 = arith.cmpi eq, %0, %806 : vector<1x128xi32>
    %808 = vector.broadcast %726 : vector<1x1xi1> to vector<1x128xi1>
    %809 = arith.andi %807, %808 : vector<1x128xi1>
    %810 = vector.shape_cast %805 : vector<1x1xi32> to vector<1x1xi32>
    %811 = vector.broadcast %810 : vector<1x1xi32> to vector<1x128xi32>
    %812 = arith.select %809, %811, %718 : vector<1x128xi1>, vector<1x128xi32>
    %c0_261 = arith.constant 0 : index
    %c0_262 = arith.constant 0 : index
    %813 = vector.load %arg5[%c0_261, %c0_262] : memref<1x128xi32, #tpu.memory_space<vmem>>, vector<1x128xi32>
    tpu.vector_store %arg5[%c0_261, %c0_262], %812 {strides = array<i32>} : memref<1x128xi32, #tpu.memory_space<vmem>>, vector<1x128xi32>,
    %c0_263 = arith.constant 0 : index
    %c0_264 = arith.constant 0 : index
    %c0_265 = arith.constant 0 : index
    %814 = vector.load %arg6[%c0_263, %c0_264, %c0_265] : memref<2x1x128xf32, #tpu.memory_space<vmem>>, vector<1x1x128xf32>
    %815 = vector.shape_cast %814 : vector<1x1x128xf32> to vector<1x128xf32>
    %816 = vector.shape_cast %760 : vector<1x128xf32> to vector<1x1x128xf32>
    tpu.vector_store %arg6[%c0_263, %c0_264, %c0_265], %816 {strides = array<i32>} : memref<2x1x128xf32, #tpu.memory_space<vmem>>, vector<1x1x128xf32>,
    %c1_266 = arith.constant 1 : index
    %c0_267 = arith.constant 0 : index
    %c0_268 = arith.constant 0 : index
    %817 = vector.load %arg6[%c1_266, %c0_267, %c0_268] : memref<2x1x128xf32, #tpu.memory_space<vmem>>, vector<1x1x128xf32>
    %818 = vector.shape_cast %817 : vector<1x1x128xf32> to vector<1x128xf32>
    %819 = vector.shape_cast %794 : vector<1x128xf32> to vector<1x1x128xf32>
    tpu.vector_store %arg6[%c1_266, %c0_267, %c0_268], %819 {strides = array<i32>} : memref<2x1x128xf32, #tpu.memory_space<vmem>>, vector<1x1x128xf32>,
    return
  }
}

</mosaic_0001>

<llo_original>
// kernel: greedy_decode.1
$region0: #{greedy_decode.1}
  #allocation0 [shape = 'u32[]', space=smem, size = 0x4, offset = 0x4, fixed_abs, tag = 'smem constant byte address 0x4 - core index']
  #allocation1 [shape = 'u32[144,128]{1,0:T(1,128)}', space=vmem, size = 0x12000, scoped, tag = 'internal scratch']
  %s0 = inlined_call_operand.vmem [shape: f32[2,1,128], index: 0, kind: input, shape index: {}]
  %s1 = inlined_call_operand.hbm [shape: f32[2,128,512], index: 1, kind: input, shape index: {}]
  %s2 = inlined_call_operand.vmem [shape: f32[2,1,512], index: 2, kind: input, shape index: {}]
  %s3 = inlined_call_operand.hbm [shape: f32[128,128], index: 3, kind: input, shape index: {}]
  %s4 = inlined_call_operand.vmem [shape: f32[2,1,128], index: 4, kind: input, shape index: {}]
  %s5 = inlined_call_operand.vmem [shape: s32[1,128], index: 5, kind: output, shape index: {0}]
  %s6 = inlined_call_operand.vmem [shape: f32[2,1,128], index: 6, kind: output, shape index: {1}]
  %7 = xla_tuple %s5, %s6
  %s8 = sld [smem:[#allocation0]]
  $region46: #{greedy_decode.1} parent=0
    _
  %s10 = ssub.s32 1, %s8
  %s11 = scalar_select 0, %s10, %s8
  $region1: #{greedy_decode.1} parent=0
    #allocation2 [shape = 'u8[524288]{0}', space=vmem, size = 0x80000, scoped, tag = 'input window, operand 1, single buffered']
    #allocation3 [shape = 's32[1]{0}', space=sflag, size = 0x4, scoped, tag = 'scoped memory for greedy_decode.1']
    #allocation4 [shape = 'u8[65536]{0}', space=vmem, size = 0x10000, scoped, tag = 'input window, operand 3, single buffered']
    #allocation5 [shape = 's32[1]{0}', space=sflag, size = 0x4, scoped, tag = 'scoped memory for greedy_decode.1']
    %12 = vsyncpa [#allocation3], 0
    %13 = vsyncpa [#allocation5], 0
    // Predicated region
    $region2: #{greedy_decode.1} parent=1 // pred_check
      _
    $region3: #{greedy_decode.1} parent=1 // pred_check_branch
      %15 = sbr.rel (0) target = $region5
    $region4: #{greedy_decode.1} parent=1 // pred_region
      _
    $region5: #{greedy_decode.1} parent=1 // pred_fallthru
      _
    // Predicated region
    $region6: #{greedy_decode.1} parent=1 // pred_check
      _
    $region7: #{greedy_decode.1} parent=1 // pred_check_branch
      %17 = sbr.rel (0) target = $region9
    $region8: #{greedy_decode.1} parent=1 // pred_region
      %s19 = ssub.s32 16384, 16384
      %20 = vsyncadd [#allocation3], %s19
      %s21 = sshll.u32 [#allocation2], 4
      %s22 = int_to_ptr.vmem [resolvable:$true] %s21
      %27 = dma.hbm_to_vmem [thread:$0]  %s1, 16384, %s22, [#allocation3], 512, 512, 32
    $region9: #{greedy_decode.1} parent=1 // pred_fallthru
      _
    // Predicated region
    $region10: #{greedy_decode.1} parent=1 // pred_check
      _
    $region11: #{greedy_decode.1} parent=1 // pred_check_branch
      %29 = sbr.rel (0) target = $region13
    $region12: #{greedy_decode.1} parent=1 // pred_region
      _
    $region13: #{greedy_decode.1} parent=1 // pred_fallthru
      _
    // Predicated region
    $region14: #{greedy_decode.1} parent=1 // pred_check
      _
    $region15: #{greedy_decode.1} parent=1 // pred_check_branch
      %31 = sbr.rel (0) target = $region17
    $region16: #{greedy_decode.1} parent=1 // pred_region
      %s33 = ssub.s32 2048, 2048
      %34 = vsyncadd [#allocation5], %s33
      %s35 = sshll.u32 [#allocation4], 4
      %s36 = int_to_ptr.vmem [resolvable:$true] %s35
      %41 = dma.hbm_to_vmem [thread:$0]  %s3, 2048, %s36, [#allocation5], 128, 128, 8
    $region17: #{greedy_decode.1} parent=1 // pred_fallthru
      _
    // Predicated region
    $region18: #{greedy_decode.1} parent=1 // pred_check
      _
    $region19: #{greedy_decode.1} parent=1 // pred_check_branch
      %43 = sbr.rel (0) target = $region21
    $region20: #{greedy_decode.1} parent=1 // pred_region
      _
    $region21: #{greedy_decode.1} parent=1 // pred_fallthru
      _
    // Predicated region
    $region22: #{greedy_decode.1} parent=1 // pred_check
      _
    $region23: #{greedy_decode.1} parent=1 // pred_check_branch
      %45 = sbr.rel (0) target = $region25
    $region24: #{greedy_decode.1} parent=1 // pred_region
      %46 = dma.done [#allocation3], 16384
    $region25: #{greedy_decode.1} parent=1 // pred_fallthru
      _
    // Predicated region
    $region26: #{greedy_decode.1} parent=1 // pred_check
      _
    $region27: #{greedy_decode.1} parent=1 // pred_check_branch
      %48 = sbr.rel (0) target = $region29
    $region28: #{greedy_decode.1} parent=1 // pred_region
      %49 = dma.done [#allocation5], 2048
    $region29: #{greedy_decode.1} parent=1 // pred_fallthru
      _
    %v50 = vlaneseq
    %v51 = vand.u32 %v50, 127
    %v52 = vld [vmem:[%s0] sm:$0x1]
    %s53 = scalar_lea.vmem %s0, 1
    %v54 = vld [vmem:[%s53] sm:$0x1]
    %vm55 = vcmp.eq.s32.totalorder %v51, 1
    %v56 = vsel %vm55, 1, 0
    %v57 = vcvt.s32.f32 %v56
    %v58 = vld [vmem:[%s2] sm:$0xf]
    %s59 = scalar_lea.vmem %s2, 4
    %v60 = vld [vmem:[%s59] sm:$0xf]
    %v61 = vld [vmem:[%s4] sm:$0x1]
    %s62 = scalar_lea.vmem %s4, 1
    %v63 = vld [vmem:[%s62] sm:$0x1]
    %v64 = vadd.f32 %v57, %v52
    %v65 = vld [vmem:[#allocation2] sm:$0xff]
    %v66 = vld [vmem:[#allocation2 + $0x8] sm:$0xff]
    %v67 = vld [vmem:[#allocation2 + $0x10] sm:$0xff]
    %v68 = vld [vmem:[#allocation2 + $0x18] sm:$0xff]
    %v69 = vld [vmem:[#allocation2 + $0x20] sm:$0xff]
    %v70 = vld [vmem:[#allocation2 + $0x28] sm:$0xff]
    %v71 = vld [vmem:[#allocation2 + $0x30] sm:$0xff]
    %v72 = vld [vmem:[#allocation2 + $0x38] sm:$0xff]
    %v73 = vld [vmem:[#allocation2 + $0x40] sm:$0xff]
    %v74 = vld [vmem:[#allocation2 + $0x48] sm:$0xff]
    %v75 = vld [vmem:[#allocation2 + $0x50] sm:$0xff]
    %v76 = vld [vmem:[#allocation2 + $0x58] sm:$0xff]
    %v77 = vld [vmem:[#allocation2 + $0x60] sm:$0xff]
    %v78 = vld [vmem:[#allocation2 + $0x68] sm:$0xff]
    %v79 = vld [vmem:[#allocation2 + $0x70] sm:$0xff]
    %v80 = vld [vmem:[#allocation2 + $0x78] sm:$0xff]
    %v81 = vld [vmem:[#allocation2 + $0x80] sm:$0xff]
    %v82 = vld [vmem:[#allocation2 + $0x88] sm:$0xff]
    %v83 = vld [vmem:[#allocation2 + $0x90] sm:$0xff]
    %v84 = vld [vmem:[#allocation2 + $0x98] sm:$0xff]
    %v85 = vld [vmem:[#allocation2 + $0xa0] sm:$0xff]
    %v86 = vld [vmem:[#allocation2 + $0xa8] sm:$0xff]
    %v87 = vld [vmem:[#allocation2 + $0xb0] sm:$0xff]
    %v88 = vld [vmem:[#allocation2 + $0xb8] sm:$0xff]
    %v89 = vld [vmem:[#allocation2 + $0xc0] sm:$0xff]
    %v90 = vld [vmem:[#allocation2 + $0xc8] sm:$0xff]
    %v91 = vld [vmem:[#allocation2 + $0xd0] sm:$0xff]
    %v92 = vld [vmem:[#allocation2 + $0xd8] sm:$0xff]
    %v93 = vld [vmem:[#allocation2 + $0xe0] sm:$0xff]
    %v94 = vld [vmem:[#allocation2 + $0xe8] sm:$0xff]
    %v95 = vld [vmem:[#allocation2 + $0xf0] sm:$0xff]
    %v96 = vld [vmem:[#allocation2 + $0xf8] sm:$0xff]
    %v97 = vld [vmem:[#allocation2 + $0x100] sm:$0xff]
    %v98 = vld [vmem:[#allocation2 + $0x108] sm:$0xff]
    %v99 = vld [vmem:[#allocation2 + $0x110] sm:$0xff]
    %v100 = vld [vmem:[#allocation2 + $0x118] sm:$0xff]
    %v101 = vld [vmem:[#allocation2 + $0x120] sm:$0xff]
    %v102 = vld [vmem:[#allocation2 + $0x128] sm:$0xff]
    %v103 = vld [vmem:[#allocation2 + $0x130] sm:$0xff]
    %v104 = vld [vmem:[#allocation2 + $0x138] sm:$0xff]
    %v105 = vld [vmem:[#allocation2 + $0x140] sm:$0xff]
    %v106 = vld [vmem:[#allocation2 + $0x148] sm:$0xff]
    %v107 = vld [vmem:[#allocation2 + $0x150] sm:$0xff]
    %v108 = vld [vmem:[#allocation2 + $0x158] sm:$0xff]
    %v109 = vld [vmem:[#allocation2 + $0x160] sm:$0xff]
    %v110 = vld [vmem:[#allocation2 + $0x168] sm:$0xff]
    %v111 = vld [vmem:[#allocation2 + $0x170] sm:$0xff]
    %v112 = vld [vmem:[#allocation2 + $0x178] sm:$0xff]
    %v113 = vld [vmem:[#allocation2 + $0x180] sm:$0xff]
    %v114 = vld [vmem:[#allocation2 + $0x188] sm:$0xff]
    %v115 = vld [vmem:[#allocation2 + $0x190] sm:$0xff]
    %v116 = vld [vmem:[#allocation2 + $0x198] sm:$0xff]
    %v117 = vld [vmem:[#allocation2 + $0x1a0] sm:$0xff]
    %v118 = vld [vmem:[#allocation2 + $0x1a8] sm:$0xff]
    %v119 = vld [vmem:[#allocation2 + $0x1b0] sm:$0xff]
    %v120 = vld [vmem:[#allocation2 + $0x1b8] sm:$0xff]
    %v121 = vld [vmem:[#allocation2 + $0x1c0] sm:$0xff]
    %v122 = vld [vmem:[#allocation2 + $0x1c8] sm:$0xff]
    %v123 = vld [vmem:[#allocation2 + $0x1d0] sm:$0xff]
    %v124 = vld [vmem:[#allocation2 + $0x1d8] sm:$0xff]
    %v125 = vld [vmem:[#allocation2 + $0x1e0] sm:$0xff]
    %v126 = vld [vmem:[#allocation2 + $0x1e8] sm:$0xff]
    %v127 = vld [vmem:[#allocation2 + $0x1f0] sm:$0xff]
    %v128 = vld [vmem:[#allocation2 + $0x1f8] sm:$0xff]
    %v130 = vlaneseq
    %v131 = vshrl.u32 %v130, 7
    %v132 = vsub.s32 0, %v131
    %v133 = vrot.slane %v58, %v132
    %v134 = vlaneseq
    %v135 = vshrl.u32 %v134, 7
    %v136 = vsub.s32 1, %v135
    %v137 = vrot.slane %v58, %v136
    %v138 = vlaneseq
    %v139 = vshrl.u32 %v138, 7
    %v140 = vsub.s32 2, %v139
    %v141 = vrot.slane %v58, %v140
    %v142 = vlaneseq
    %v143 = vshrl.u32 %v142, 7
    %v144 = vsub.s32 3, %v143
    %v145 = vrot.slane %v58, %v144
    %150 = vmatprep.subr.mxu0 %v66
    %151 = vmatpush1.msra.mxu0 %v65
    %152 = vmatprep.subr.mxu0 %v70
    %153 = vmatpush1.msra.mxu0 %v69
    %154 = vmatprep.subr.mxu0 %v74
    %155 = vmatpush1.msra.mxu0 %v73
    %156 = vmatprep.subr.mxu0 %v78
    %157 = vmatpush1.msra.mxu0 %v77
    %158 = vmatprep.subr.mxu0 %v82
    %159 = vmatpush1.msra.mxu0 %v81
    %160 = vmatprep.subr.mxu0 %v86
    %161 = vmatpush1.msra.mxu0 %v85
    %162 = vmatprep.subr.mxu0 %v90
    %163 = vmatpush1.msra.mxu0 %v89
    %164 = vmatprep.subr.mxu0 %v94
    %165 = vmatpush1.msra.mxu0 %v93
    %166 = vmatprep.subr.mxu0 %v98
    %167 = vmatpush1.msra.mxu0 %v97
    %168 = vmatprep.subr.mxu0 %v102
    %169 = vmatpush1.msra.mxu0 %v101
    %170 = vmatprep.subr.mxu0 %v106
    %171 = vmatpush1.msra.mxu0 %v105
    %172 = vmatprep.subr.mxu0 %v110
    %173 = vmatpush1.msra.mxu0 %v109
    %174 = vmatprep.subr.mxu0 %v114
    %175 = vmatpush1.msra.mxu0 %v113
    %176 = vmatprep.subr.mxu0 %v118
    %177 = vmatpush1.msra.mxu0 %v117
    %178 = vmatprep.subr.mxu0 %v122
    %179 = vmatpush1.msra.mxu0 %v121
    %180 = vmatprep.subr.mxu0 %v126
    %181 = vmatpush1.msra.mxu0 %v125
    %182 = vmatprep.subr.mxu0 0.0
    %183 = vmatpush1.msra.mxu0 0.0
    %184 = vmatprep.subr.mxu0 0.0
    %185 = vmatpush1.msra.mxu0 0.0
    %186 = vmatprep.subr.mxu0 0.0
    %187 = vmatpush1.msra.mxu0 0.0
    %188 = vmatprep.subr.mxu0 0.0
    %189 = vmatpush1.msra.mxu0 0.0
    %190 = vmatprep.subr.mxu0 0.0
    %191 = vmatpush1.msra.mxu0 0.0
    %192 = vmatprep.subr.mxu0 0.0
    %193 = vmatpush1.msra.mxu0 0.0
    %194 = vmatprep.subr.mxu0 0.0
    %195 = vmatpush1.msra.mxu0 0.0
    %196 = vmatprep.subr.mxu0 0.0
    %197 = vmatpush1.msra.mxu0 0.0
    %198 = vmatprep.subr.mxu0 0.0
    %199 = vmatpush1.msra.mxu0 0.0
    %200 = vmatprep.subr.mxu0 0.0
    %201 = vmatpush1.msra.mxu0 0.0
    %202 = vmatprep.subr.mxu0 0.0
    %203 = vmatpush1.msra.mxu0 0.0
    %204 = vmatprep.subr.mxu0 0.0
    %205 = vmatpush1.msra.mxu0 0.0
    %206 = vmatprep.subr.mxu0 0.0
    %207 = vmatpush1.msra.mxu0 0.0
    %208 = vmatprep.subr.mxu0 0.0
    %209 = vmatpush1.msra.mxu0 0.0
    %210 = vmatprep.subr.mxu0 0.0
    %211 = vmatpush1.msra.mxu0 0.0
    %212 = vmatprep.subr.mxu0 0.0
    %213 = vmatpush1.msra.mxu0 0.0
    %214 = vmatprep.mubr.f32.mxu0 0.0
    %215 = vmatmul.mubr.f32.gmra.mrb[0].mxu0 %v64
    %v216 = vpop.f32.mrb[0].mxu0
    %v217 = vadd.f32 %v133, %v216
    %v218 = vpop.f32.mrb[0].mxu0
    %v219 = vadd.f32 %v137, %v218
    %220 = vdwg.mxu0
    %221 = vmatprep.subr.mxu0 %v68
    %222 = vmatpush1.msra.mxu0 %v67
    %223 = vmatprep.subr.mxu0 %v72
    %224 = vmatpush1.msra.mxu0 %v71
    %225 = vmatprep.subr.mxu0 %v76
    %226 = vmatpush1.msra.mxu0 %v75
    %227 = vmatprep.subr.mxu0 %v80
    %228 = vmatpush1.msra.mxu0 %v79
    %229 = vmatprep.subr.mxu0 %v84
    %230 = vmatpush1.msra.mxu0 %v83
    %231 = vmatprep.subr.mxu0 %v88
    %232 = vmatpush1.msra.mxu0 %v87
    %233 = vmatprep.subr.mxu0 %v92
    %234 = vmatpush1.msra.mxu0 %v91
    %235 = vmatprep.subr.mxu0 %v96
    %236 = vmatpush1.msra.mxu0 %v95
    %237 = vmatprep.subr.mxu0 %v100
    %238 = vmatpush1.msra.mxu0 %v99
    %239 = vmatprep.subr.mxu0 %v104
    %240 = vmatpush1.msra.mxu0 %v103
    %241 = vmatprep.subr.mxu0 %v108
    %242 = vmatpush1.msra.mxu0 %v107
    %243 = vmatprep.subr.mxu0 %v112
    %244 = vmatpush1.msra.mxu0 %v111
    %245 = vmatprep.subr.mxu0 %v116
    %246 = vmatpush1.msra.mxu0 %v115
    %247 = vmatprep.subr.mxu0 %v120
    %248 = vmatpush1.msra.mxu0 %v119
    %249 = vmatprep.subr.mxu0 %v124
    %250 = vmatpush1.msra.mxu0 %v123
    %251 = vmatprep.subr.mxu0 %v128
    %252 = vmatpush1.msra.mxu0 %v127
    %253 = vmatprep.subr.mxu0 0.0
    %254 = vmatpush1.msra.mxu0 0.0
    %255 = vmatprep.subr.mxu0 0.0
    %256 = vmatpush1.msra.mxu0 0.0
    %257 = vmatprep.subr.mxu0 0.0
    %258 = vmatpush1.msra.mxu0 0.0
    %259 = vmatprep.subr.mxu0 0.0
    %260 = vmatpush1.msra.mxu0 0.0
    %261 = vmatprep.subr.mxu0 0.0
    %262 = vmatpush1.msra.mxu0 0.0
    %263 = vmatprep.subr.mxu0 0.0
    %264 = vmatpush1.msra.mxu0 0.0
    %265 = vmatprep.subr.mxu0 0.0
    %266 = vmatpush1.msra.mxu0 0.0
    %267 = vmatprep.subr.mxu0 0.0
    %268 = vmatpush1.msra.mxu0 0.0
    %269 = vmatprep.subr.mxu0 0.0
    %270 = vmatpush1.msra.mxu0 0.0
    %271 = vmatprep.subr.mxu0 0.0
    %272 = vmatpush1.msra.mxu0 0.0
    %273 = vmatprep.subr.mxu0 0.0
    %274 = vmatpush1.msra.mxu0 0.0
    %275 = vmatprep.subr.mxu0 0.0
    %276 = vmatpush1.msra.mxu0 0.0
    %277 = vmatprep.subr.mxu0 0.0
    %278 = vmatpush1.msra.mxu0 0.0
    %279 = vmatprep.subr.mxu0 0.0
    %280 = vmatpush1.msra.mxu0 0.0
    %281 = vmatprep.subr.mxu0 0.0
    %282 = vmatpush1.msra.mxu0 0.0
    %283 = vmatprep.subr.mxu0 0.0
    %284 = vmatpush1.msra.mxu0 0.0
    %285 = vmatprep.mubr.f32.mxu0 0.0
    %286 = vmatmul.mubr.f32.gmra.mrb[0].mxu0 %v64
    %v287 = vpop.f32.mrb[0].mxu0
    %v288 = vadd.f32 %v141, %v287
    %v289 = vpop.f32.mrb[0].mxu0
    %v290 = vadd.f32 %v145, %v289
    %291 = vdwg.mxu0
    %v292 = vmul.f32 %v217, 0.5
    %v293 = vtanh.pop %v292
    %v294 = vadd.f32 %v293, 1.0
    %v295 = vmul.f32 %v294, 0.5
    %v296 = vmul.f32 %v219, 0.5
    %v297 = vtanh.pop %v296
    %v298 = vadd.f32 %v297, 1.0
    %v299 = vmul.f32 %v298, 0.5
    %v300 = vmul.f32 %v295, %v290
    %v301 = vadd.f32 %v288, %v300
    %v302 = vtanh.pop %v301
    %v303 = vsub.f32 1.0, %v299
    %v304 = vmul.f32 %v303, %v302
    %v305 = vmul.f32 %v299, %v52
    %v306 = vadd.f32 %v304, %v305
    %v307 = vadd.f32 %v306, %v54
    %s308 = scalar_lea.vmem [#allocation2], 512
    %v309 = vld [vmem:[%s308] sm:$0xff]
    %v310 = vld [vmem:[%s308 + $0x8] sm:$0xff]
    %v311 = vld [vmem:[%s308 + $0x10] sm:$0xff]
    %v312 = vld [vmem:[%s308 + $0x18] sm:$0xff]
    %v313 = vld [vmem:[%s308 + $0x20] sm:$0xff]
    %v314 = vld [vmem:[%s308 + $0x28] sm:$0xff]
    %v315 = vld [vmem:[%s308 + $0x30] sm:$0xff]
    %v316 = vld [vmem:[%s308 + $0x38] sm:$0xff]
    %v317 = vld [vmem:[%s308 + $0x40] sm:$0xff]
    %v318 = vld [vmem:[%s308 + $0x48] sm:$0xff]
    %v319 = vld [vmem:[%s308 + $0x50] sm:$0xff]
    %v320 = vld [vmem:[%s308 + $0x58] sm:$0xff]
    %v321 = vld [vmem:[%s308 + $0x60] sm:$0xff]
    %v322 = vld [vmem:[%s308 + $0x68] sm:$0xff]
    %v323 = vld [vmem:[%s308 + $0x70] sm:$0xff]
    %v324 = vld [vmem:[%s308 + $0x78] sm:$0xff]
    %v325 = vld [vmem:[%s308 + $0x80] sm:$0xff]
    %v326 = vld [vmem:[%s308 + $0x88] sm:$0xff]
    %v327 = vld [vmem:[%s308 + $0x90] sm:$0xff]
    %v328 = vld [vmem:[%s308 + $0x98] sm:$0xff]
    %v329 = vld [vmem:[%s308 + $0xa0] sm:$0xff]
    %v330 = vld [vmem:[%s308 + $0xa8] sm:$0xff]
    %v331 = vld [vmem:[%s308 + $0xb0] sm:$0xff]
    %v332 = vld [vmem:[%s308 + $0xb8] sm:$0xff]
    %v333 = vld [vmem:[%s308 + $0xc0] sm:$0xff]
    %v334 = vld [vmem:[%s308 + $0xc8] sm:$0xff]
    %v335 = vld [vmem:[%s308 + $0xd0] sm:$0xff]
    %v336 = vld [vmem:[%s308 + $0xd8] sm:$0xff]
    %v337 = vld [vmem:[%s308 + $0xe0] sm:$0xff]
    %v338 = vld [vmem:[%s308 + $0xe8] sm:$0xff]
    %v339 = vld [vmem:[%s308 + $0xf0] sm:$0xff]
    %v340 = vld [vmem:[%s308 + $0xf8] sm:$0xff]
    %v341 = vld [vmem:[%s308 + $0x100] sm:$0xff]
    %v342 = vld [vmem:[%s308 + $0x108] sm:$0xff]
    %v343 = vld [vmem:[%s308 + $0x110] sm:$0xff]
    %v344 = vld [vmem:[%s308 + $0x118] sm:$0xff]
    %v345 = vld [vmem:[%s308 + $0x120] sm:$0xff]
    %v346 = vld [vmem:[%s308 + $0x128] sm:$0xff]
    %v347 = vld [vmem:[%s308 + $0x130] sm:$0xff]
    %v348 = vld [vmem:[%s308 + $0x138] sm:$0xff]
    %v349 = vld [vmem:[%s308 + $0x140] sm:$0xff]
    %v350 = vld [vmem:[%s308 + $0x148] sm:$0xff]
    %v351 = vld [vmem:[%s308 + $0x150] sm:$0xff]
    %v352 = vld [vmem:[%s308 + $0x158] sm:$0xff]
    %v353 = vld [vmem:[%s308 + $0x160] sm:$0xff]
    %v354 = vld [vmem:[%s308 + $0x168] sm:$0xff]
    %v355 = vld [vmem:[%s308 + $0x170] sm:$0xff]
    %v356 = vld [vmem:[%s308 + $0x178] sm:$0xff]
    %v357 = vld [vmem:[%s308 + $0x180] sm:$0xff]
    %v358 = vld [vmem:[%s308 + $0x188] sm:$0xff]
    %v359 = vld [vmem:[%s308 + $0x190] sm:$0xff]
    %v360 = vld [vmem:[%s308 + $0x198] sm:$0xff]
    %v361 = vld [vmem:[%s308 + $0x1a0] sm:$0xff]
    %v362 = vld [vmem:[%s308 + $0x1a8] sm:$0xff]
    %v363 = vld [vmem:[%s308 + $0x1b0] sm:$0xff]
    %v364 = vld [vmem:[%s308 + $0x1b8] sm:$0xff]
    %v365 = vld [vmem:[%s308 + $0x1c0] sm:$0xff]
    %v366 = vld [vmem:[%s308 + $0x1c8] sm:$0xff]
    %v367 = vld [vmem:[%s308 + $0x1d0] sm:$0xff]
    %v368 = vld [vmem:[%s308 + $0x1d8] sm:$0xff]
    %v369 = vld [vmem:[%s308 + $0x1e0] sm:$0xff]
    %v370 = vld [vmem:[%s308 + $0x1e8] sm:$0xff]
    %v371 = vld [vmem:[%s308 + $0x1f0] sm:$0xff]
    %v372 = vld [vmem:[%s308 + $0x1f8] sm:$0xff]
    %v374 = vlaneseq
    %v375 = vshrl.u32 %v374, 7
    %v376 = vsub.s32 0, %v375
    %v377 = vrot.slane %v60, %v376
    %v378 = vlaneseq
    %v379 = vshrl.u32 %v378, 7
    %v380 = vsub.s32 1, %v379
    %v381 = vrot.slane %v60, %v380
    %v382 = vlaneseq
    %v383 = vshrl.u32 %v382, 7
    %v384 = vsub.s32 2, %v383
    %v385 = vrot.slane %v60, %v384
    %v386 = vlaneseq
    %v387 = vshrl.u32 %v386, 7
    %v388 = vsub.s32 3, %v387
    %v389 = vrot.slane %v60, %v388
    %394 = vmatprep.subr.mxu0 %v310
    %395 = vmatpush1.msra.mxu0 %v309
    %396 = vmatprep.subr.mxu0 %v314
    %397 = vmatpush1.msra.mxu0 %v313
    %398 = vmatprep.subr.mxu0 %v318
    %399 = vmatpush1.msra.mxu0 %v317
    %400 = vmatprep.subr.mxu0 %v322
    %401 = vmatpush1.msra.mxu0 %v321
    %402 = vmatprep.subr.mxu0 %v326
    %403 = vmatpush1.msra.mxu0 %v325
    %404 = vmatprep.subr.mxu0 %v330
    %405 = vmatpush1.msra.mxu0 %v329
    %406 = vmatprep.subr.mxu0 %v334
    %407 = vmatpush1.msra.mxu0 %v333
    %408 = vmatprep.subr.mxu0 %v338
    %409 = vmatpush1.msra.mxu0 %v337
    %410 = vmatprep.subr.mxu0 %v342
    %411 = vmatpush1.msra.mxu0 %v341
    %412 = vmatprep.subr.mxu0 %v346
    %413 = vmatpush1.msra.mxu0 %v345
    %414 = vmatprep.subr.mxu0 %v350
    %415 = vmatpush1.msra.mxu0 %v349
    %416 = vmatprep.subr.mxu0 %v354
    %417 = vmatpush1.msra.mxu0 %v353
    %418 = vmatprep.subr.mxu0 %v358
    %419 = vmatpush1.msra.mxu0 %v357
    %420 = vmatprep.subr.mxu0 %v362
    %421 = vmatpush1.msra.mxu0 %v361
    %422 = vmatprep.subr.mxu0 %v366
    %423 = vmatpush1.msra.mxu0 %v365
    %424 = vmatprep.subr.mxu0 %v370
    %425 = vmatpush1.msra.mxu0 %v369
    %426 = vmatprep.subr.mxu0 0.0
    %427 = vmatpush1.msra.mxu0 0.0
    %428 = vmatprep.subr.mxu0 0.0
    %429 = vmatpush1.msra.mxu0 0.0
    %430 = vmatprep.subr.mxu0 0.0
    %431 = vmatpush1.msra.mxu0 0.0
    %432 = vmatprep.subr.mxu0 0.0
    %433 = vmatpush1.msra.mxu0 0.0
    %434 = vmatprep.subr.mxu0 0.0
    %435 = vmatpush1.msra.mxu0 0.0
    %436 = vmatprep.subr.mxu0 0.0
    %437 = vmatpush1.msra.mxu0 0.0
    %438 = vmatprep.subr.mxu0 0.0
    %439 = vmatpush1.msra.mxu0 0.0
    %440 = vmatprep.subr.mxu0 0.0
    %441 = vmatpush1.msra.mxu0 0.0
    %442 = vmatprep.subr.mxu0 0.0
    %443 = vmatpush1.msra.mxu0 0.0
    %444 = vmatprep.subr.mxu0 0.0
    %445 = vmatpush1.msra.mxu0 0.0
    %446 = vmatprep.subr.mxu0 0.0
    %447 = vmatpush1.msra.mxu0 0.0
    %448 = vmatprep.subr.mxu0 0.0
    %449 = vmatpush1.msra.mxu0 0.0
    %450 = vmatprep.subr.mxu0 0.0
    %451 = vmatpush1.msra.mxu0 0.0
    %452 = vmatprep.subr.mxu0 0.0
    %453 = vmatpush1.msra.mxu0 0.0
    %454 = vmatprep.subr.mxu0 0.0
    %455 = vmatpush1.msra.mxu0 0.0
    %456 = vmatprep.subr.mxu0 0.0
    %457 = vmatpush1.msra.mxu0 0.0
    %458 = vmatprep.mubr.f32.mxu0 0.0
    %459 = vmatmul.mubr.f32.gmra.mrb[0].mxu0 %v307
    %v460 = vpop.f32.mrb[0].mxu0
    %v461 = vadd.f32 %v377, %v460
    %v462 = vpop.f32.mrb[0].mxu0
    %v463 = vadd.f32 %v381, %v462
    %464 = vdwg.mxu0
    %465 = vmatprep.subr.mxu0 %v312
    %466 = vmatpush1.msra.mxu0 %v311
    %467 = vmatprep.subr.mxu0 %v316
    %468 = vmatpush1.msra.mxu0 %v315
    %469 = vmatprep.subr.mxu0 %v320
    %470 = vmatpush1.msra.mxu0 %v319
    %471 = vmatprep.subr.mxu0 %v324
    %472 = vmatpush1.msra.mxu0 %v323
    %473 = vmatprep.subr.mxu0 %v328
    %474 = vmatpush1.msra.mxu0 %v327
    %475 = vmatprep.subr.mxu0 %v332
    %476 = vmatpush1.msra.mxu0 %v331
    %477 = vmatprep.subr.mxu0 %v336
    %478 = vmatpush1.msra.mxu0 %v335
    %479 = vmatprep.subr.mxu0 %v340
    %480 = vmatpush1.msra.mxu0 %v339
    %481 = vmatprep.subr.mxu0 %v344
    %482 = vmatpush1.msra.mxu0 %v343
    %483 = vmatprep.subr.mxu0 %v348
    %484 = vmatpush1.msra.mxu0 %v347
    %485 = vmatprep.subr.mxu0 %v352
    %486 = vmatpush1.msra.mxu0 %v351
    %487 = vmatprep.subr.mxu0 %v356
    %488 = vmatpush1.msra.mxu0 %v355
    %489 = vmatprep.subr.mxu0 %v360
    %490 = vmatpush1.msra.mxu0 %v359
    %491 = vmatprep.subr.mxu0 %v364
    %492 = vmatpush1.msra.mxu0 %v363
    %493 = vmatprep.subr.mxu0 %v368
    %494 = vmatpush1.msra.mxu0 %v367
    %495 = vmatprep.subr.mxu0 %v372
    %496 = vmatpush1.msra.mxu0 %v371
    %497 = vmatprep.subr.mxu0 0.0
    %498 = vmatpush1.msra.mxu0 0.0
    %499 = vmatprep.subr.mxu0 0.0
    %500 = vmatpush1.msra.mxu0 0.0
    %501 = vmatprep.subr.mxu0 0.0
    %502 = vmatpush1.msra.mxu0 0.0
    %503 = vmatprep.subr.mxu0 0.0
    %504 = vmatpush1.msra.mxu0 0.0
    %505 = vmatprep.subr.mxu0 0.0
    %506 = vmatpush1.msra.mxu0 0.0
    %507 = vmatprep.subr.mxu0 0.0
    %508 = vmatpush1.msra.mxu0 0.0
    %509 = vmatprep.subr.mxu0 0.0
    %510 = vmatpush1.msra.mxu0 0.0
    %511 = vmatprep.subr.mxu0 0.0
    %512 = vmatpush1.msra.mxu0 0.0
    %513 = vmatprep.subr.mxu0 0.0
    %514 = vmatpush1.msra.mxu0 0.0
    %515 = vmatprep.subr.mxu0 0.0
    %516 = vmatpush1.msra.mxu0 0.0
    %517 = vmatprep.subr.mxu0 0.0
    %518 = vmatpush1.msra.mxu0 0.0
    %519 = vmatprep.subr.mxu0 0.0
    %520 = vmatpush1.msra.mxu0 0.0
    %521 = vmatprep.subr.mxu0 0.0
    %522 = vmatpush1.msra.mxu0 0.0
    %523 = vmatprep.subr.mxu0 0.0
    %524 = vmatpush1.msra.mxu0 0.0
    %525 = vmatprep.subr.mxu0 0.0
    %526 = vmatpush1.msra.mxu0 0.0
    %527 = vmatprep.subr.mxu0 0.0
    %528 = vmatpush1.msra.mxu0 0.0
    %529 = vmatprep.mubr.f32.mxu0 0.0
    %530 = vmatmul.mubr.f32.gmra.mrb[0].mxu0 %v307
    %v531 = vpop.f32.mrb[0].mxu0
    %v532 = vadd.f32 %v385, %v531
    %v533 = vpop.f32.mrb[0].mxu0
    %v534 = vadd.f32 %v389, %v533
    %535 = vdwg.mxu0
    %v536 = vmul.f32 %v461, 0.5
    %v537 = vtanh.pop %v536
    %v538 = vadd.f32 %v537, 1.0
    %v539 = vmul.f32 %v538, 0.5
    %v540 = vmul.f32 %v463, 0.5
    %v541 = vtanh.pop %v540
    %v542 = vadd.f32 %v541, 1.0
    %v543 = vmul.f32 %v542, 0.5
    %v544 = vmul.f32 %v539, %v534
    %v545 = vadd.f32 %v532, %v544
    %v546 = vtanh.pop %v545
    %v547 = vsub.f32 1.0, %v543
    %v548 = vmul.f32 %v547, %v546
    %v549 = vmul.f32 %v543, %v54
    %v550 = vadd.f32 %v548, %v549
    %v551 = vld [vmem:[#allocation4] sm:$0xff]
    %v552 = vld [vmem:[#allocation4 + $0x8] sm:$0xff]
    %v553 = vld [vmem:[#allocation4 + $0x10] sm:$0xff]
    %v554 = vld [vmem:[#allocation4 + $0x18] sm:$0xff]
    %v555 = vld [vmem:[#allocation4 + $0x20] sm:$0xff]
    %v556 = vld [vmem:[#allocation4 + $0x28] sm:$0xff]
    %v557 = vld [vmem:[#allocation4 + $0x30] sm:$0xff]
    %v558 = vld [vmem:[#allocation4 + $0x38] sm:$0xff]
    %v559 = vld [vmem:[#allocation4 + $0x40] sm:$0xff]
    %v560 = vld [vmem:[#allocation4 + $0x48] sm:$0xff]
    %v561 = vld [vmem:[#allocation4 + $0x50] sm:$0xff]
    %v562 = vld [vmem:[#allocation4 + $0x58] sm:$0xff]
    %v563 = vld [vmem:[#allocation4 + $0x60] sm:$0xff]
    %v564 = vld [vmem:[#allocation4 + $0x68] sm:$0xff]
    %v565 = vld [vmem:[#allocation4 + $0x70] sm:$0xff]
    %v566 = vld [vmem:[#allocation4 + $0x78] sm:$0xff]
    %567 = vmatprep.subr.mxu0 0.0
    %568 = vmatpush1.msra.mxu0 %v551
    %569 = vmatprep.subr.mxu0 0.0
    %570 = vmatpush1.msra.mxu0 %v552
    %571 = vmatprep.subr.mxu0 0.0
    %572 = vmatpush1.msra.mxu0 %v553
    %573 = vmatprep.subr.mxu0 0.0
    %574 = vmatpush1.msra.mxu0 %v554
    %575 = vmatprep.subr.mxu0 0.0
    %576 = vmatpush1.msra.mxu0 %v555
    %577 = vmatprep.subr.mxu0 0.0
    %578 = vmatpush1.msra.mxu0 %v556
    %579 = vmatprep.subr.mxu0 0.0
    %580 = vmatpush1.msra.mxu0 %v557
    %581 = vmatprep.subr.mxu0 0.0
    %582 = vmatpush1.msra.mxu0 %v558
    %583 = vmatprep.subr.mxu0 0.0
    %584 = vmatpush1.msra.mxu0 %v559
    %585 = vmatprep.subr.mxu0 0.0
    %586 = vmatpush1.msra.mxu0 %v560
    %587 = vmatprep.subr.mxu0 0.0
    %588 = vmatpush1.msra.mxu0 %v561
    %589 = vmatprep.subr.mxu0 0.0
    %590 = vmatpush1.msra.mxu0 %v562
    %591 = vmatprep.subr.mxu0 0.0
    %592 = vmatpush1.msra.mxu0 %v563
    %593 = vmatprep.subr.mxu0 0.0
    %594 = vmatpush1.msra.mxu0 %v564
    %595 = vmatprep.subr.mxu0 0.0
    %596 = vmatpush1.msra.mxu0 %v565
    %597 = vmatprep.subr.mxu0 0.0
    %598 = vmatpush1.msra.mxu0 %v566
    %599 = vmatprep.subr.mxu0 0.0
    %600 = vmatpush1.msra.mxu0 0.0
    %601 = vmatprep.subr.mxu0 0.0
    %602 = vmatpush1.msra.mxu0 0.0
    %603 = vmatprep.subr.mxu0 0.0
    %604 = vmatpush1.msra.mxu0 0.0
    %605 = vmatprep.subr.mxu0 0.0
    %606 = vmatpush1.msra.mxu0 0.0
    %607 = vmatprep.subr.mxu0 0.0
    %608 = vmatpush1.msra.mxu0 0.0
    %609 = vmatprep.subr.mxu0 0.0
    %610 = vmatpush1.msra.mxu0 0.0
    %611 = vmatprep.subr.mxu0 0.0
    %612 = vmatpush1.msra.mxu0 0.0
    %613 = vmatprep.subr.mxu0 0.0
    %614 = vmatpush1.msra.mxu0 0.0
    %615 = vmatprep.subr.mxu0 0.0
    %616 = vmatpush1.msra.mxu0 0.0
    %617 = vmatprep.subr.mxu0 0.0
    %618 = vmatpush1.msra.mxu0 0.0
    %619 = vmatprep.subr.mxu0 0.0
    %620 = vmatpush1.msra.mxu0 0.0
    %621 = vmatprep.subr.mxu0 0.0
    %622 = vmatpush1.msra.mxu0 0.0
    %623 = vmatprep.subr.mxu0 0.0
    %624 = vmatpush1.msra.mxu0 0.0
    %625 = vmatprep.subr.mxu0 0.0
    %626 = vmatpush1.msra.mxu0 0.0
    %627 = vmatprep.subr.mxu0 0.0
    %628 = vmatpush1.msra.mxu0 0.0
    %629 = vmatprep.subr.mxu0 0.0
    %630 = vmatpush1.msra.mxu0 0.0
    %631 = vmatprep.mubr.f32.mxu0 0.0
    %632 = vmatmul.mubr.f32.gmra.mrb[0].mxu0 %v550
    %v633 = vpop.f32.mrb[0].mxu0
    %v634 = vadd.f32 %v61, %v633
    %v635 = vpop.f32.mrb[0].mxu0
    %636 = vdwg.mxu0
    %vm637 = vcmask 1040384
    %v638 = vsel %vm637, %v634, -inf
    %639 = vmax.xlane.f32.xlu0 %v638
    %v640 = vpop.xlane.xlu0 %639
    %vm641 = vcmp.ge.f32.partialorder %v634, %v640
    %v642 = vsel %vm641, %v51, 128
    %v643 = vsel %vm637, %v642, 2147483647
    %v644 = vand.u32 %v643, 65535
    %v645 = vshra.s32 %v643, 16
    %v646 = vcvt.s32.f32 %v644
    %v647 = vcvt.s32.f32 %v645
    %648 = vmin.xlane.f32.xlu0 %v647
    %v649 = vpop.xlane.xlu0 %648
    %vm650 = vcmp.eq.f32.partialorder %v647, %v649
    %v651 = vsel %vm650, %v646, inf
    %652 = vmin.xlane.f32.xlu0 %v651
    %v653 = vpop.xlane.xlu0 %652
    %v654 = vcvt.f32.s32 %v653
    %v655 = vcvt.f32.s32 %v649
    %v656 = vshll.u32 %v655, 16
    %v657 = vadd.s32 %v656, %v654
    %vm658 = vcmp.eq.s32.totalorder %v51, %v657
    %v659 = vsel %vm658, 1, 0
    %v660 = vcvt.s32.f32 %v659
    %vm661 = vcmp.eq.s32.totalorder %v51, 0
    %v662 = vsel %vm661, %v657, 4294967295
    %vm663 = vcmp.eq.s32.totalorder %v657, 2
    %vm664 = vcmp.eq.s32.totalorder %v657, 0
    %vm665 = vmor %vm663, %vm664
    %vm666 = vmxor %vm665, 1
    %v667 = vadd.f32 %v660, %v306
    %668 = vmatprep.subr.mxu0 %v66
    %669 = vmatpush1.msra.mxu0 %v65
    %670 = vmatprep.subr.mxu0 %v70
    %671 = vmatpush1.msra.mxu0 %v69
    %672 = vmatprep.subr.mxu0 %v74
    %673 = vmatpush1.msra.mxu0 %v73
    %674 = vmatprep.subr.mxu0 %v78
    %675 = vmatpush1.msra.mxu0 %v77
    %676 = vmatprep.subr.mxu0 %v82
    %677 = vmatpush1.msra.mxu0 %v81
    %678 = vmatprep.subr.mxu0 %v86
    %679 = vmatpush1.msra.mxu0 %v85
    %680 = vmatprep.subr.mxu0 %v90
    %681 = vmatpush1.msra.mxu0 %v89
    %682 = vmatprep.subr.mxu0 %v94
    %683 = vmatpush1.msra.mxu0 %v93
    %684 = vmatprep.subr.mxu0 %v98
    %685 = vmatpush1.msra.mxu0 %v97
    %686 = vmatprep.subr.mxu0 %v102
    %687 = vmatpush1.msra.mxu0 %v101
    %688 = vmatprep.subr.mxu0 %v106
    %689 = vmatpush1.msra.mxu0 %v105
    %690 = vmatprep.subr.mxu0 %v110
    %691 = vmatpush1.msra.mxu0 %v109
    %692 = vmatprep.subr.mxu0 %v114
    %693 = vmatpush1.msra.mxu0 %v113
    %694 = vmatprep.subr.mxu0 %v118
    %695 = vmatpush1.msra.mxu0 %v117
    %696 = vmatprep.subr.mxu0 %v122
    %697 = vmatpush1.msra.mxu0 %v121
    %698 = vmatprep.subr.mxu0 %v126
    %699 = vmatpush1.msra.mxu0 %v125
    %700 = vmatprep.subr.mxu0 0.0
    %701 = vmatpush1.msra.mxu0 0.0
    %702 = vmatprep.subr.mxu0 0.0
    %703 = vmatpush1.msra.mxu0 0.0
    %704 = vmatprep.subr.mxu0 0.0
    %705 = vmatpush1.msra.mxu0 0.0
    %706 = vmatprep.subr.mxu0 0.0
    %707 = vmatpush1.msra.mxu0 0.0
    %708 = vmatprep.subr.mxu0 0.0
    %709 = vmatpush1.msra.mxu0 0.0
    %710 = vmatprep.subr.mxu0 0.0
    %711 = vmatpush1.msra.mxu0 0.0
    %712 = vmatprep.subr.mxu0 0.0
    %713 = vmatpush1.msra.mxu0 0.0
    %714 = vmatprep.subr.mxu0 0.0
    %715 = vmatpush1.msra.mxu0 0.0
    %716 = vmatprep.subr.mxu0 0.0
    %717 = vmatpush1.msra.mxu0 0.0
    %718 = vmatprep.subr.mxu0 0.0
    %719 = vmatpush1.msra.mxu0 0.0
    %720 = vmatprep.subr.mxu0 0.0
    %721 = vmatpush1.msra.mxu0 0.0
    %722 = vmatprep.subr.mxu0 0.0
    %723 = vmatpush1.msra.mxu0 0.0
    %724 = vmatprep.subr.mxu0 0.0
    %725 = vmatpush1.msra.mxu0 0.0
    %726 = vmatprep.subr.mxu0 0.0
    %727 = vmatpush1.msra.mxu0 0.0
    %728 = vmatprep.subr.mxu0 0.0
    %729 = vmatpush1.msra.mxu0 0.0
    %730 = vmatprep.subr.mxu0 0.0
    %731 = vmatpush1.msra.mxu0 0.0
    %732 = vmatprep.mubr.f32.mxu0 0.0
    %733 = vmatmul.mubr.f32.gmra.mrb[0].mxu0 %v667
    %v734 = vpop.f32.mrb[0].mxu0
    %v735 = vadd.f32 %v133, %v734
    %v736 = vpop.f32.mrb[0].mxu0
    %v737 = vadd.f32 %v137, %v736
    %738 = vdwg.mxu0
    %739 = vmatprep.subr.mxu0 %v68
    %740 = vmatpush1.msra.mxu0 %v67
    %741 = vmatprep.subr.mxu0 %v72
    %742 = vmatpush1.msra.mxu0 %v71
    %743 = vmatprep.subr.mxu0 %v76
    %744 = vmatpush1.msra.mxu0 %v75
    %745 = vmatprep.subr.mxu0 %v80
    %746 = vmatpush1.msra.mxu0 %v79
    %747 = vmatprep.subr.mxu0 %v84
    %748 = vmatpush1.msra.mxu0 %v83
    %749 = vmatprep.subr.mxu0 %v88
    %750 = vmatpush1.msra.mxu0 %v87
    %751 = vmatprep.subr.mxu0 %v92
    %752 = vmatpush1.msra.mxu0 %v91
    %753 = vmatprep.subr.mxu0 %v96
    %754 = vmatpush1.msra.mxu0 %v95
    %755 = vmatprep.subr.mxu0 %v100
    %756 = vmatpush1.msra.mxu0 %v99
    %757 = vmatprep.subr.mxu0 %v104
    %758 = vmatpush1.msra.mxu0 %v103
    %759 = vmatprep.subr.mxu0 %v108
    %760 = vmatpush1.msra.mxu0 %v107
    %761 = vmatprep.subr.mxu0 %v112
    %762 = vmatpush1.msra.mxu0 %v111
    %763 = vmatprep.subr.mxu0 %v116
    %764 = vmatpush1.msra.mxu0 %v115
    %765 = vmatprep.subr.mxu0 %v120
    %766 = vmatpush1.msra.mxu0 %v119
    %767 = vmatprep.subr.mxu0 %v124
    %768 = vmatpush1.msra.mxu0 %v123
    %769 = vmatprep.subr.mxu0 %v128
    %770 = vmatpush1.msra.mxu0 %v127
    %771 = vmatprep.subr.mxu0 0.0
    %772 = vmatpush1.msra.mxu0 0.0
    %773 = vmatprep.subr.mxu0 0.0
    %774 = vmatpush1.msra.mxu0 0.0
    %775 = vmatprep.subr.mxu0 0.0
    %776 = vmatpush1.msra.mxu0 0.0
    %777 = vmatprep.subr.mxu0 0.0
    %778 = vmatpush1.msra.mxu0 0.0
    %779 = vmatprep.subr.mxu0 0.0
    %780 = vmatpush1.msra.mxu0 0.0
    %781 = vmatprep.subr.mxu0 0.0
    %782 = vmatpush1.msra.mxu0 0.0
    %783 = vmatprep.subr.mxu0 0.0
    %784 = vmatpush1.msra.mxu0 0.0
    %785 = vmatprep.subr.mxu0 0.0
    %786 = vmatpush1.msra.mxu0 0.0
    %787 = vmatprep.subr.mxu0 0.0
    %788 = vmatpush1.msra.mxu0 0.0
    %789 = vmatprep.subr.mxu0 0.0
    %790 = vmatpush1.msra.mxu0 0.0
    %791 = vmatprep.subr.mxu0 0.0
    %792 = vmatpush1.msra.mxu0 0.0
    %793 = vmatprep.subr.mxu0 0.0
    %794 = vmatpush1.msra.mxu0 0.0
    %795 = vmatprep.subr.mxu0 0.0
    %796 = vmatpush1.msra.mxu0 0.0
    %797 = vmatprep.subr.mxu0 0.0
    %798 = vmatpush1.msra.mxu0 0.0
    %799 = vmatprep.subr.mxu0 0.0
    %800 = vmatpush1.msra.mxu0 0.0
    %801 = vmatprep.subr.mxu0 0.0
    %802 = vmatpush1.msra.mxu0 0.0
    %803 = vmatprep.mubr.f32.mxu0 0.0
    %804 = vmatmul.mubr.f32.gmra.mrb[0].mxu0 %v667
    %v805 = vpop.f32.mrb[0].mxu0
    %v806 = vadd.f32 %v141, %v805
    %v807 = vpop.f32.mrb[0].mxu0
    %v808 = vadd.f32 %v145, %v807
    %809 = vdwg.mxu0
    %v810 = vmul.f32 %v735, 0.5
    %v811 = vtanh.pop %v810
    %v812 = vadd.f32 %v811, 1.0
    %v813 = vmul.f32 %v812, 0.5
    %v814 = vmul.f32 %v737, 0.5
    %v815 = vtanh.pop %v814
    %v816 = vadd.f32 %v815, 1.0
    %v817 = vmul.f32 %v816, 0.5
    %v818 = vmul.f32 %v813, %v808
    %v819 = vadd.f32 %v806, %v818
    %v820 = vtanh.pop %v819
    %v821 = vsub.f32 1.0, %v817
    %v822 = vmul.f32 %v821, %v820
    %v823 = vmul.f32 %v817, %v306
    %v824 = vadd.f32 %v822, %v823
    %v825 = vsel %vm666, 1, 0
    %vm826 = vcmp.eq.s32.totalorder %v825, 1
    %v827 = vsel %vm826, %v824, %v306
    %v828 = vadd.f32 %v824, %v550
    %829 = vmatprep.subr.mxu0 %v310
    %830 = vmatpush1.msra.mxu0 %v309
    %831 = vmatprep.subr.mxu0 %v314
    %832 = vmatpush1.msra.mxu0 %v313
    %833 = vmatprep.subr.mxu0 %v318
    %834 = vmatpush1.msra.mxu0 %v317
    %835 = vmatprep.subr.mxu0 %v322
    %836 = vmatpush1.msra.mxu0 %v321
    %837 = vmatprep.subr.mxu0 %v326
    %838 = vmatpush1.msra.mxu0 %v325
    %839 = vmatprep.subr.mxu0 %v330
    %840 = vmatpush1.msra.mxu0 %v329
    %841 = vmatprep.subr.mxu0 %v334
    %842 = vmatpush1.msra.mxu0 %v333
    %843 = vmatprep.subr.mxu0 %v338
    %844 = vmatpush1.msra.mxu0 %v337
    %845 = vmatprep.subr.mxu0 %v342
    %846 = vmatpush1.msra.mxu0 %v341
    %847 = vmatprep.subr.mxu0 %v346
    %848 = vmatpush1.msra.mxu0 %v345
    %849 = vmatprep.subr.mxu0 %v350
    %850 = vmatpush1.msra.mxu0 %v349
    %851 = vmatprep.subr.mxu0 %v354
    %852 = vmatpush1.msra.mxu0 %v353
    %853 = vmatprep.subr.mxu0 %v358
    %854 = vmatpush1.msra.mxu0 %v357
    %855 = vmatprep.subr.mxu0 %v362
    %856 = vmatpush1.msra.mxu0 %v361
    %857 = vmatprep.subr.mxu0 %v366
    %858 = vmatpush1.msra.mxu0 %v365
    %859 = vmatprep.subr.mxu0 %v370
    %860 = vmatpush1.msra.mxu0 %v369
    %861 = vmatprep.subr.mxu0 0.0
    %862 = vmatpush1.msra.mxu0 0.0
    %863 = vmatprep.subr.mxu0 0.0
    %864 = vmatpush1.msra.mxu0 0.0
    %865 = vmatprep.subr.mxu0 0.0
    %866 = vmatpush1.msra.mxu0 0.0
    %867 = vmatprep.subr.mxu0 0.0
    %868 = vmatpush1.msra.mxu0 0.0
    %869 = vmatprep.subr.mxu0 0.0
    %870 = vmatpush1.msra.mxu0 0.0
    %871 = vmatprep.subr.mxu0 0.0
    %872 = vmatpush1.msra.mxu0 0.0
    %873 = vmatprep.subr.mxu0 0.0
    %874 = vmatpush1.msra.mxu0 0.0
    %875 = vmatprep.subr.mxu0 0.0
    %876 = vmatpush1.msra.mxu0 0.0
    %877 = vmatprep.subr.mxu0 0.0
    %878 = vmatpush1.msra.mxu0 0.0
    %879 = vmatprep.subr.mxu0 0.0
    %880 = vmatpush1.msra.mxu0 0.0
    %881 = vmatprep.subr.mxu0 0.0
    %882 = vmatpush1.msra.mxu0 0.0
    %883 = vmatprep.subr.mxu0 0.0
    %884 = vmatpush1.msra.mxu0 0.0
    %885 = vmatprep.subr.mxu0 0.0
    %886 = vmatpush1.msra.mxu0 0.0
    %887 = vmatprep.subr.mxu0 0.0
    %888 = vmatpush1.msra.mxu0 0.0
    %889 = vmatprep.subr.mxu0 0.0
    %890 = vmatpush1.msra.mxu0 0.0
    %891 = vmatprep.subr.mxu0 0.0
    %892 = vmatpush1.msra.mxu0 0.0
    %893 = vmatprep.mubr.f32.mxu0 0.0
    %894 = vmatmul.mubr.f32.gmra.mrb[0].mxu0 %v828
    %v895 = vpop.f32.mrb[0].mxu0
    %v896 = vadd.f32 %v377, %v895
    %v897 = vpop.f32.mrb[0].mxu0
    %v898 = vadd.f32 %v381, %v897
    %899 = vdwg.mxu0
    %900 = vmatprep.subr.mxu0 %v312
    %901 = vmatpush1.msra.mxu0 %v311
    %902 = vmatprep.subr.mxu0 %v316
    %903 = vmatpush1.msra.mxu0 %v315
    %904 = vmatprep.subr.mxu0 %v320
    %905 = vmatpush1.msra.mxu0 %v319
    %906 = vmatprep.subr.mxu0 %v324
    %907 = vmatpush1.msra.mxu0 %v323
    %908 = vmatprep.subr.mxu0 %v328
    %909 = vmatpush1.msra.mxu0 %v327
    %910 = vmatprep.subr.mxu0 %v332
    %911 = vmatpush1.msra.mxu0 %v331
    %912 = vmatprep.subr.mxu0 %v336
    %913 = vmatpush1.msra.mxu0 %v335
    %914 = vmatprep.subr.mxu0 %v340
    %915 = vmatpush1.msra.mxu0 %v339
    %916 = vmatprep.subr.mxu0 %v344
    %917 = vmatpush1.msra.mxu0 %v343
    %918 = vmatprep.subr.mxu0 %v348
    %919 = vmatpush1.msra.mxu0 %v347
    %920 = vmatprep.subr.mxu0 %v352
    %921 = vmatpush1.msra.mxu0 %v351
    %922 = vmatprep.subr.mxu0 %v356
    %923 = vmatpush1.msra.mxu0 %v355
    %924 = vmatprep.subr.mxu0 %v360
    %925 = vmatpush1.msra.mxu0 %v359
    %926 = vmatprep.subr.mxu0 %v364
    %927 = vmatpush1.msra.mxu0 %v363
    %928 = vmatprep.subr.mxu0 %v368
    %929 = vmatpush1.msra.mxu0 %v367
    %930 = vmatprep.subr.mxu0 %v372
    %931 = vmatpush1.msra.mxu0 %v371
    %932 = vmatprep.subr.mxu0 0.0
    %933 = vmatpush1.msra.mxu0 0.0
    %934 = vmatprep.subr.mxu0 0.0
    %935 = vmatpush1.msra.mxu0 0.0
    %936 = vmatprep.subr.mxu0 0.0
    %937 = vmatpush1.msra.mxu0 0.0
    %938 = vmatprep.subr.mxu0 0.0
    %939 = vmatpush1.msra.mxu0 0.0
    %940 = vmatprep.subr.mxu0 0.0
    %941 = vmatpush1.msra.mxu0 0.0
    %942 = vmatprep.subr.mxu0 0.0
    %943 = vmatpush1.msra.mxu0 0.0
    %944 = vmatprep.subr.mxu0 0.0
    %945 = vmatpush1.msra.mxu0 0.0
    %946 = vmatprep.subr.mxu0 0.0
    %947 = vmatpush1.msra.mxu0 0.0
    %948 = vmatprep.subr.mxu0 0.0
    %949 = vmatpush1.msra.mxu0 0.0
    %950 = vmatprep.subr.mxu0 0.0
    %951 = vmatpush1.msra.mxu0 0.0
    %952 = vmatprep.subr.mxu0 0.0
    %953 = vmatpush1.msra.mxu0 0.0
    %954 = vmatprep.subr.mxu0 0.0
    %955 = vmatpush1.msra.mxu0 0.0
    %956 = vmatprep.subr.mxu0 0.0
    %957 = vmatpush1.msra.mxu0 0.0
    %958 = vmatprep.subr.mxu0 0.0
    %959 = vmatpush1.msra.mxu0 0.0
    %960 = vmatprep.subr.mxu0 0.0
    %961 = vmatpush1.msra.mxu0 0.0
    %962 = vmatprep.subr.mxu0 0.0
    %963 = vmatpush1.msra.mxu0 0.0
    %964 = vmatprep.mubr.f32.mxu0 0.0
    %965 = vmatmul.mubr.f32.gmra.mrb[0].mxu0 %v828
    %v966 = vpop.f32.mrb[0].mxu0
    %v967 = vadd.f32 %v385, %v966
    %v968 = vpop.f32.mrb[0].mxu0
    %v969 = vadd.f32 %v389, %v968
    %970 = vdwg.mxu0
    %v971 = vmul.f32 %v896, 0.5
    %v972 = vtanh.pop %v971
    %v973 = vadd.f32 %v972, 1.0
    %v974 = vmul.f32 %v973, 0.5
    %v975 = vmul.f32 %v898, 0.5
    %v976 = vtanh.pop %v975
    %v977 = vadd.f32 %v976, 1.0
    %v978 = vmul.f32 %v977, 0.5
    %v979 = vmul.f32 %v974, %v969
    %v980 = vadd.f32 %v967, %v979
    %v981 = vtanh.pop %v980
    %v982 = vsub.f32 1.0, %v978
    %v983 = vmul.f32 %v982, %v981
    %v984 = vmul.f32 %v978, %v550
    %v985 = vadd.f32 %v983, %v984
    %v986 = vsel %vm826, %v985, %v550
    %987 = vmatprep.subr.mxu0 0.0
    %988 = vmatpush1.msra.mxu0 %v551
    %989 = vmatprep.subr.mxu0 0.0
    %990 = vmatpush1.msra.mxu0 %v552
    %991 = vmatprep.subr.mxu0 0.0
    %992 = vmatpush1.msra.mxu0 %v553
    %993 = vmatprep.subr.mxu0 0.0
    %994 = vmatpush1.msra.mxu0 %v554
    %995 = vmatprep.subr.mxu0 0.0
    %996 = vmatpush1.msra.mxu0 %v555
    %997 = vmatprep.subr.mxu0 0.0
    %998 = vmatpush1.msra.mxu0 %v556
    %999 = vmatprep.subr.mxu0 0.0
    %1000 = vmatpush1.msra.mxu0 %v557
    %1001 = vmatprep.subr.mxu0 0.0
    %1002 = vmatpush1.msra.mxu0 %v558
    %1003 = vmatprep.subr.mxu0 0.0
    %1004 = vmatpush1.msra.mxu0 %v559
    %1005 = vmatprep.subr.mxu0 0.0
    %1006 = vmatpush1.msra.mxu0 %v560
    %1007 = vmatprep.subr.mxu0 0.0
    %1008 = vmatpush1.msra.mxu0 %v561
    %1009 = vmatprep.subr.mxu0 0.0
    %1010 = vmatpush1.msra.mxu0 %v562
    %1011 = vmatprep.subr.mxu0 0.0
    %1012 = vmatpush1.msra.mxu0 %v563
    %1013 = vmatprep.subr.mxu0 0.0
    %1014 = vmatpush1.msra.mxu0 %v564
    %1015 = vmatprep.subr.mxu0 0.0
    %1016 = vmatpush1.msra.mxu0 %v565
    %1017 = vmatprep.subr.mxu0 0.0
    %1018 = vmatpush1.msra.mxu0 %v566
    %1019 = vmatprep.subr.mxu0 0.0
    %1020 = vmatpush1.msra.mxu0 0.0
    %1021 = vmatprep.subr.mxu0 0.0
    %1022 = vmatpush1.msra.mxu0 0.0
    %1023 = vmatprep.subr.mxu0 0.0
    %1024 = vmatpush1.msra.mxu0 0.0
    %1025 = vmatprep.subr.mxu0 0.0
    %1026 = vmatpush1.msra.mxu0 0.0
    %1027 = vmatprep.subr.mxu0 0.0
    %1028 = vmatpush1.msra.mxu0 0.0
    %1029 = vmatprep.subr.mxu0 0.0
    %1030 = vmatpush1.msra.mxu0 0.0
    %1031 = vmatprep.subr.mxu0 0.0
    %1032 = vmatpush1.msra.mxu0 0.0
    %1033 = vmatprep.subr.mxu0 0.0
    %1034 = vmatpush1.msra.mxu0 0.0
    %1035 = vmatprep.subr.mxu0 0.0
    %1036 = vmatpush1.msra.mxu0 0.0
    %1037 = vmatprep.subr.mxu0 0.0
    %1038 = vmatpush1.msra.mxu0 0.0
    %1039 = vmatprep.subr.mxu0 0.0
    %1040 = vmatpush1.msra.mxu0 0.0
    %1041 = vmatprep.subr.mxu0 0.0
    %1042 = vmatpush1.msra.mxu0 0.0
    %1043 = vmatprep.subr.mxu0 0.0
    %1044 = vmatpush1.msra.mxu0 0.0
    %1045 = vmatprep.subr.mxu0 0.0
    %1046 = vmatpush1.msra.mxu0 0.0
    %1047 = vmatprep.subr.mxu0 0.0
    %1048 = vmatpush1.msra.mxu0 0.0
    %1049 = vmatprep.subr.mxu0 0.0
    %1050 = vmatpush1.msra.mxu0 0.0
    %1051 = vmatprep.mubr.f32.mxu0 0.0
    %1052 = vmatmul.mubr.f32.gmra.mrb[0].mxu0 %v985
    %v1053 = vpop.f32.mrb[0].mxu0
    %v1054 = vadd.f32 %v63, %v1053
    %v1055 = vpop.f32.mrb[0].mxu0
    %1056 = vdwg.mxu0
    %v1057 = vsel %vm637, %v1054, -inf
    %1058 = vmax.xlane.f32.xlu0 %v1057
    %v1059 = vpop.xlane.xlu0 %1058
    %vm1060 = vcmp.ge.f32.partialorder %v1054, %v1059
    %v1061 = vsel %vm1060, %v51, 128
    %v1062 = vsel %vm637, %v1061, 2147483647
    %v1063 = vand.u32 %v1062, 65535
    %v1064 = vshra.s32 %v1062, 16
    %v1065 = vcvt.s32.f32 %v1063
    %v1066 = vcvt.s32.f32 %v1064
    %1067 = vmin.xlane.f32.xlu0 %v1066
    %v1068 = vpop.xlane.xlu0 %1067
    %vm1069 = vcmp.eq.f32.partialorder %v1066, %v1068
    %v1070 = vsel %vm1069, %v1065, inf
    %1071 = vmin.xlane.f32.xlu0 %v1070
    %v1072 = vpop.xlane.xlu0 %1071
    %v1073 = vcvt.f32.s32 %v1072
    %v1074 = vcvt.f32.s32 %v1068
    %v1075 = vshll.u32 %v1074, 16
    %v1076 = vadd.s32 %v1075, %v1073
    %vm1077 = vcmp.eq.s32.totalorder %v51, %v1076
    %v1078 = vsel %vm1077, 1, 0
    %v1079 = vcvt.s32.f32 %v1078
    %v1080 = vsel %vm826, %v1079, %v660
    %vm1081 = vmand %vm55, %vm826
    %v1082 = vsel %vm1081, %v1076, %v662
    %vm1083 = vcmp.eq.s32.totalorder %v1076, 2
    %vm1084 = vcmp.eq.s32.totalorder %v1076, 0
    %vm1085 = vmor %vm1083, %vm1084
    %vm1086 = vmand %vm666, %vm1085
    %vm1087 = vmor %vm665, %vm1086
    %vm1088 = vmxor %vm1087, 1
    %v1089 = vadd.f32 %v1080, %v827
    %1090 = vmatprep.subr.mxu0 %v66
    %1091 = vmatpush1.msra.mxu0 %v65
    %1092 = vmatprep.subr.mxu0 %v70
    %1093 = vmatpush1.msra.mxu0 %v69
    %1094 = vmatprep.subr.mxu0 %v74
    %1095 = vmatpush1.msra.mxu0 %v73
    %1096 = vmatprep.subr.mxu0 %v78
    %1097 = vmatpush1.msra.mxu0 %v77
    %1098 = vmatprep.subr.mxu0 %v82
    %1099 = vmatpush1.msra.mxu0 %v81
    %1100 = vmatprep.subr.mxu0 %v86
    %1101 = vmatpush1.msra.mxu0 %v85
    %1102 = vmatprep.subr.mxu0 %v90
    %1103 = vmatpush1.msra.mxu0 %v89
    %1104 = vmatprep.subr.mxu0 %v94
    %1105 = vmatpush1.msra.mxu0 %v93
    %1106 = vmatprep.subr.mxu0 %v98
    %1107 = vmatpush1.msra.mxu0 %v97
    %1108 = vmatprep.subr.mxu0 %v102
    %1109 = vmatpush1.msra.mxu0 %v101
    %1110 = vmatprep.subr.mxu0 %v106
    %1111 = vmatpush1.msra.mxu0 %v105
    %1112 = vmatprep.subr.mxu0 %v110
    %1113 = vmatpush1.msra.mxu0 %v109
    %1114 = vmatprep.subr.mxu0 %v114
    %1115 = vmatpush1.msra.mxu0 %v113
    %1116 = vmatprep.subr.mxu0 %v118
    %1117 = vmatpush1.msra.mxu0 %v117
    %1118 = vmatprep.subr.mxu0 %v122
    %1119 = vmatpush1.msra.mxu0 %v121
    %1120 = vmatprep.subr.mxu0 %v126
    %1121 = vmatpush1.msra.mxu0 %v125
    %1122 = vmatprep.subr.mxu0 0.0
    %1123 = vmatpush1.msra.mxu0 0.0
    %1124 = vmatprep.subr.mxu0 0.0
    %1125 = vmatpush1.msra.mxu0 0.0
    %1126 = vmatprep.subr.mxu0 0.0
    %1127 = vmatpush1.msra.mxu0 0.0
    %1128 = vmatprep.subr.mxu0 0.0
    %1129 = vmatpush1.msra.mxu0 0.0
    %1130 = vmatprep.subr.mxu0 0.0
    %1131 = vmatpush1.msra.mxu0 0.0
    %1132 = vmatprep.subr.mxu0 0.0
    %1133 = vmatpush1.msra.mxu0 0.0
    %1134 = vmatprep.subr.mxu0 0.0
    %1135 = vmatpush1.msra.mxu0 0.0
    %1136 = vmatprep.subr.mxu0 0.0
    %1137 = vmatpush1.msra.mxu0 0.0
    %1138 = vmatprep.subr.mxu0 0.0
    %1139 = vmatpush1.msra.mxu0 0.0
    %1140 = vmatprep.subr.mxu0 0.0
    %1141 = vmatpush1.msra.mxu0 0.0
    %1142 = vmatprep.subr.mxu0 0.0
    %1143 = vmatpush1.msra.mxu0 0.0
    %1144 = vmatprep.subr.mxu0 0.0
    %1145 = vmatpush1.msra.mxu0 0.0
    %1146 = vmatprep.subr.mxu0 0.0
    %1147 = vmatpush1.msra.mxu0 0.0
    %1148 = vmatprep.subr.mxu0 0.0
    %1149 = vmatpush1.msra.mxu0 0.0
    %1150 = vmatprep.subr.mxu0 0.0
    %1151 = vmatpush1.msra.mxu0 0.0
    %1152 = vmatprep.subr.mxu0 0.0
    %1153 = vmatpush1.msra.mxu0 0.0
    %1154 = vmatprep.mubr.f32.mxu0 0.0
    %1155 = vmatmul.mubr.f32.gmra.mrb[0].mxu0 %v1089
    %v1156 = vpop.f32.mrb[0].mxu0
    %v1157 = vadd.f32 %v133, %v1156
    %v1158 = vpop.f32.mrb[0].mxu0
    %v1159 = vadd.f32 %v137, %v1158
    %1160 = vdwg.mxu0
    %1161 = vmatprep.subr.mxu0 %v68
    %1162 = vmatpush1.msra.mxu0 %v67
    %1163 = vmatprep.subr.mxu0 %v72
    %1164 = vmatpush1.msra.mxu0 %v71
    %1165 = vmatprep.subr.mxu0 %v76
    %1166 = vmatpush1.msra.mxu0 %v75
    %1167 = vmatprep.subr.mxu0 %v80
    %1168 = vmatpush1.msra.mxu0 %v79
    %1169 = vmatprep.subr.mxu0 %v84
    %1170 = vmatpush1.msra.mxu0 %v83
    %1171 = vmatprep.subr.mxu0 %v88
    %1172 = vmatpush1.msra.mxu0 %v87
    %1173 = vmatprep.subr.mxu0 %v92
    %1174 = vmatpush1.msra.mxu0 %v91
    %1175 = vmatprep.subr.mxu0 %v96
    %1176 = vmatpush1.msra.mxu0 %v95
    %1177 = vmatprep.subr.mxu0 %v100
    %1178 = vmatpush1.msra.mxu0 %v99
    %1179 = vmatprep.subr.mxu0 %v104
    %1180 = vmatpush1.msra.mxu0 %v103
    %1181 = vmatprep.subr.mxu0 %v108
    %1182 = vmatpush1.msra.mxu0 %v107
    %1183 = vmatprep.subr.mxu0 %v112
    %1184 = vmatpush1.msra.mxu0 %v111
    %1185 = vmatprep.subr.mxu0 %v116
    %1186 = vmatpush1.msra.mxu0 %v115
    %1187 = vmatprep.subr.mxu0 %v120
    %1188 = vmatpush1.msra.mxu0 %v119
    %1189 = vmatprep.subr.mxu0 %v124
    %1190 = vmatpush1.msra.mxu0 %v123
    %1191 = vmatprep.subr.mxu0 %v128
    %1192 = vmatpush1.msra.mxu0 %v127
    %1193 = vmatprep.subr.mxu0 0.0
    %1194 = vmatpush1.msra.mxu0 0.0
    %1195 = vmatprep.subr.mxu0 0.0
    %1196 = vmatpush1.msra.mxu0 0.0
    %1197 = vmatprep.subr.mxu0 0.0
    %1198 = vmatpush1.msra.mxu0 0.0
    %1199 = vmatprep.subr.mxu0 0.0
    %1200 = vmatpush1.msra.mxu0 0.0
    %1201 = vmatprep.subr.mxu0 0.0
    %1202 = vmatpush1.msra.mxu0 0.0
    %1203 = vmatprep.subr.mxu0 0.0
    %1204 = vmatpush1.msra.mxu0 0.0
    %1205 = vmatprep.subr.mxu0 0.0
    %1206 = vmatpush1.msra.mxu0 0.0
    %1207 = vmatprep.subr.mxu0 0.0
    %1208 = vmatpush1.msra.mxu0 0.0
    %1209 = vmatprep.subr.mxu0 0.0
    %1210 = vmatpush1.msra.mxu0 0.0
    %1211 = vmatprep.subr.mxu0 0.0
    %1212 = vmatpush1.msra.mxu0 0.0
    %1213 = vmatprep.subr.mxu0 0.0
    %1214 = vmatpush1.msra.mxu0 0.0
    %1215 = vmatprep.subr.mxu0 0.0
    %1216 = vmatpush1.msra.mxu0 0.0
    %1217 = vmatprep.subr.mxu0 0.0
    %1218 = vmatpush1.msra.mxu0 0.0
    %1219 = vmatprep.subr.mxu0 0.0
    %1220 = vmatpush1.msra.mxu0 0.0
    %1221 = vmatprep.subr.mxu0 0.0
    %1222 = vmatpush1.msra.mxu0 0.0
    %1223 = vmatprep.subr.mxu0 0.0
    %1224 = vmatpush1.msra.mxu0 0.0
    %1225 = vmatprep.mubr.f32.mxu0 0.0
    %1226 = vmatmul.mubr.f32.gmra.mrb[0].mxu0 %v1089
    %v1227 = vpop.f32.mrb[0].mxu0
    %v1228 = vadd.f32 %v141, %v1227
    %v1229 = vpop.f32.mrb[0].mxu0
    %v1230 = vadd.f32 %v145, %v1229
    %1231 = vdwg.mxu0
    %v1232 = vmul.f32 %v1157, 0.5
    %v1233 = vtanh.pop %v1232
    %v1234 = vadd.f32 %v1233, 1.0
    %v1235 = vmul.f32 %v1234, 0.5
    %v1236 = vmul.f32 %v1159, 0.5
    %v1237 = vtanh.pop %v1236
    %v1238 = vadd.f32 %v1237, 1.0
    %v1239 = vmul.f32 %v1238, 0.5
    %v1240 = vmul.f32 %v1235, %v1230
    %v1241 = vadd.f32 %v1228, %v1240
    %v1242 = vtanh.pop %v1241
    %v1243 = vsub.f32 1.0, %v1239
    %v1244 = vmul.f32 %v1243, %v1242
    %v1245 = vmul.f32 %v1239, %v827
    %v1246 = vadd.f32 %v1244, %v1245
    %v1247 = vsel %vm1088, 1, 0
    %vm1248 = vcmp.eq.s32.totalorder %v1247, 1
    %v1249 = vsel %vm1248, %v1246, %v827
    %v1250 = vadd.f32 %v1246, %v986
    %1251 = vmatprep.subr.mxu0 %v310
    %1252 = vmatpush1.msra.mxu0 %v309
    %1253 = vmatprep.subr.mxu0 %v314
    %1254 = vmatpush1.msra.mxu0 %v313
    %1255 = vmatprep.subr.mxu0 %v318
    %1256 = vmatpush1.msra.mxu0 %v317
    %1257 = vmatprep.subr.mxu0 %v322
    %1258 = vmatpush1.msra.mxu0 %v321
    %1259 = vmatprep.subr.mxu0 %v326
    %1260 = vmatpush1.msra.mxu0 %v325
    %1261 = vmatprep.subr.mxu0 %v330
    %1262 = vmatpush1.msra.mxu0 %v329
    %1263 = vmatprep.subr.mxu0 %v334
    %1264 = vmatpush1.msra.mxu0 %v333
    %1265 = vmatprep.subr.mxu0 %v338
    %1266 = vmatpush1.msra.mxu0 %v337
    %1267 = vmatprep.subr.mxu0 %v342
    %1268 = vmatpush1.msra.mxu0 %v341
    %1269 = vmatprep.subr.mxu0 %v346
    %1270 = vmatpush1.msra.mxu0 %v345
    %1271 = vmatprep.subr.mxu0 %v350
    %1272 = vmatpush1.msra.mxu0 %v349
    %1273 = vmatprep.subr.mxu0 %v354
    %1274 = vmatpush1.msra.mxu0 %v353
    %1275 = vmatprep.subr.mxu0 %v358
    %1276 = vmatpush1.msra.mxu0 %v357
    %1277 = vmatprep.subr.mxu0 %v362
    %1278 = vmatpush1.msra.mxu0 %v361
    %1279 = vmatprep.subr.mxu0 %v366
    %1280 = vmatpush1.msra.mxu0 %v365
    %1281 = vmatprep.subr.mxu0 %v370
    %1282 = vmatpush1.msra.mxu0 %v369
    %1283 = vmatprep.subr.mxu0 0.0
    %1284 = vmatpush1.msra.mxu0 0.0
    %1285 = vmatprep.subr.mxu0 0.0
    %1286 = vmatpush1.msra.mxu0 0.0
    %1287 = vmatprep.subr.mxu0 0.0
    %1288 = vmatpush1.msra.mxu0 0.0
    %1289 = vmatprep.subr.mxu0 0.0
    %1290 = vmatpush1.msra.mxu0 0.0
    %1291 = vmatprep.subr.mxu0 0.0
    %1292 = vmatpush1.msra.mxu0 0.0
    %1293 = vmatprep.subr.mxu0 0.0
    %1294 = vmatpush1.msra.mxu0 0.0
    %1295 = vmatprep.subr.mxu0 0.0
    %1296 = vmatpush1.msra.mxu0 0.0
    %1297 = vmatprep.subr.mxu0 0.0
    %1298 = vmatpush1.msra.mxu0 0.0
    %1299 = vmatprep.subr.mxu0 0.0
    %1300 = vmatpush1.msra.mxu0 0.0
    %1301 = vmatprep.subr.mxu0 0.0
    %1302 = vmatpush1.msra.mxu0 0.0
    %1303 = vmatprep.subr.mxu0 0.0
    %1304 = vmatpush1.msra.mxu0 0.0
    %1305 = vmatprep.subr.mxu0 0.0
    %1306 = vmatpush1.msra.mxu0 0.0
    %1307 = vmatprep.subr.mxu0 0.0
    %1308 = vmatpush1.msra.mxu0 0.0
    %1309 = vmatprep.subr.mxu0 0.0
    %1310 = vmatpush1.msra.mxu0 0.0
    %1311 = vmatprep.subr.mxu0 0.0
    %1312 = vmatpush1.msra.mxu0 0.0
    %1313 = vmatprep.subr.mxu0 0.0
    %1314 = vmatpush1.msra.mxu0 0.0
    %1315 = vmatprep.mubr.f32.mxu0 0.0
    %1316 = vmatmul.mubr.f32.gmra.mrb[0].mxu0 %v1250
    %v1317 = vpop.f32.mrb[0].mxu0
    %v1318 = vadd.f32 %v377, %v1317
    %v1319 = vpop.f32.mrb[0].mxu0
    %v1320 = vadd.f32 %v381, %v1319
    %1321 = vdwg.mxu0
    %1322 = vmatprep.subr.mxu0 %v312
    %1323 = vmatpush1.msra.mxu0 %v311
    %1324 = vmatprep.subr.mxu0 %v316
    %1325 = vmatpush1.msra.mxu0 %v315
    %1326 = vmatprep.subr.mxu0 %v320
    %1327 = vmatpush1.msra.mxu0 %v319
    %1328 = vmatprep.subr.mxu0 %v324
    %1329 = vmatpush1.msra.mxu0 %v323
    %1330 = vmatprep.subr.mxu0 %v328
    %1331 = vmatpush1.msra.mxu0 %v327
    %1332 = vmatprep.subr.mxu0 %v332
    %1333 = vmatpush1.msra.mxu0 %v331
    %1334 = vmatprep.subr.mxu0 %v336
    %1335 = vmatpush1.msra.mxu0 %v335
    %1336 = vmatprep.subr.mxu0 %v340
    %1337 = vmatpush1.msra.mxu0 %v339
    %1338 = vmatprep.subr.mxu0 %v344
    %1339 = vmatpush1.msra.mxu0 %v343
    %1340 = vmatprep.subr.mxu0 %v348
    %1341 = vmatpush1.msra.mxu0 %v347
    %1342 = vmatprep.subr.mxu0 %v352
    %1343 = vmatpush1.msra.mxu0 %v351
    %1344 = vmatprep.subr.mxu0 %v356
    %1345 = vmatpush1.msra.mxu0 %v355
    %1346 = vmatprep.subr.mxu0 %v360
    %1347 = vmatpush1.msra.mxu0 %v359
    %1348 = vmatprep.subr.mxu0 %v364
    %1349 = vmatpush1.msra.mxu0 %v363
    %1350 = vmatprep.subr.mxu0 %v368
    %1351 = vmatpush1.msra.mxu0 %v367
    %1352 = vmatprep.subr.mxu0 %v372
    %1353 = vmatpush1.msra.mxu0 %v371
    %1354 = vmatprep.subr.mxu0 0.0
    %1355 = vmatpush1.msra.mxu0 0.0
    %1356 = vmatprep.subr.mxu0 0.0
    %1357 = vmatpush1.msra.mxu0 0.0
    %1358 = vmatprep.subr.mxu0 0.0
    %1359 = vmatpush1.msra.mxu0 0.0
    %1360 = vmatprep.subr.mxu0 0.0
    %1361 = vmatpush1.msra.mxu0 0.0
    %1362 = vmatprep.subr.mxu0 0.0
    %1363 = vmatpush1.msra.mxu0 0.0
    %1364 = vmatprep.subr.mxu0 0.0
    %1365 = vmatpush1.msra.mxu0 0.0
    %1366 = vmatprep.subr.mxu0 0.0
    %1367 = vmatpush1.msra.mxu0 0.0
    %1368 = vmatprep.subr.mxu0 0.0
    %1369 = vmatpush1.msra.mxu0 0.0
    %1370 = vmatprep.subr.mxu0 0.0
    %1371 = vmatpush1.msra.mxu0 0.0
    %1372 = vmatprep.subr.mxu0 0.0
    %1373 = vmatpush1.msra.mxu0 0.0
    %1374 = vmatprep.subr.mxu0 0.0
    %1375 = vmatpush1.msra.mxu0 0.0
    %1376 = vmatprep.subr.mxu0 0.0
    %1377 = vmatpush1.msra.mxu0 0.0
    %1378 = vmatprep.subr.mxu0 0.0
    %1379 = vmatpush1.msra.mxu0 0.0
    %1380 = vmatprep.subr.mxu0 0.0
    %1381 = vmatpush1.msra.mxu0 0.0
    %1382 = vmatprep.subr.mxu0 0.0
    %1383 = vmatpush1.msra.mxu0 0.0
    %1384 = vmatprep.subr.mxu0 0.0
    %1385 = vmatpush1.msra.mxu0 0.0
    %1386 = vmatprep.mubr.f32.mxu0 0.0
    %1387 = vmatmul.mubr.f32.gmra.mrb[0].mxu0 %v1250
    %v1388 = vpop.f32.mrb[0].mxu0
    %v1389 = vadd.f32 %v385, %v1388
    %v1390 = vpop.f32.mrb[0].mxu0
    %v1391 = vadd.f32 %v389, %v1390
    %1392 = vdwg.mxu0
    %v1393 = vmul.f32 %v1318, 0.5
    %v1394 = vtanh.pop %v1393
    %v1395 = vadd.f32 %v1394, 1.0
    %v1396 = vmul.f32 %v1395, 0.5
    %v1397 = vmul.f32 %v1320, 0.5
    %v1398 = vtanh.pop %v1397
    %v1399 = vadd.f32 %v1398, 1.0
    %v1400 = vmul.f32 %v1399, 0.5
    %v1401 = vmul.f32 %v1396, %v1391
    %v1402 = vadd.f32 %v1389, %v1401
    %v1403 = vtanh.pop %v1402
    %v1404 = vsub.f32 1.0, %v1400
    %v1405 = vmul.f32 %v1404, %v1403
    %v1406 = vmul.f32 %v1400, %v986
    %v1407 = vadd.f32 %v1405, %v1406
    %v1408 = vsel %vm1248, %v1407, %v986
    %1409 = vmatprep.subr.mxu0 0.0
    %1410 = vmatpush1.msra.mxu0 %v551
    %1411 = vmatprep.subr.mxu0 0.0
    %1412 = vmatpush1.msra.mxu0 %v552
    %1413 = vmatprep.subr.mxu0 0.0
    %1414 = vmatpush1.msra.mxu0 %v553
    %1415 = vmatprep.subr.mxu0 0.0
    %1416 = vmatpush1.msra.mxu0 %v554
    %1417 = vmatprep.subr.mxu0 0.0
    %1418 = vmatpush1.msra.mxu0 %v555
    %1419 = vmatprep.subr.mxu0 0.0
    %1420 = vmatpush1.msra.mxu0 %v556
    %1421 = vmatprep.subr.mxu0 0.0
    %1422 = vmatpush1.msra.mxu0 %v557
    %1423 = vmatprep.subr.mxu0 0.0
    %1424 = vmatpush1.msra.mxu0 %v558
    %1425 = vmatprep.subr.mxu0 0.0
    %1426 = vmatpush1.msra.mxu0 %v559
    %1427 = vmatprep.subr.mxu0 0.0
    %1428 = vmatpush1.msra.mxu0 %v560
    %1429 = vmatprep.subr.mxu0 0.0
    %1430 = vmatpush1.msra.mxu0 %v561
    %1431 = vmatprep.subr.mxu0 0.0
    %1432 = vmatpush1.msra.mxu0 %v562
    %1433 = vmatprep.subr.mxu0 0.0
    %1434 = vmatpush1.msra.mxu0 %v563
    %1435 = vmatprep.subr.mxu0 0.0
    %1436 = vmatpush1.msra.mxu0 %v564
    %1437 = vmatprep.subr.mxu0 0.0
    %1438 = vmatpush1.msra.mxu0 %v565
    %1439 = vmatprep.subr.mxu0 0.0
    %1440 = vmatpush1.msra.mxu0 %v566
    %1441 = vmatprep.subr.mxu0 0.0
    %1442 = vmatpush1.msra.mxu0 0.0
    %1443 = vmatprep.subr.mxu0 0.0
    %1444 = vmatpush1.msra.mxu0 0.0
    %1445 = vmatprep.subr.mxu0 0.0
    %1446 = vmatpush1.msra.mxu0 0.0
    %1447 = vmatprep.subr.mxu0 0.0
    %1448 = vmatpush1.msra.mxu0 0.0
    %1449 = vmatprep.subr.mxu0 0.0
    %1450 = vmatpush1.msra.mxu0 0.0
    %1451 = vmatprep.subr.mxu0 0.0
    %1452 = vmatpush1.msra.mxu0 0.0
    %1453 = vmatprep.subr.mxu0 0.0
    %1454 = vmatpush1.msra.mxu0 0.0
    %1455 = vmatprep.subr.mxu0 0.0
    %1456 = vmatpush1.msra.mxu0 0.0
    %1457 = vmatprep.subr.mxu0 0.0
    %1458 = vmatpush1.msra.mxu0 0.0
    %1459 = vmatprep.subr.mxu0 0.0
    %1460 = vmatpush1.msra.mxu0 0.0
    %1461 = vmatprep.subr.mxu0 0.0
    %1462 = vmatpush1.msra.mxu0 0.0
    %1463 = vmatprep.subr.mxu0 0.0
    %1464 = vmatpush1.msra.mxu0 0.0
    %1465 = vmatprep.subr.mxu0 0.0
    %1466 = vmatpush1.msra.mxu0 0.0
    %1467 = vmatprep.subr.mxu0 0.0
    %1468 = vmatpush1.msra.mxu0 0.0
    %1469 = vmatprep.subr.mxu0 0.0
    %1470 = vmatpush1.msra.mxu0 0.0
    %1471 = vmatprep.subr.mxu0 0.0
    %1472 = vmatpush1.msra.mxu0 0.0
    %1473 = vmatprep.mubr.f32.mxu0 0.0
    %1474 = vmatmul.mubr.f32.gmra.mrb[0].mxu0 %v1407
    %v1475 = vpop.f32.mrb[0].mxu0
    %v1476 = vadd.f32 %v63, %v1475
    %v1477 = vpop.f32.mrb[0].mxu0
    %1478 = vdwg.mxu0
    %v1479 = vsel %vm637, %v1476, -inf
    %1480 = vmax.xlane.f32.xlu0 %v1479
    %v1481 = vpop.xlane.xlu0 %1480
    %vm1482 = vcmp.ge.f32.partialorder %v1476, %v1481
    %v1483 = vsel %vm1482, %v51, 128
    %v1484 = vsel %vm637, %v1483, 2147483647
    %v1485 = vand.u32 %v1484, 65535
    %v1486 = vshra.s32 %v1484, 16
    %v1487 = vcvt.s32.f32 %v1485
    %v1488 = vcvt.s32.f32 %v1486
    %1489 = vmin.xlane.f32.xlu0 %v1488
    %v1490 = vpop.xlane.xlu0 %1489
    %vm1491 = vcmp.eq.f32.partialorder %v1488, %v1490
    %v1492 = vsel %vm1491, %v1487, inf
    %1493 = vmin.xlane.f32.xlu0 %v1492
    %v1494 = vpop.xlane.xlu0 %1493
    %v1495 = vcvt.f32.s32 %v1494
    %v1496 = vcvt.f32.s32 %v1490
    %v1497 = vshll.u32 %v1496, 16
    %v1498 = vadd.s32 %v1497, %v1495
    %vm1499 = vcmp.eq.s32.totalorder %v51, %v1498
    %v1500 = vsel %vm1499, 1, 0
    %v1501 = vcvt.s32.f32 %v1500
    %v1502 = vsel %vm1248, %v1501, %v1080
    %vm1503 = vcmp.eq.s32.totalorder %v51, 2
    %vm1504 = vmand %vm1503, %vm1248
    %v1505 = vsel %vm1504, %v1498, %v1082
    %vm1506 = vcmp.eq.s32.totalorder %v1498, 2
    %vm1507 = vcmp.eq.s32.totalorder %v1498, 0
    %vm1508 = vmor %vm1506, %vm1507
    %vm1509 = vmand %vm1088, %vm1508
    %vm1510 = vmor %vm1087, %vm1509
    %vm1511 = vmxor %vm1510, 1
    %v1512 = vadd.f32 %v1502, %v1249
    %1513 = vmatprep.subr.mxu0 %v66
    %1514 = vmatpush1.msra.mxu0 %v65
    %1515 = vmatprep.subr.mxu0 %v70
    %1516 = vmatpush1.msra.mxu0 %v69
    %1517 = vmatprep.subr.mxu0 %v74
    %1518 = vmatpush1.msra.mxu0 %v73
    %1519 = vmatprep.subr.mxu0 %v78
    %1520 = vmatpush1.msra.mxu0 %v77
    %1521 = vmatprep.subr.mxu0 %v82
    %1522 = vmatpush1.msra.mxu0 %v81
    %1523 = vmatprep.subr.mxu0 %v86
    %1524 = vmatpush1.msra.mxu0 %v85
    %1525 = vmatprep.subr.mxu0 %v90
    %1526 = vmatpush1.msra.mxu0 %v89
    %1527 = vmatprep.subr.mxu0 %v94
    %1528 = vmatpush1.msra.mxu0 %v93
    %1529 = vmatprep.subr.mxu0 %v98
    %1530 = vmatpush1.msra.mxu0 %v97
    %1531 = vmatprep.subr.mxu0 %v102
    %1532 = vmatpush1.msra.mxu0 %v101
    %1533 = vmatprep.subr.mxu0 %v106
    %1534 = vmatpush1.msra.mxu0 %v105
    %1535 = vmatprep.subr.mxu0 %v110
    %1536 = vmatpush1.msra.mxu0 %v109
    %1537 = vmatprep.subr.mxu0 %v114
    %1538 = vmatpush1.msra.mxu0 %v113
    %1539 = vmatprep.subr.mxu0 %v118
    %1540 = vmatpush1.msra.mxu0 %v117
    %1541 = vmatprep.subr.mxu0 %v122
    %1542 = vmatpush1.msra.mxu0 %v121
    %1543 = vmatprep.subr.mxu0 %v126
    %1544 = vmatpush1.msra.mxu0 %v125
    %1545 = vmatprep.subr.mxu0 0.0
    %1546 = vmatpush1.msra.mxu0 0.0
    %1547 = vmatprep.subr.mxu0 0.0
    %1548 = vmatpush1.msra.mxu0 0.0
    %1549 = vmatprep.subr.mxu0 0.0
    %1550 = vmatpush1.msra.mxu0 0.0
    %1551 = vmatprep.subr.mxu0 0.0
    %1552 = vmatpush1.msra.mxu0 0.0
    %1553 = vmatprep.subr.mxu0 0.0
    %1554 = vmatpush1.msra.mxu0 0.0
    %1555 = vmatprep.subr.mxu0 0.0
    %1556 = vmatpush1.msra.mxu0 0.0
    %1557 = vmatprep.subr.mxu0 0.0
    %1558 = vmatpush1.msra.mxu0 0.0
    %1559 = vmatprep.subr.mxu0 0.0
    %1560 = vmatpush1.msra.mxu0 0.0
    %1561 = vmatprep.subr.mxu0 0.0
    %1562 = vmatpush1.msra.mxu0 0.0
    %1563 = vmatprep.subr.mxu0 0.0
    %1564 = vmatpush1.msra.mxu0 0.0
    %1565 = vmatprep.subr.mxu0 0.0
    %1566 = vmatpush1.msra.mxu0 0.0
    %1567 = vmatprep.subr.mxu0 0.0
    %1568 = vmatpush1.msra.mxu0 0.0
    %1569 = vmatprep.subr.mxu0 0.0
    %1570 = vmatpush1.msra.mxu0 0.0
    %1571 = vmatprep.subr.mxu0 0.0
    %1572 = vmatpush1.msra.mxu0 0.0
    %1573 = vmatprep.subr.mxu0 0.0
    %1574 = vmatpush1.msra.mxu0 0.0
    %1575 = vmatprep.subr.mxu0 0.0
    %1576 = vmatpush1.msra.mxu0 0.0
    %1577 = vmatprep.mubr.f32.mxu0 0.0
    %1578 = vmatmul.mubr.f32.gmra.mrb[0].mxu0 %v1512
    %v1579 = vpop.f32.mrb[0].mxu0
    %v1580 = vadd.f32 %v133, %v1579
    %v1581 = vpop.f32.mrb[0].mxu0
    %v1582 = vadd.f32 %v137, %v1581
    %1583 = vdwg.mxu0
    %1584 = vmatprep.subr.mxu0 %v68
    %1585 = vmatpush1.msra.mxu0 %v67
    %1586 = vmatprep.subr.mxu0 %v72
    %1587 = vmatpush1.msra.mxu0 %v71
    %1588 = vmatprep.subr.mxu0 %v76
    %1589 = vmatpush1.msra.mxu0 %v75
    %1590 = vmatprep.subr.mxu0 %v80
    %1591 = vmatpush1.msra.mxu0 %v79
    %1592 = vmatprep.subr.mxu0 %v84
    %1593 = vmatpush1.msra.mxu0 %v83
    %1594 = vmatprep.subr.mxu0 %v88
    %1595 = vmatpush1.msra.mxu0 %v87
    %1596 = vmatprep.subr.mxu0 %v92
    %1597 = vmatpush1.msra.mxu0 %v91
    %1598 = vmatprep.subr.mxu0 %v96
    %1599 = vmatpush1.msra.mxu0 %v95
    %1600 = vmatprep.subr.mxu0 %v100
    %1601 = vmatpush1.msra.mxu0 %v99
    %1602 = vmatprep.subr.mxu0 %v104
    %1603 = vmatpush1.msra.mxu0 %v103
    %1604 = vmatprep.subr.mxu0 %v108
    %1605 = vmatpush1.msra.mxu0 %v107
    %1606 = vmatprep.subr.mxu0 %v112
    %1607 = vmatpush1.msra.mxu0 %v111
    %1608 = vmatprep.subr.mxu0 %v116
    %1609 = vmatpush1.msra.mxu0 %v115
    %1610 = vmatprep.subr.mxu0 %v120
    %1611 = vmatpush1.msra.mxu0 %v119
    %1612 = vmatprep.subr.mxu0 %v124
    %1613 = vmatpush1.msra.mxu0 %v123
    %1614 = vmatprep.subr.mxu0 %v128
    %1615 = vmatpush1.msra.mxu0 %v127
    %1616 = vmatprep.subr.mxu0 0.0
    %1617 = vmatpush1.msra.mxu0 0.0
    %1618 = vmatprep.subr.mxu0 0.0
    %1619 = vmatpush1.msra.mxu0 0.0
    %1620 = vmatprep.subr.mxu0 0.0
    %1621 = vmatpush1.msra.mxu0 0.0
    %1622 = vmatprep.subr.mxu0 0.0
    %1623 = vmatpush1.msra.mxu0 0.0
    %1624 = vmatprep.subr.mxu0 0.0
    %1625 = vmatpush1.msra.mxu0 0.0
    %1626 = vmatprep.subr.mxu0 0.0
    %1627 = vmatpush1.msra.mxu0 0.0
    %1628 = vmatprep.subr.mxu0 0.0
    %1629 = vmatpush1.msra.mxu0 0.0
    %1630 = vmatprep.subr.mxu0 0.0
    %1631 = vmatpush1.msra.mxu0 0.0
    %1632 = vmatprep.subr.mxu0 0.0
    %1633 = vmatpush1.msra.mxu0 0.0
    %1634 = vmatprep.subr.mxu0 0.0
    %1635 = vmatpush1.msra.mxu0 0.0
    %1636 = vmatprep.subr.mxu0 0.0
    %1637 = vmatpush1.msra.mxu0 0.0
    %1638 = vmatprep.subr.mxu0 0.0
    %1639 = vmatpush1.msra.mxu0 0.0
    %1640 = vmatprep.subr.mxu0 0.0
    %1641 = vmatpush1.msra.mxu0 0.0
    %1642 = vmatprep.subr.mxu0 0.0
    %1643 = vmatpush1.msra.mxu0 0.0
    %1644 = vmatprep.subr.mxu0 0.0
    %1645 = vmatpush1.msra.mxu0 0.0
    %1646 = vmatprep.subr.mxu0 0.0
    %1647 = vmatpush1.msra.mxu0 0.0
    %1648 = vmatprep.mubr.f32.mxu0 0.0
    %1649 = vmatmul.mubr.f32.gmra.mrb[0].mxu0 %v1512
    %v1650 = vpop.f32.mrb[0].mxu0
    %v1651 = vadd.f32 %v141, %v1650
    %v1652 = vpop.f32.mrb[0].mxu0
    %v1653 = vadd.f32 %v145, %v1652
    %1654 = vdwg.mxu0
    %v1655 = vmul.f32 %v1580, 0.5
    %v1656 = vtanh.pop %v1655
    %v1657 = vadd.f32 %v1656, 1.0
    %v1658 = vmul.f32 %v1657, 0.5
    %v1659 = vmul.f32 %v1582, 0.5
    %v1660 = vtanh.pop %v1659
    %v1661 = vadd.f32 %v1660, 1.0
    %v1662 = vmul.f32 %v1661, 0.5
    %v1663 = vmul.f32 %v1658, %v1653
    %v1664 = vadd.f32 %v1651, %v1663
    %v1665 = vtanh.pop %v1664
    %v1666 = vsub.f32 1.0, %v1662
    %v1667 = vmul.f32 %v1666, %v1665
    %v1668 = vmul.f32 %v1662, %v1249
    %v1669 = vadd.f32 %v1667, %v1668
    %v1670 = vsel %vm1511, 1, 0
    %vm1671 = vcmp.eq.s32.totalorder %v1670, 1
    %v1672 = vsel %vm1671, %v1669, %v1249
    %v1673 = vadd.f32 %v1669, %v1408
    %1674 = vmatprep.subr.mxu0 %v310
    %1675 = vmatpush1.msra.mxu0 %v309
    %1676 = vmatprep.subr.mxu0 %v314
    %1677 = vmatpush1.msra.mxu0 %v313
    %1678 = vmatprep.subr.mxu0 %v318
    %1679 = vmatpush1.msra.mxu0 %v317
    %1680 = vmatprep.subr.mxu0 %v322
    %1681 = vmatpush1.msra.mxu0 %v321
    %1682 = vmatprep.subr.mxu0 %v326
    %1683 = vmatpush1.msra.mxu0 %v325
    %1684 = vmatprep.subr.mxu0 %v330
    %1685 = vmatpush1.msra.mxu0 %v329
    %1686 = vmatprep.subr.mxu0 %v334
    %1687 = vmatpush1.msra.mxu0 %v333
    %1688 = vmatprep.subr.mxu0 %v338
    %1689 = vmatpush1.msra.mxu0 %v337
    %1690 = vmatprep.subr.mxu0 %v342
    %1691 = vmatpush1.msra.mxu0 %v341
    %1692 = vmatprep.subr.mxu0 %v346
    %1693 = vmatpush1.msra.mxu0 %v345
    %1694 = vmatprep.subr.mxu0 %v350
    %1695 = vmatpush1.msra.mxu0 %v349
    %1696 = vmatprep.subr.mxu0 %v354
    %1697 = vmatpush1.msra.mxu0 %v353
    %1698 = vmatprep.subr.mxu0 %v358
    %1699 = vmatpush1.msra.mxu0 %v357
    %1700 = vmatprep.subr.mxu0 %v362
    %1701 = vmatpush1.msra.mxu0 %v361
    %1702 = vmatprep.subr.mxu0 %v366
    %1703 = vmatpush1.msra.mxu0 %v365
    %1704 = vmatprep.subr.mxu0 %v370
    %1705 = vmatpush1.msra.mxu0 %v369
    %1706 = vmatprep.subr.mxu0 0.0
    %1707 = vmatpush1.msra.mxu0 0.0
    %1708 = vmatprep.subr.mxu0 0.0
    %1709 = vmatpush1.msra.mxu0 0.0
    %1710 = vmatprep.subr.mxu0 0.0
    %1711 = vmatpush1.msra.mxu0 0.0
    %1712 = vmatprep.subr.mxu0 0.0
    %1713 = vmatpush1.msra.mxu0 0.0
    %1714 = vmatprep.subr.mxu0 0.0
    %1715 = vmatpush1.msra.mxu0 0.0
    %1716 = vmatprep.subr.mxu0 0.0
    %1717 = vmatpush1.msra.mxu0 0.0
    %1718 = vmatprep.subr.mxu0 0.0
    %1719 = vmatpush1.msra.mxu0 0.0
    %1720 = vmatprep.subr.mxu0 0.0
    %1721 = vmatpush1.msra.mxu0 0.0
    %1722 = vmatprep.subr.mxu0 0.0
    %1723 = vmatpush1.msra.mxu0 0.0
    %1724 = vmatprep.subr.mxu0 0.0
    %1725 = vmatpush1.msra.mxu0 0.0
    %1726 = vmatprep.subr.mxu0 0.0
    %1727 = vmatpush1.msra.mxu0 0.0
    %1728 = vmatprep.subr.mxu0 0.0
    %1729 = vmatpush1.msra.mxu0 0.0
    %1730 = vmatprep.subr.mxu0 0.0
    %1731 = vmatpush1.msra.mxu0 0.0
    %1732 = vmatprep.subr.mxu0 0.0
    %1733 = vmatpush1.msra.mxu0 0.0
    %1734 = vmatprep.subr.mxu0 0.0
    %1735 = vmatpush1.msra.mxu0 0.0
    %1736 = vmatprep.subr.mxu0 0.0
    %1737 = vmatpush1.msra.mxu0 0.0
    %1738 = vmatprep.mubr.f32.mxu0 0.0
    %1739 = vmatmul.mubr.f32.gmra.mrb[0].mxu0 %v1673
    %v1740 = vpop.f32.mrb[0].mxu0
    %v1741 = vadd.f32 %v377, %v1740
    %v1742 = vpop.f32.mrb[0].mxu0
    %v1743 = vadd.f32 %v381, %v1742
    %1744 = vdwg.mxu0
    %1745 = vmatprep.subr.mxu0 %v312
    %1746 = vmatpush1.msra.mxu0 %v311
    %1747 = vmatprep.subr.mxu0 %v316
    %1748 = vmatpush1.msra.mxu0 %v315
    %1749 = vmatprep.subr.mxu0 %v320
    %1750 = vmatpush1.msra.mxu0 %v319
    %1751 = vmatprep.subr.mxu0 %v324
    %1752 = vmatpush1.msra.mxu0 %v323
    %1753 = vmatprep.subr.mxu0 %v328
    %1754 = vmatpush1.msra.mxu0 %v327
    %1755 = vmatprep.subr.mxu0 %v332
    %1756 = vmatpush1.msra.mxu0 %v331
    %1757 = vmatprep.subr.mxu0 %v336
    %1758 = vmatpush1.msra.mxu0 %v335
    %1759 = vmatprep.subr.mxu0 %v340
    %1760 = vmatpush1.msra.mxu0 %v339
    %1761 = vmatprep.subr.mxu0 %v344
    %1762 = vmatpush1.msra.mxu0 %v343
    %1763 = vmatprep.subr.mxu0 %v348
    %1764 = vmatpush1.msra.mxu0 %v347
    %1765 = vmatprep.subr.mxu0 %v352
    %1766 = vmatpush1.msra.mxu0 %v351
    %1767 = vmatprep.subr.mxu0 %v356
    %1768 = vmatpush1.msra.mxu0 %v355
    %1769 = vmatprep.subr.mxu0 %v360
    %1770 = vmatpush1.msra.mxu0 %v359
    %1771 = vmatprep.subr.mxu0 %v364
    %1772 = vmatpush1.msra.mxu0 %v363
    %1773 = vmatprep.subr.mxu0 %v368
    %1774 = vmatpush1.msra.mxu0 %v367
    %1775 = vmatprep.subr.mxu0 %v372
    %1776 = vmatpush1.msra.mxu0 %v371
    %1777 = vmatprep.subr.mxu0 0.0
    %1778 = vmatpush1.msra.mxu0 0.0
    %1779 = vmatprep.subr.mxu0 0.0
    %1780 = vmatpush1.msra.mxu0 0.0
    %1781 = vmatprep.subr.mxu0 0.0
    %1782 = vmatpush1.msra.mxu0 0.0
    %1783 = vmatprep.subr.mxu0 0.0
    %1784 = vmatpush1.msra.mxu0 0.0
    %1785 = vmatprep.subr.mxu0 0.0
    %1786 = vmatpush1.msra.mxu0 0.0
    %1787 = vmatprep.subr.mxu0 0.0
    %1788 = vmatpush1.msra.mxu0 0.0
    %1789 = vmatprep.subr.mxu0 0.0
    %1790 = vmatpush1.msra.mxu0 0.0
    %1791 = vmatprep.subr.mxu0 0.0
    %1792 = vmatpush1.msra.mxu0 0.0
    %1793 = vmatprep.subr.mxu0 0.0
    %1794 = vmatpush1.msra.mxu0 0.0
    %1795 = vmatprep.subr.mxu0 0.0
    %1796 = vmatpush1.msra.mxu0 0.0
    %1797 = vmatprep.subr.mxu0 0.0
    %1798 = vmatpush1.msra.mxu0 0.0
    %1799 = vmatprep.subr.mxu0 0.0
    %1800 = vmatpush1.msra.mxu0 0.0
    %1801 = vmatprep.subr.mxu0 0.0
    %1802 = vmatpush1.msra.mxu0 0.0
    %1803 = vmatprep.subr.mxu0 0.0
    %1804 = vmatpush1.msra.mxu0 0.0
    %1805 = vmatprep.subr.mxu0 0.0
    %1806 = vmatpush1.msra.mxu0 0.0
    %1807 = vmatprep.subr.mxu0 0.0
    %1808 = vmatpush1.msra.mxu0 0.0
    %1809 = vmatprep.mubr.f32.mxu0 0.0
    %1810 = vmatmul.mubr.f32.gmra.mrb[0].mxu0 %v1673
    %v1811 = vpop.f32.mrb[0].mxu0
    %v1812 = vadd.f32 %v385, %v1811
    %v1813 = vpop.f32.mrb[0].mxu0
    %v1814 = vadd.f32 %v389, %v1813
    %1815 = vdwg.mxu0
    %v1816 = vmul.f32 %v1741, 0.5
    %v1817 = vtanh.pop %v1816
    %v1818 = vadd.f32 %v1817, 1.0
    %v1819 = vmul.f32 %v1818, 0.5
    %v1820 = vmul.f32 %v1743, 0.5
    %v1821 = vtanh.pop %v1820
    %v1822 = vadd.f32 %v1821, 1.0
    %v1823 = vmul.f32 %v1822, 0.5
    %v1824 = vmul.f32 %v1819, %v1814
    %v1825 = vadd.f32 %v1812, %v1824
    %v1826 = vtanh.pop %v1825
    %v1827 = vsub.f32 1.0, %v1823
    %v1828 = vmul.f32 %v1827, %v1826
    %v1829 = vmul.f32 %v1823, %v1408
    %v1830 = vadd.f32 %v1828, %v1829
    %v1831 = vsel %vm1671, %v1830, %v1408
    %1832 = vmatprep.subr.mxu0 0.0
    %1833 = vmatpush1.msra.mxu0 %v551
    %1834 = vmatprep.subr.mxu0 0.0
    %1835 = vmatpush1.msra.mxu0 %v552
    %1836 = vmatprep.subr.mxu0 0.0
    %1837 = vmatpush1.msra.mxu0 %v553
    %1838 = vmatprep.subr.mxu0 0.0
    %1839 = vmatpush1.msra.mxu0 %v554
    %1840 = vmatprep.subr.mxu0 0.0
    %1841 = vmatpush1.msra.mxu0 %v555
    %1842 = vmatprep.subr.mxu0 0.0
    %1843 = vmatpush1.msra.mxu0 %v556
    %1844 = vmatprep.subr.mxu0 0.0
    %1845 = vmatpush1.msra.mxu0 %v557
    %1846 = vmatprep.subr.mxu0 0.0
    %1847 = vmatpush1.msra.mxu0 %v558
    %1848 = vmatprep.subr.mxu0 0.0
    %1849 = vmatpush1.msra.mxu0 %v559
    %1850 = vmatprep.subr.mxu0 0.0
    %1851 = vmatpush1.msra.mxu0 %v560
    %1852 = vmatprep.subr.mxu0 0.0
    %1853 = vmatpush1.msra.mxu0 %v561
    %1854 = vmatprep.subr.mxu0 0.0
    %1855 = vmatpush1.msra.mxu0 %v562
    %1856 = vmatprep.subr.mxu0 0.0
    %1857 = vmatpush1.msra.mxu0 %v563
    %1858 = vmatprep.subr.mxu0 0.0
    %1859 = vmatpush1.msra.mxu0 %v564
    %1860 = vmatprep.subr.mxu0 0.0
    %1861 = vmatpush1.msra.mxu0 %v565
    %1862 = vmatprep.subr.mxu0 0.0
    %1863 = vmatpush1.msra.mxu0 %v566
    %1864 = vmatprep.subr.mxu0 0.0
    %1865 = vmatpush1.msra.mxu0 0.0
    %1866 = vmatprep.subr.mxu0 0.0
    %1867 = vmatpush1.msra.mxu0 0.0
    %1868 = vmatprep.subr.mxu0 0.0
    %1869 = vmatpush1.msra.mxu0 0.0
    %1870 = vmatprep.subr.mxu0 0.0
    %1871 = vmatpush1.msra.mxu0 0.0
    %1872 = vmatprep.subr.mxu0 0.0
    %1873 = vmatpush1.msra.mxu0 0.0
    %1874 = vmatprep.subr.mxu0 0.0
    %1875 = vmatpush1.msra.mxu0 0.0
    %1876 = vmatprep.subr.mxu0 0.0
    %1877 = vmatpush1.msra.mxu0 0.0
    %1878 = vmatprep.subr.mxu0 0.0
    %1879 = vmatpush1.msra.mxu0 0.0
    %1880 = vmatprep.subr.mxu0 0.0
    %1881 = vmatpush1.msra.mxu0 0.0
    %1882 = vmatprep.subr.mxu0 0.0
    %1883 = vmatpush1.msra.mxu0 0.0
    %1884 = vmatprep.subr.mxu0 0.0
    %1885 = vmatpush1.msra.mxu0 0.0
    %1886 = vmatprep.subr.mxu0 0.0
    %1887 = vmatpush1.msra.mxu0 0.0
    %1888 = vmatprep.subr.mxu0 0.0
    %1889 = vmatpush1.msra.mxu0 0.0
    %1890 = vmatprep.subr.mxu0 0.0
    %1891 = vmatpush1.msra.mxu0 0.0
    %1892 = vmatprep.subr.mxu0 0.0
    %1893 = vmatpush1.msra.mxu0 0.0
    %1894 = vmatprep.subr.mxu0 0.0
    %1895 = vmatpush1.msra.mxu0 0.0
    %1896 = vmatprep.mubr.f32.mxu0 0.0
    %1897 = vmatmul.mubr.f32.gmra.mrb[0].mxu0 %v1830
    %v1898 = vpop.f32.mrb[0].mxu0
    %v1899 = vadd.f32 %v63, %v1898
    %v1900 = vpop.f32.mrb[0].mxu0
    %1901 = vdwg.mxu0
    %v1902 = vsel %vm637, %v1899, -inf
    %1903 = vmax.xlane.f32.xlu0 %v1902
    %v1904 = vpop.xlane.xlu0 %1903
    %vm1905 = vcmp.ge.f32.partialorder %v1899, %v1904
    %v1906 = vsel %vm1905, %v51, 128
    %v1907 = vsel %vm637, %v1906, 2147483647
    %v1908 = vand.u32 %v1907, 65535
    %v1909 = vshra.s32 %v1907, 16
    %v1910 = vcvt.s32.f32 %v1908
    %v1911 = vcvt.s32.f32 %v1909
    %1912 = vmin.xlane.f32.xlu0 %v1911
    %v1913 = vpop.xlane.xlu0 %1912
    %vm1914 = vcmp.eq.f32.partialorder %v1911, %v1913
    %v1915 = vsel %vm1914, %v1910, inf
    %1916 = vmin.xlane.f32.xlu0 %v1915
    %v1917 = vpop.xlane.xlu0 %1916
    %v1918 = vcvt.f32.s32 %v1917
    %v1919 = vcvt.f32.s32 %v1913
    %v1920 = vshll.u32 %v1919, 16
    %v1921 = vadd.s32 %v1920, %v1918
    %vm1922 = vcmp.eq.s32.totalorder %v51, %v1921
    %v1923 = vsel %vm1922, 1, 0
    %v1924 = vcvt.s32.f32 %v1923
    %v1925 = vsel %vm1671, %v1924, %v1502
    %vm1926 = vcmp.eq.s32.totalorder %v51, 3
    %vm1927 = vmand %vm1926, %vm1671
    %v1928 = vsel %vm1927, %v1921, %v1505
    %vm1929 = vcmp.eq.s32.totalorder %v1921, 2
    %vm1930 = vcmp.eq.s32.totalorder %v1921, 0
    %vm1931 = vmor %vm1929, %vm1930
    %vm1932 = vmand %vm1511, %vm1931
    %vm1933 = vmor %vm1510, %vm1932
    %vm1934 = vmxor %vm1933, 1
    %v1935 = vadd.f32 %v1925, %v1672
    %1936 = vmatprep.subr.mxu0 %v66
    %1937 = vmatpush1.msra.mxu0 %v65
    %1938 = vmatprep.subr.mxu0 %v70
    %1939 = vmatpush1.msra.mxu0 %v69
    %1940 = vmatprep.subr.mxu0 %v74
    %1941 = vmatpush1.msra.mxu0 %v73
    %1942 = vmatprep.subr.mxu0 %v78
    %1943 = vmatpush1.msra.mxu0 %v77
    %1944 = vmatprep.subr.mxu0 %v82
    %1945 = vmatpush1.msra.mxu0 %v81
    %1946 = vmatprep.subr.mxu0 %v86
    %1947 = vmatpush1.msra.mxu0 %v85
    %1948 = vmatprep.subr.mxu0 %v90
    %1949 = vmatpush1.msra.mxu0 %v89
    %1950 = vmatprep.subr.mxu0 %v94
    %1951 = vmatpush1.msra.mxu0 %v93
    %1952 = vmatprep.subr.mxu0 %v98
    %1953 = vmatpush1.msra.mxu0 %v97
    %1954 = vmatprep.subr.mxu0 %v102
    %1955 = vmatpush1.msra.mxu0 %v101
    %1956 = vmatprep.subr.mxu0 %v106
    %1957 = vmatpush1.msra.mxu0 %v105
    %1958 = vmatprep.subr.mxu0 %v110
    %1959 = vmatpush1.msra.mxu0 %v109
    %1960 = vmatprep.subr.mxu0 %v114
    %1961 = vmatpush1.msra.mxu0 %v113
    %1962 = vmatprep.subr.mxu0 %v118
    %1963 = vmatpush1.msra.mxu0 %v117
    %1964 = vmatprep.subr.mxu0 %v122
    %1965 = vmatpush1.msra.mxu0 %v121
    %1966 = vmatprep.subr.mxu0 %v126
    %1967 = vmatpush1.msra.mxu0 %v125
    %1968 = vmatprep.subr.mxu0 0.0
    %1969 = vmatpush1.msra.mxu0 0.0
    %1970 = vmatprep.subr.mxu0 0.0
    %1971 = vmatpush1.msra.mxu0 0.0
    %1972 = vmatprep.subr.mxu0 0.0
    %1973 = vmatpush1.msra.mxu0 0.0
    %1974 = vmatprep.subr.mxu0 0.0
    %1975 = vmatpush1.msra.mxu0 0.0
    %1976 = vmatprep.subr.mxu0 0.0
    %1977 = vmatpush1.msra.mxu0 0.0
    %1978 = vmatprep.subr.mxu0 0.0
    %1979 = vmatpush1.msra.mxu0 0.0
    %1980 = vmatprep.subr.mxu0 0.0
    %1981 = vmatpush1.msra.mxu0 0.0
    %1982 = vmatprep.subr.mxu0 0.0
    %1983 = vmatpush1.msra.mxu0 0.0
    %1984 = vmatprep.subr.mxu0 0.0
    %1985 = vmatpush1.msra.mxu0 0.0
    %1986 = vmatprep.subr.mxu0 0.0
    %1987 = vmatpush1.msra.mxu0 0.0
    %1988 = vmatprep.subr.mxu0 0.0
    %1989 = vmatpush1.msra.mxu0 0.0
    %1990 = vmatprep.subr.mxu0 0.0
    %1991 = vmatpush1.msra.mxu0 0.0
    %1992 = vmatprep.subr.mxu0 0.0
    %1993 = vmatpush1.msra.mxu0 0.0
    %1994 = vmatprep.subr.mxu0 0.0
    %1995 = vmatpush1.msra.mxu0 0.0
    %1996 = vmatprep.subr.mxu0 0.0
    %1997 = vmatpush1.msra.mxu0 0.0
    %1998 = vmatprep.subr.mxu0 0.0
    %1999 = vmatpush1.msra.mxu0 0.0
    %2000 = vmatprep.mubr.f32.mxu0 0.0
    %2001 = vmatmul.mubr.f32.gmra.mrb[0].mxu0 %v1935
    %v2002 = vpop.f32.mrb[0].mxu0
    %v2003 = vadd.f32 %v133, %v2002
    %v2004 = vpop.f32.mrb[0].mxu0
    %v2005 = vadd.f32 %v137, %v2004
    %2006 = vdwg.mxu0
    %2007 = vmatprep.subr.mxu0 %v68
    %2008 = vmatpush1.msra.mxu0 %v67
    %2009 = vmatprep.subr.mxu0 %v72
    %2010 = vmatpush1.msra.mxu0 %v71
    %2011 = vmatprep.subr.mxu0 %v76
    %2012 = vmatpush1.msra.mxu0 %v75
    %2013 = vmatprep.subr.mxu0 %v80
    %2014 = vmatpush1.msra.mxu0 %v79
    %2015 = vmatprep.subr.mxu0 %v84
    %2016 = vmatpush1.msra.mxu0 %v83
    %2017 = vmatprep.subr.mxu0 %v88
    %2018 = vmatpush1.msra.mxu0 %v87
    %2019 = vmatprep.subr.mxu0 %v92
    %2020 = vmatpush1.msra.mxu0 %v91
    %2021 = vmatprep.subr.mxu0 %v96
    %2022 = vmatpush1.msra.mxu0 %v95
    %2023 = vmatprep.subr.mxu0 %v100
    %2024 = vmatpush1.msra.mxu0 %v99
    %2025 = vmatprep.subr.mxu0 %v104
    %2026 = vmatpush1.msra.mxu0 %v103
    %2027 = vmatprep.subr.mxu0 %v108
    %2028 = vmatpush1.msra.mxu0 %v107
    %2029 = vmatprep.subr.mxu0 %v112
    %2030 = vmatpush1.msra.mxu0 %v111
    %2031 = vmatprep.subr.mxu0 %v116
    %2032 = vmatpush1.msra.mxu0 %v115
    %2033 = vmatprep.subr.mxu0 %v120
    %2034 = vmatpush1.msra.mxu0 %v119
    %2035 = vmatprep.subr.mxu0 %v124
    %2036 = vmatpush1.msra.mxu0 %v123
    %2037 = vmatprep.subr.mxu0 %v128
    %2038 = vmatpush1.msra.mxu0 %v127
    %2039 = vmatprep.subr.mxu0 0.0
    %2040 = vmatpush1.msra.mxu0 0.0
    %2041 = vmatprep.subr.mxu0 0.0
    %2042 = vmatpush1.msra.mxu0 0.0
    %2043 = vmatprep.subr.mxu0 0.0
    %2044 = vmatpush1.msra.mxu0 0.0
    %2045 = vmatprep.subr.mxu0 0.0
    %2046 = vmatpush1.msra.mxu0 0.0
    %2047 = vmatprep.subr.mxu0 0.0
    %2048 = vmatpush1.msra.mxu0 0.0
    %2049 = vmatprep.subr.mxu0 0.0
    %2050 = vmatpush1.msra.mxu0 0.0
    %2051 = vmatprep.subr.mxu0 0.0
    %2052 = vmatpush1.msra.mxu0 0.0
    %2053 = vmatprep.subr.mxu0 0.0
    %2054 = vmatpush1.msra.mxu0 0.0
    %2055 = vmatprep.subr.mxu0 0.0
    %2056 = vmatpush1.msra.mxu0 0.0
    %2057 = vmatprep.subr.mxu0 0.0
    %2058 = vmatpush1.msra.mxu0 0.0
    %2059 = vmatprep.subr.mxu0 0.0
    %2060 = vmatpush1.msra.mxu0 0.0
    %2061 = vmatprep.subr.mxu0 0.0
    %2062 = vmatpush1.msra.mxu0 0.0
    %2063 = vmatprep.subr.mxu0 0.0
    %2064 = vmatpush1.msra.mxu0 0.0
    %2065 = vmatprep.subr.mxu0 0.0
    %2066 = vmatpush1.msra.mxu0 0.0
    %2067 = vmatprep.subr.mxu0 0.0
    %2068 = vmatpush1.msra.mxu0 0.0
    %2069 = vmatprep.subr.mxu0 0.0
    %2070 = vmatpush1.msra.mxu0 0.0
    %2071 = vmatprep.mubr.f32.mxu0 0.0
    %2072 = vmatmul.mubr.f32.gmra.mrb[0].mxu0 %v1935
    %v2073 = vpop.f32.mrb[0].mxu0
    %v2074 = vadd.f32 %v141, %v2073
    %v2075 = vpop.f32.mrb[0].mxu0
    %v2076 = vadd.f32 %v145, %v2075
    %2077 = vdwg.mxu0
    %v2078 = vmul.f32 %v2003, 0.5
    %v2079 = vtanh.pop %v2078
    %v2080 = vadd.f32 %v2079, 1.0
    %v2081 = vmul.f32 %v2080, 0.5
    %v2082 = vmul.f32 %v2005, 0.5
    %v2083 = vtanh.pop %v2082
    %v2084 = vadd.f32 %v2083, 1.0
    %v2085 = vmul.f32 %v2084, 0.5
    %v2086 = vmul.f32 %v2081, %v2076
    %v2087 = vadd.f32 %v2074, %v2086
    %v2088 = vtanh.pop %v2087
    %v2089 = vsub.f32 1.0, %v2085
    %v2090 = vmul.f32 %v2089, %v2088
    %v2091 = vmul.f32 %v2085, %v1672
    %v2092 = vadd.f32 %v2090, %v2091
    %v2093 = vsel %vm1934, 1, 0
    %vm2094 = vcmp.eq.s32.totalorder %v2093, 1
    %v2095 = vsel %vm2094, %v2092, %v1672
    %v2096 = vadd.f32 %v2092, %v1831
    %2097 = vmatprep.subr.mxu0 %v310
    %2098 = vmatpush1.msra.mxu0 %v309
    %2099 = vmatprep.subr.mxu0 %v314
    %2100 = vmatpush1.msra.mxu0 %v313
    %2101 = vmatprep.subr.mxu0 %v318
    %2102 = vmatpush1.msra.mxu0 %v317
    %2103 = vmatprep.subr.mxu0 %v322
    %2104 = vmatpush1.msra.mxu0 %v321
    %2105 = vmatprep.subr.mxu0 %v326
    %2106 = vmatpush1.msra.mxu0 %v325
    %2107 = vmatprep.subr.mxu0 %v330
    %2108 = vmatpush1.msra.mxu0 %v329
    %2109 = vmatprep.subr.mxu0 %v334
    %2110 = vmatpush1.msra.mxu0 %v333
    %2111 = vmatprep.subr.mxu0 %v338
    %2112 = vmatpush1.msra.mxu0 %v337
    %2113 = vmatprep.subr.mxu0 %v342
    %2114 = vmatpush1.msra.mxu0 %v341
    %2115 = vmatprep.subr.mxu0 %v346
    %2116 = vmatpush1.msra.mxu0 %v345
    %2117 = vmatprep.subr.mxu0 %v350
    %2118 = vmatpush1.msra.mxu0 %v349
    %2119 = vmatprep.subr.mxu0 %v354
    %2120 = vmatpush1.msra.mxu0 %v353
    %2121 = vmatprep.subr.mxu0 %v358
    %2122 = vmatpush1.msra.mxu0 %v357
    %2123 = vmatprep.subr.mxu0 %v362
    %2124 = vmatpush1.msra.mxu0 %v361
    %2125 = vmatprep.subr.mxu0 %v366
    %2126 = vmatpush1.msra.mxu0 %v365
    %2127 = vmatprep.subr.mxu0 %v370
    %2128 = vmatpush1.msra.mxu0 %v369
    %2129 = vmatprep.subr.mxu0 0.0
    %2130 = vmatpush1.msra.mxu0 0.0
    %2131 = vmatprep.subr.mxu0 0.0
    %2132 = vmatpush1.msra.mxu0 0.0
    %2133 = vmatprep.subr.mxu0 0.0
    %2134 = vmatpush1.msra.mxu0 0.0
    %2135 = vmatprep.subr.mxu0 0.0
    %2136 = vmatpush1.msra.mxu0 0.0
    %2137 = vmatprep.subr.mxu0 0.0
    %2138 = vmatpush1.msra.mxu0 0.0
    %2139 = vmatprep.subr.mxu0 0.0
    %2140 = vmatpush1.msra.mxu0 0.0
    %2141 = vmatprep.subr.mxu0 0.0
    %2142 = vmatpush1.msra.mxu0 0.0
    %2143 = vmatprep.subr.mxu0 0.0
    %2144 = vmatpush1.msra.mxu0 0.0
    %2145 = vmatprep.subr.mxu0 0.0
    %2146 = vmatpush1.msra.mxu0 0.0
    %2147 = vmatprep.subr.mxu0 0.0
    %2148 = vmatpush1.msra.mxu0 0.0
    %2149 = vmatprep.subr.mxu0 0.0
    %2150 = vmatpush1.msra.mxu0 0.0
    %2151 = vmatprep.subr.mxu0 0.0
    %2152 = vmatpush1.msra.mxu0 0.0
    %2153 = vmatprep.subr.mxu0 0.0
    %2154 = vmatpush1.msra.mxu0 0.0
    %2155 = vmatprep.subr.mxu0 0.0
    %2156 = vmatpush1.msra.mxu0 0.0
    %2157 = vmatprep.subr.mxu0 0.0
    %2158 = vmatpush1.msra.mxu0 0.0
    %2159 = vmatprep.subr.mxu0 0.0
    %2160 = vmatpush1.msra.mxu0 0.0
    %2161 = vmatprep.mubr.f32.mxu0 0.0
    %2162 = vmatmul.mubr.f32.gmra.mrb[0].mxu0 %v2096
    %v2163 = vpop.f32.mrb[0].mxu0
    %v2164 = vadd.f32 %v377, %v2163
    %v2165 = vpop.f32.mrb[0].mxu0
    %v2166 = vadd.f32 %v381, %v2165
    %2167 = vdwg.mxu0
    %2168 = vmatprep.subr.mxu0 %v312
    %2169 = vmatpush1.msra.mxu0 %v311
    %2170 = vmatprep.subr.mxu0 %v316
    %2171 = vmatpush1.msra.mxu0 %v315
    %2172 = vmatprep.subr.mxu0 %v320
    %2173 = vmatpush1.msra.mxu0 %v319
    %2174 = vmatprep.subr.mxu0 %v324
    %2175 = vmatpush1.msra.mxu0 %v323
    %2176 = vmatprep.subr.mxu0 %v328
    %2177 = vmatpush1.msra.mxu0 %v327
    %2178 = vmatprep.subr.mxu0 %v332
    %2179 = vmatpush1.msra.mxu0 %v331
    %2180 = vmatprep.subr.mxu0 %v336
    %2181 = vmatpush1.msra.mxu0 %v335
    %2182 = vmatprep.subr.mxu0 %v340
    %2183 = vmatpush1.msra.mxu0 %v339
    %2184 = vmatprep.subr.mxu0 %v344
    %2185 = vmatpush1.msra.mxu0 %v343
    %2186 = vmatprep.subr.mxu0 %v348
    %2187 = vmatpush1.msra.mxu0 %v347
    %2188 = vmatprep.subr.mxu0 %v352
    %2189 = vmatpush1.msra.mxu0 %v351
    %2190 = vmatprep.subr.mxu0 %v356
    %2191 = vmatpush1.msra.mxu0 %v355
    %2192 = vmatprep.subr.mxu0 %v360
    %2193 = vmatpush1.msra.mxu0 %v359
    %2194 = vmatprep.subr.mxu0 %v364
    %2195 = vmatpush1.msra.mxu0 %v363
    %2196 = vmatprep.subr.mxu0 %v368
    %2197 = vmatpush1.msra.mxu0 %v367
    %2198 = vmatprep.subr.mxu0 %v372
    %2199 = vmatpush1.msra.mxu0 %v371
    %2200 = vmatprep.subr.mxu0 0.0
    %2201 = vmatpush1.msra.mxu0 0.0
    %2202 = vmatprep.subr.mxu0 0.0
    %2203 = vmatpush1.msra.mxu0 0.0
    %2204 = vmatprep.subr.mxu0 0.0
    %2205 = vmatpush1.msra.mxu0 0.0
    %2206 = vmatprep.subr.mxu0 0.0
    %2207 = vmatpush1.msra.mxu0 0.0
    %2208 = vmatprep.subr.mxu0 0.0
    %2209 = vmatpush1.msra.mxu0 0.0
    %2210 = vmatprep.subr.mxu0 0.0
    %2211 = vmatpush1.msra.mxu0 0.0
    %2212 = vmatprep.subr.mxu0 0.0
    %2213 = vmatpush1.msra.mxu0 0.0
    %2214 = vmatprep.subr.mxu0 0.0
    %2215 = vmatpush1.msra.mxu0 0.0
    %2216 = vmatprep.subr.mxu0 0.0
    %2217 = vmatpush1.msra.mxu0 0.0
    %2218 = vmatprep.subr.mxu0 0.0
    %2219 = vmatpush1.msra.mxu0 0.0
    %2220 = vmatprep.subr.mxu0 0.0
    %2221 = vmatpush1.msra.mxu0 0.0
    %2222 = vmatprep.subr.mxu0 0.0
    %2223 = vmatpush1.msra.mxu0 0.0
    %2224 = vmatprep.subr.mxu0 0.0
    %2225 = vmatpush1.msra.mxu0 0.0
    %2226 = vmatprep.subr.mxu0 0.0
    %2227 = vmatpush1.msra.mxu0 0.0
    %2228 = vmatprep.subr.mxu0 0.0
    %2229 = vmatpush1.msra.mxu0 0.0
    %2230 = vmatprep.subr.mxu0 0.0
    %2231 = vmatpush1.msra.mxu0 0.0
    %2232 = vmatprep.mubr.f32.mxu0 0.0
    %2233 = vmatmul.mubr.f32.gmra.mrb[0].mxu0 %v2096
    %v2234 = vpop.f32.mrb[0].mxu0
    %v2235 = vadd.f32 %v385, %v2234
    %v2236 = vpop.f32.mrb[0].mxu0
    %v2237 = vadd.f32 %v389, %v2236
    %2238 = vdwg.mxu0
    %v2239 = vmul.f32 %v2164, 0.5
    %v2240 = vtanh.pop %v2239
    %v2241 = vadd.f32 %v2240, 1.0
    %v2242 = vmul.f32 %v2241, 0.5
    %v2243 = vmul.f32 %v2166, 0.5
    %v2244 = vtanh.pop %v2243
    %v2245 = vadd.f32 %v2244, 1.0
    %v2246 = vmul.f32 %v2245, 0.5
    %v2247 = vmul.f32 %v2242, %v2237
    %v2248 = vadd.f32 %v2235, %v2247
    %v2249 = vtanh.pop %v2248
    %v2250 = vsub.f32 1.0, %v2246
    %v2251 = vmul.f32 %v2250, %v2249
    %v2252 = vmul.f32 %v2246, %v1831
    %v2253 = vadd.f32 %v2251, %v2252
    %v2254 = vsel %vm2094, %v2253, %v1831
    %2255 = vmatprep.subr.mxu0 0.0
    %2256 = vmatpush1.msra.mxu0 %v551
    %2257 = vmatprep.subr.mxu0 0.0
    %2258 = vmatpush1.msra.mxu0 %v552
    %2259 = vmatprep.subr.mxu0 0.0
    %2260 = vmatpush1.msra.mxu0 %v553
    %2261 = vmatprep.subr.mxu0 0.0
    %2262 = vmatpush1.msra.mxu0 %v554
    %2263 = vmatprep.subr.mxu0 0.0
    %2264 = vmatpush1.msra.mxu0 %v555
    %2265 = vmatprep.subr.mxu0 0.0
    %2266 = vmatpush1.msra.mxu0 %v556
    %2267 = vmatprep.subr.mxu0 0.0
    %2268 = vmatpush1.msra.mxu0 %v557
    %2269 = vmatprep.subr.mxu0 0.0
    %2270 = vmatpush1.msra.mxu0 %v558
    %2271 = vmatprep.subr.mxu0 0.0
    %2272 = vmatpush1.msra.mxu0 %v559
    %2273 = vmatprep.subr.mxu0 0.0
    %2274 = vmatpush1.msra.mxu0 %v560
    %2275 = vmatprep.subr.mxu0 0.0
    %2276 = vmatpush1.msra.mxu0 %v561
    %2277 = vmatprep.subr.mxu0 0.0
    %2278 = vmatpush1.msra.mxu0 %v562
    %2279 = vmatprep.subr.mxu0 0.0
    %2280 = vmatpush1.msra.mxu0 %v563
    %2281 = vmatprep.subr.mxu0 0.0
    %2282 = vmatpush1.msra.mxu0 %v564
    %2283 = vmatprep.subr.mxu0 0.0
    %2284 = vmatpush1.msra.mxu0 %v565
    %2285 = vmatprep.subr.mxu0 0.0
    %2286 = vmatpush1.msra.mxu0 %v566
    %2287 = vmatprep.subr.mxu0 0.0
    %2288 = vmatpush1.msra.mxu0 0.0
    %2289 = vmatprep.subr.mxu0 0.0
    %2290 = vmatpush1.msra.mxu0 0.0
    %2291 = vmatprep.subr.mxu0 0.0
    %2292 = vmatpush1.msra.mxu0 0.0
    %2293 = vmatprep.subr.mxu0 0.0
    %2294 = vmatpush1.msra.mxu0 0.0
    %2295 = vmatprep.subr.mxu0 0.0
    %2296 = vmatpush1.msra.mxu0 0.0
    %2297 = vmatprep.subr.mxu0 0.0
    %2298 = vmatpush1.msra.mxu0 0.0
    %2299 = vmatprep.subr.mxu0 0.0
    %2300 = vmatpush1.msra.mxu0 0.0
    %2301 = vmatprep.subr.mxu0 0.0
    %2302 = vmatpush1.msra.mxu0 0.0
    %2303 = vmatprep.subr.mxu0 0.0
    %2304 = vmatpush1.msra.mxu0 0.0
    %2305 = vmatprep.subr.mxu0 0.0
    %2306 = vmatpush1.msra.mxu0 0.0
    %2307 = vmatprep.subr.mxu0 0.0
    %2308 = vmatpush1.msra.mxu0 0.0
    %2309 = vmatprep.subr.mxu0 0.0
    %2310 = vmatpush1.msra.mxu0 0.0
    %2311 = vmatprep.subr.mxu0 0.0
    %2312 = vmatpush1.msra.mxu0 0.0
    %2313 = vmatprep.subr.mxu0 0.0
    %2314 = vmatpush1.msra.mxu0 0.0
    %2315 = vmatprep.subr.mxu0 0.0
    %2316 = vmatpush1.msra.mxu0 0.0
    %2317 = vmatprep.subr.mxu0 0.0
    %2318 = vmatpush1.msra.mxu0 0.0
    %2319 = vmatprep.mubr.f32.mxu0 0.0
    %2320 = vmatmul.mubr.f32.gmra.mrb[0].mxu0 %v2253
    %v2321 = vpop.f32.mrb[0].mxu0
    %v2322 = vadd.f32 %v63, %v2321
    %v2323 = vpop.f32.mrb[0].mxu0
    %2324 = vdwg.mxu0
    %v2325 = vsel %vm637, %v2322, -inf
    %2326 = vmax.xlane.f32.xlu0 %v2325
    %v2327 = vpop.xlane.xlu0 %2326
    %vm2328 = vcmp.ge.f32.partialorder %v2322, %v2327
    %v2329 = vsel %vm2328, %v51, 128
    %v2330 = vsel %vm637, %v2329, 2147483647
    %v2331 = vand.u32 %v2330, 65535
    %v2332 = vshra.s32 %v2330, 16
    %v2333 = vcvt.s32.f32 %v2331
    %v2334 = vcvt.s32.f32 %v2332
    %2335 = vmin.xlane.f32.xlu0 %v2334
    %v2336 = vpop.xlane.xlu0 %2335
    %vm2337 = vcmp.eq.f32.partialorder %v2334, %v2336
    %v2338 = vsel %vm2337, %v2333, inf
    %2339 = vmin.xlane.f32.xlu0 %v2338
    %v2340 = vpop.xlane.xlu0 %2339
    %v2341 = vcvt.f32.s32 %v2340
    %v2342 = vcvt.f32.s32 %v2336
    %v2343 = vshll.u32 %v2342, 16
    %v2344 = vadd.s32 %v2343, %v2341
    %vm2345 = vcmp.eq.s32.totalorder %v51, %v2344
    %v2346 = vsel %vm2345, 1, 0
    %v2347 = vcvt.s32.f32 %v2346
    %v2348 = vsel %vm2094, %v2347, %v1925
    %vm2349 = vcmp.eq.s32.totalorder %v51, 4
    %vm2350 = vmand %vm2349, %vm2094
    %v2351 = vsel %vm2350, %v2344, %v1928
    %vm2352 = vcmp.eq.s32.totalorder %v2344, 2
    %vm2353 = vcmp.eq.s32.totalorder %v2344, 0
    %vm2354 = vmor %vm2352, %vm2353
    %vm2355 = vmand %vm1934, %vm2354
    %vm2356 = vmor %vm1933, %vm2355
    %vm2357 = vmxor %vm2356, 1
    %v2358 = vadd.f32 %v2348, %v2095
    %2359 = vmatprep.subr.mxu0 %v66
    %2360 = vmatpush1.msra.mxu0 %v65
    %2361 = vmatprep.subr.mxu0 %v70
    %2362 = vmatpush1.msra.mxu0 %v69
    %2363 = vmatprep.subr.mxu0 %v74
    %2364 = vmatpush1.msra.mxu0 %v73
    %2365 = vmatprep.subr.mxu0 %v78
    %2366 = vmatpush1.msra.mxu0 %v77
    %2367 = vmatprep.subr.mxu0 %v82
    %2368 = vmatpush1.msra.mxu0 %v81
    %2369 = vmatprep.subr.mxu0 %v86
    %2370 = vmatpush1.msra.mxu0 %v85
    %2371 = vmatprep.subr.mxu0 %v90
    %2372 = vmatpush1.msra.mxu0 %v89
    %2373 = vmatprep.subr.mxu0 %v94
    %2374 = vmatpush1.msra.mxu0 %v93
    %2375 = vmatprep.subr.mxu0 %v98
    %2376 = vmatpush1.msra.mxu0 %v97
    %2377 = vmatprep.subr.mxu0 %v102
    %2378 = vmatpush1.msra.mxu0 %v101
    %2379 = vmatprep.subr.mxu0 %v106
    %2380 = vmatpush1.msra.mxu0 %v105
    %2381 = vmatprep.subr.mxu0 %v110
    %2382 = vmatpush1.msra.mxu0 %v109
    %2383 = vmatprep.subr.mxu0 %v114
    %2384 = vmatpush1.msra.mxu0 %v113
    %2385 = vmatprep.subr.mxu0 %v118
    %2386 = vmatpush1.msra.mxu0 %v117
    %2387 = vmatprep.subr.mxu0 %v122
    %2388 = vmatpush1.msra.mxu0 %v121
    %2389 = vmatprep.subr.mxu0 %v126
    %2390 = vmatpush1.msra.mxu0 %v125
    %2391 = vmatprep.subr.mxu0 0.0
    %2392 = vmatpush1.msra.mxu0 0.0
    %2393 = vmatprep.subr.mxu0 0.0
    %2394 = vmatpush1.msra.mxu0 0.0
    %2395 = vmatprep.subr.mxu0 0.0
    %2396 = vmatpush1.msra.mxu0 0.0
    %2397 = vmatprep.subr.mxu0 0.0
    %2398 = vmatpush1.msra.mxu0 0.0
    %2399 = vmatprep.subr.mxu0 0.0
    %2400 = vmatpush1.msra.mxu0 0.0
    %2401 = vmatprep.subr.mxu0 0.0
    %2402 = vmatpush1.msra.mxu0 0.0
    %2403 = vmatprep.subr.mxu0 0.0
    %2404 = vmatpush1.msra.mxu0 0.0
    %2405 = vmatprep.subr.mxu0 0.0
    %2406 = vmatpush1.msra.mxu0 0.0
    %2407 = vmatprep.subr.mxu0 0.0
    %2408 = vmatpush1.msra.mxu0 0.0
    %2409 = vmatprep.subr.mxu0 0.0
    %2410 = vmatpush1.msra.mxu0 0.0
    %2411 = vmatprep.subr.mxu0 0.0
    %2412 = vmatpush1.msra.mxu0 0.0
    %2413 = vmatprep.subr.mxu0 0.0
    %2414 = vmatpush1.msra.mxu0 0.0
    %2415 = vmatprep.subr.mxu0 0.0
    %2416 = vmatpush1.msra.mxu0 0.0
    %2417 = vmatprep.subr.mxu0 0.0
    %2418 = vmatpush1.msra.mxu0 0.0
    %2419 = vmatprep.subr.mxu0 0.0
    %2420 = vmatpush1.msra.mxu0 0.0
    %2421 = vmatprep.subr.mxu0 0.0
    %2422 = vmatpush1.msra.mxu0 0.0
    %2423 = vmatprep.mubr.f32.mxu0 0.0
    %2424 = vmatmul.mubr.f32.gmra.mrb[0].mxu0 %v2358
    %v2425 = vpop.f32.mrb[0].mxu0
    %v2426 = vadd.f32 %v133, %v2425
    %v2427 = vpop.f32.mrb[0].mxu0
    %v2428 = vadd.f32 %v137, %v2427
    %2429 = vdwg.mxu0
    %2430 = vmatprep.subr.mxu0 %v68
    %2431 = vmatpush1.msra.mxu0 %v67
    %2432 = vmatprep.subr.mxu0 %v72
    %2433 = vmatpush1.msra.mxu0 %v71
    %2434 = vmatprep.subr.mxu0 %v76
    %2435 = vmatpush1.msra.mxu0 %v75
    %2436 = vmatprep.subr.mxu0 %v80
    %2437 = vmatpush1.msra.mxu0 %v79
    %2438 = vmatprep.subr.mxu0 %v84
    %2439 = vmatpush1.msra.mxu0 %v83
    %2440 = vmatprep.subr.mxu0 %v88
    %2441 = vmatpush1.msra.mxu0 %v87
    %2442 = vmatprep.subr.mxu0 %v92
    %2443 = vmatpush1.msra.mxu0 %v91
    %2444 = vmatprep.subr.mxu0 %v96
    %2445 = vmatpush1.msra.mxu0 %v95
    %2446 = vmatprep.subr.mxu0 %v100
    %2447 = vmatpush1.msra.mxu0 %v99
    %2448 = vmatprep.subr.mxu0 %v104
    %2449 = vmatpush1.msra.mxu0 %v103
    %2450 = vmatprep.subr.mxu0 %v108
    %2451 = vmatpush1.msra.mxu0 %v107
    %2452 = vmatprep.subr.mxu0 %v112
    %2453 = vmatpush1.msra.mxu0 %v111
    %2454 = vmatprep.subr.mxu0 %v116
    %2455 = vmatpush1.msra.mxu0 %v115
    %2456 = vmatprep.subr.mxu0 %v120
    %2457 = vmatpush1.msra.mxu0 %v119
    %2458 = vmatprep.subr.mxu0 %v124
    %2459 = vmatpush1.msra.mxu0 %v123
    %2460 = vmatprep.subr.mxu0 %v128
    %2461 = vmatpush1.msra.mxu0 %v127
    %2462 = vmatprep.subr.mxu0 0.0
    %2463 = vmatpush1.msra.mxu0 0.0
    %2464 = vmatprep.subr.mxu0 0.0
    %2465 = vmatpush1.msra.mxu0 0.0
    %2466 = vmatprep.subr.mxu0 0.0
    %2467 = vmatpush1.msra.mxu0 0.0
    %2468 = vmatprep.subr.mxu0 0.0
    %2469 = vmatpush1.msra.mxu0 0.0
    %2470 = vmatprep.subr.mxu0 0.0
    %2471 = vmatpush1.msra.mxu0 0.0
    %2472 = vmatprep.subr.mxu0 0.0
    %2473 = vmatpush1.msra.mxu0 0.0
    %2474 = vmatprep.subr.mxu0 0.0
    %2475 = vmatpush1.msra.mxu0 0.0
    %2476 = vmatprep.subr.mxu0 0.0
    %2477 = vmatpush1.msra.mxu0 0.0
    %2478 = vmatprep.subr.mxu0 0.0
    %2479 = vmatpush1.msra.mxu0 0.0
    %2480 = vmatprep.subr.mxu0 0.0
    %2481 = vmatpush1.msra.mxu0 0.0
    %2482 = vmatprep.subr.mxu0 0.0
    %2483 = vmatpush1.msra.mxu0 0.0
    %2484 = vmatprep.subr.mxu0 0.0
    %2485 = vmatpush1.msra.mxu0 0.0
    %2486 = vmatprep.subr.mxu0 0.0
    %2487 = vmatpush1.msra.mxu0 0.0
    %2488 = vmatprep.subr.mxu0 0.0
    %2489 = vmatpush1.msra.mxu0 0.0
    %2490 = vmatprep.subr.mxu0 0.0
    %2491 = vmatpush1.msra.mxu0 0.0
    %2492 = vmatprep.subr.mxu0 0.0
    %2493 = vmatpush1.msra.mxu0 0.0
    %2494 = vmatprep.mubr.f32.mxu0 0.0
    %2495 = vmatmul.mubr.f32.gmra.mrb[0].mxu0 %v2358
    %v2496 = vpop.f32.mrb[0].mxu0
    %v2497 = vadd.f32 %v141, %v2496
    %v2498 = vpop.f32.mrb[0].mxu0
    %v2499 = vadd.f32 %v145, %v2498
    %2500 = vdwg.mxu0
    %v2501 = vmul.f32 %v2426, 0.5
    %v2502 = vtanh.pop %v2501
    %v2503 = vadd.f32 %v2502, 1.0
    %v2504 = vmul.f32 %v2503, 0.5
    %v2505 = vmul.f32 %v2428, 0.5
    %v2506 = vtanh.pop %v2505
    %v2507 = vadd.f32 %v2506, 1.0
    %v2508 = vmul.f32 %v2507, 0.5
    %v2509 = vmul.f32 %v2504, %v2499
    %v2510 = vadd.f32 %v2497, %v2509
    %v2511 = vtanh.pop %v2510
    %v2512 = vsub.f32 1.0, %v2508
    %v2513 = vmul.f32 %v2512, %v2511
    %v2514 = vmul.f32 %v2508, %v2095
    %v2515 = vadd.f32 %v2513, %v2514
    %v2516 = vsel %vm2357, 1, 0
    %vm2517 = vcmp.eq.s32.totalorder %v2516, 1
    %v2518 = vsel %vm2517, %v2515, %v2095
    %v2519 = vadd.f32 %v2515, %v2254
    %2520 = vmatprep.subr.mxu0 %v310
    %2521 = vmatpush1.msra.mxu0 %v309
    %2522 = vmatprep.subr.mxu0 %v314
    %2523 = vmatpush1.msra.mxu0 %v313
    %2524 = vmatprep.subr.mxu0 %v318
    %2525 = vmatpush1.msra.mxu0 %v317
    %2526 = vmatprep.subr.mxu0 %v322
    %2527 = vmatpush1.msra.mxu0 %v321
    %2528 = vmatprep.subr.mxu0 %v326
    %2529 = vmatpush1.msra.mxu0 %v325
    %2530 = vmatprep.subr.mxu0 %v330
    %2531 = vmatpush1.msra.mxu0 %v329
    %2532 = vmatprep.subr.mxu0 %v334
    %2533 = vmatpush1.msra.mxu0 %v333
    %2534 = vmatprep.subr.mxu0 %v338
    %2535 = vmatpush1.msra.mxu0 %v337
    %2536 = vmatprep.subr.mxu0 %v342
    %2537 = vmatpush1.msra.mxu0 %v341
    %2538 = vmatprep.subr.mxu0 %v346
    %2539 = vmatpush1.msra.mxu0 %v345
    %2540 = vmatprep.subr.mxu0 %v350
    %2541 = vmatpush1.msra.mxu0 %v349
    %2542 = vmatprep.subr.mxu0 %v354
    %2543 = vmatpush1.msra.mxu0 %v353
    %2544 = vmatprep.subr.mxu0 %v358
    %2545 = vmatpush1.msra.mxu0 %v357
    %2546 = vmatprep.subr.mxu0 %v362
    %2547 = vmatpush1.msra.mxu0 %v361
    %2548 = vmatprep.subr.mxu0 %v366
    %2549 = vmatpush1.msra.mxu0 %v365
    %2550 = vmatprep.subr.mxu0 %v370
    %2551 = vmatpush1.msra.mxu0 %v369
    %2552 = vmatprep.subr.mxu0 0.0
    %2553 = vmatpush1.msra.mxu0 0.0
    %2554 = vmatprep.subr.mxu0 0.0
    %2555 = vmatpush1.msra.mxu0 0.0
    %2556 = vmatprep.subr.mxu0 0.0
    %2557 = vmatpush1.msra.mxu0 0.0
    %2558 = vmatprep.subr.mxu0 0.0
    %2559 = vmatpush1.msra.mxu0 0.0
    %2560 = vmatprep.subr.mxu0 0.0
    %2561 = vmatpush1.msra.mxu0 0.0
    %2562 = vmatprep.subr.mxu0 0.0
    %2563 = vmatpush1.msra.mxu0 0.0
    %2564 = vmatprep.subr.mxu0 0.0
    %2565 = vmatpush1.msra.mxu0 0.0
    %2566 = vmatprep.subr.mxu0 0.0
    %2567 = vmatpush1.msra.mxu0 0.0
    %2568 = vmatprep.subr.mxu0 0.0
    %2569 = vmatpush1.msra.mxu0 0.0
    %2570 = vmatprep.subr.mxu0 0.0
    %2571 = vmatpush1.msra.mxu0 0.0
    %2572 = vmatprep.subr.mxu0 0.0
    %2573 = vmatpush1.msra.mxu0 0.0
    %2574 = vmatprep.subr.mxu0 0.0
    %2575 = vmatpush1.msra.mxu0 0.0
    %2576 = vmatprep.subr.mxu0 0.0
    %2577 = vmatpush1.msra.mxu0 0.0
    %2578 = vmatprep.subr.mxu0 0.0
    %2579 = vmatpush1.msra.mxu0 0.0
    %2580 = vmatprep.subr.mxu0 0.0
    %2581 = vmatpush1.msra.mxu0 0.0
    %2582 = vmatprep.subr.mxu0 0.0
    %2583 = vmatpush1.msra.mxu0 0.0
    %2584 = vmatprep.mubr.f32.mxu0 0.0
    %2585 = vmatmul.mubr.f32.gmra.mrb[0].mxu0 %v2519
    %v2586 = vpop.f32.mrb[0].mxu0
    %v2587 = vadd.f32 %v377, %v2586
    %v2588 = vpop.f32.mrb[0].mxu0
    %v2589 = vadd.f32 %v381, %v2588
    %2590 = vdwg.mxu0
    %2591 = vmatprep.subr.mxu0 %v312
    %2592 = vmatpush1.msra.mxu0 %v311
    %2593 = vmatprep.subr.mxu0 %v316
    %2594 = vmatpush1.msra.mxu0 %v315
    %2595 = vmatprep.subr.mxu0 %v320
    %2596 = vmatpush1.msra.mxu0 %v319
    %2597 = vmatprep.subr.mxu0 %v324
    %2598 = vmatpush1.msra.mxu0 %v323
    %2599 = vmatprep.subr.mxu0 %v328
    %2600 = vmatpush1.msra.mxu0 %v327
    %2601 = vmatprep.subr.mxu0 %v332
    %2602 = vmatpush1.msra.mxu0 %v331
    %2603 = vmatprep.subr.mxu0 %v336
    %2604 = vmatpush1.msra.mxu0 %v335
    %2605 = vmatprep.subr.mxu0 %v340
    %2606 = vmatpush1.msra.mxu0 %v339
    %2607 = vmatprep.subr.mxu0 %v344
    %2608 = vmatpush1.msra.mxu0 %v343
    %2609 = vmatprep.subr.mxu0 %v348
    %2610 = vmatpush1.msra.mxu0 %v347
    %2611 = vmatprep.subr.mxu0 %v352
    %2612 = vmatpush1.msra.mxu0 %v351
    %2613 = vmatprep.subr.mxu0 %v356
    %2614 = vmatpush1.msra.mxu0 %v355
    %2615 = vmatprep.subr.mxu0 %v360
    %2616 = vmatpush1.msra.mxu0 %v359
    %2617 = vmatprep.subr.mxu0 %v364
    %2618 = vmatpush1.msra.mxu0 %v363
    %2619 = vmatprep.subr.mxu0 %v368
    %2620 = vmatpush1.msra.mxu0 %v367
    %2621 = vmatprep.subr.mxu0 %v372
    %2622 = vmatpush1.msra.mxu0 %v371
    %2623 = vmatprep.subr.mxu0 0.0
    %2624 = vmatpush1.msra.mxu0 0.0
    %2625 = vmatprep.subr.mxu0 0.0
    %2626 = vmatpush1.msra.mxu0 0.0
    %2627 = vmatprep.subr.mxu0 0.0
    %2628 = vmatpush1.msra.mxu0 0.0
    %2629 = vmatprep.subr.mxu0 0.0
    %2630 = vmatpush1.msra.mxu0 0.0
    %2631 = vmatprep.subr.mxu0 0.0
    %2632 = vmatpush1.msra.mxu0 0.0
    %2633 = vmatprep.subr.mxu0 0.0
    %2634 = vmatpush1.msra.mxu0 0.0
    %2635 = vmatprep.subr.mxu0 0.0
    %2636 = vmatpush1.msra.mxu0 0.0
    %2637 = vmatprep.subr.mxu0 0.0
    %2638 = vmatpush1.msra.mxu0 0.0
    %2639 = vmatprep.subr.mxu0 0.0
    %2640 = vmatpush1.msra.mxu0 0.0
    %2641 = vmatprep.subr.mxu0 0.0
    %2642 = vmatpush1.msra.mxu0 0.0
    %2643 = vmatprep.subr.mxu0 0.0
    %2644 = vmatpush1.msra.mxu0 0.0
    %2645 = vmatprep.subr.mxu0 0.0
    %2646 = vmatpush1.msra.mxu0 0.0
    %2647 = vmatprep.subr.mxu0 0.0
    %2648 = vmatpush1.msra.mxu0 0.0
    %2649 = vmatprep.subr.mxu0 0.0
    %2650 = vmatpush1.msra.mxu0 0.0
    %2651 = vmatprep.subr.mxu0 0.0
    %2652 = vmatpush1.msra.mxu0 0.0
    %2653 = vmatprep.subr.mxu0 0.0
    %2654 = vmatpush1.msra.mxu0 0.0
    %2655 = vmatprep.mubr.f32.mxu0 0.0
    %2656 = vmatmul.mubr.f32.gmra.mrb[0].mxu0 %v2519
    %v2657 = vpop.f32.mrb[0].mxu0
    %v2658 = vadd.f32 %v385, %v2657
    %v2659 = vpop.f32.mrb[0].mxu0
    %v2660 = vadd.f32 %v389, %v2659
    %2661 = vdwg.mxu0
    %v2662 = vmul.f32 %v2587, 0.5
    %v2663 = vtanh.pop %v2662
    %v2664 = vadd.f32 %v2663, 1.0
    %v2665 = vmul.f32 %v2664, 0.5
    %v2666 = vmul.f32 %v2589, 0.5
    %v2667 = vtanh.pop %v2666
    %v2668 = vadd.f32 %v2667, 1.0
    %v2669 = vmul.f32 %v2668, 0.5
    %v2670 = vmul.f32 %v2665, %v2660
    %v2671 = vadd.f32 %v2658, %v2670
    %v2672 = vtanh.pop %v2671
    %v2673 = vsub.f32 1.0, %v2669
    %v2674 = vmul.f32 %v2673, %v2672
    %v2675 = vmul.f32 %v2669, %v2254
    %v2676 = vadd.f32 %v2674, %v2675
    %v2677 = vsel %vm2517, %v2676, %v2254
    %2678 = vmatprep.subr.mxu0 0.0
    %2679 = vmatpush1.msra.mxu0 %v551
    %2680 = vmatprep.subr.mxu0 0.0
    %2681 = vmatpush1.msra.mxu0 %v552
    %2682 = vmatprep.subr.mxu0 0.0
    %2683 = vmatpush1.msra.mxu0 %v553
    %2684 = vmatprep.subr.mxu0 0.0
    %2685 = vmatpush1.msra.mxu0 %v554
    %2686 = vmatprep.subr.mxu0 0.0
    %2687 = vmatpush1.msra.mxu0 %v555
    %2688 = vmatprep.subr.mxu0 0.0
    %2689 = vmatpush1.msra.mxu0 %v556
    %2690 = vmatprep.subr.mxu0 0.0
    %2691 = vmatpush1.msra.mxu0 %v557
    %2692 = vmatprep.subr.mxu0 0.0
    %2693 = vmatpush1.msra.mxu0 %v558
    %2694 = vmatprep.subr.mxu0 0.0
    %2695 = vmatpush1.msra.mxu0 %v559
    %2696 = vmatprep.subr.mxu0 0.0
    %2697 = vmatpush1.msra.mxu0 %v560
    %2698 = vmatprep.subr.mxu0 0.0
    %2699 = vmatpush1.msra.mxu0 %v561
    %2700 = vmatprep.subr.mxu0 0.0
    %2701 = vmatpush1.msra.mxu0 %v562
    %2702 = vmatprep.subr.mxu0 0.0
    %2703 = vmatpush1.msra.mxu0 %v563
    %2704 = vmatprep.subr.mxu0 0.0
    %2705 = vmatpush1.msra.mxu0 %v564
    %2706 = vmatprep.subr.mxu0 0.0
    %2707 = vmatpush1.msra.mxu0 %v565
    %2708 = vmatprep.subr.mxu0 0.0
    %2709 = vmatpush1.msra.mxu0 %v566
    %2710 = vmatprep.subr.mxu0 0.0
    %2711 = vmatpush1.msra.mxu0 0.0
    %2712 = vmatprep.subr.mxu0 0.0
    %2713 = vmatpush1.msra.mxu0 0.0
    %2714 = vmatprep.subr.mxu0 0.0
    %2715 = vmatpush1.msra.mxu0 0.0
    %2716 = vmatprep.subr.mxu0 0.0
    %2717 = vmatpush1.msra.mxu0 0.0
    %2718 = vmatprep.subr.mxu0 0.0
    %2719 = vmatpush1.msra.mxu0 0.0
    %2720 = vmatprep.subr.mxu0 0.0
    %2721 = vmatpush1.msra.mxu0 0.0
    %2722 = vmatprep.subr.mxu0 0.0
    %2723 = vmatpush1.msra.mxu0 0.0
    %2724 = vmatprep.subr.mxu0 0.0
    %2725 = vmatpush1.msra.mxu0 0.0
    %2726 = vmatprep.subr.mxu0 0.0
    %2727 = vmatpush1.msra.mxu0 0.0
    %2728 = vmatprep.subr.mxu0 0.0
    %2729 = vmatpush1.msra.mxu0 0.0
    %2730 = vmatprep.subr.mxu0 0.0
    %2731 = vmatpush1.msra.mxu0 0.0
    %2732 = vmatprep.subr.mxu0 0.0
    %2733 = vmatpush1.msra.mxu0 0.0
    %2734 = vmatprep.subr.mxu0 0.0
    %2735 = vmatpush1.msra.mxu0 0.0
    %2736 = vmatprep.subr.mxu0 0.0
    %2737 = vmatpush1.msra.mxu0 0.0
    %2738 = vmatprep.subr.mxu0 0.0
    %2739 = vmatpush1.msra.mxu0 0.0
    %2740 = vmatprep.subr.mxu0 0.0
    %2741 = vmatpush1.msra.mxu0 0.0
    %2742 = vmatprep.mubr.f32.mxu0 0.0
    %2743 = vmatmul.mubr.f32.gmra.mrb[0].mxu0 %v2676
    %v2744 = vpop.f32.mrb[0].mxu0
    %v2745 = vadd.f32 %v63, %v2744
    %v2746 = vpop.f32.mrb[0].mxu0
    %2747 = vdwg.mxu0
    %v2748 = vsel %vm637, %v2745, -inf
    %2749 = vmax.xlane.f32.xlu0 %v2748
    %v2750 = vpop.xlane.xlu0 %2749
    %vm2751 = vcmp.ge.f32.partialorder %v2745, %v2750
    %v2752 = vsel %vm2751, %v51, 128
    %v2753 = vsel %vm637, %v2752, 2147483647
    %v2754 = vand.u32 %v2753, 65535
    %v2755 = vshra.s32 %v2753, 16
    %v2756 = vcvt.s32.f32 %v2754
    %v2757 = vcvt.s32.f32 %v2755
    %2758 = vmin.xlane.f32.xlu0 %v2757
    %v2759 = vpop.xlane.xlu0 %2758
    %vm2760 = vcmp.eq.f32.partialorder %v2757, %v2759
    %v2761 = vsel %vm2760, %v2756, inf
    %2762 = vmin.xlane.f32.xlu0 %v2761
    %v2763 = vpop.xlane.xlu0 %2762
    %v2764 = vcvt.f32.s32 %v2763
    %v2765 = vcvt.f32.s32 %v2759
    %v2766 = vshll.u32 %v2765, 16
    %v2767 = vadd.s32 %v2766, %v2764
    %vm2768 = vcmp.eq.s32.totalorder %v51, %v2767
    %v2769 = vsel %vm2768, 1, 0
    %v2770 = vcvt.s32.f32 %v2769
    %v2771 = vsel %vm2517, %v2770, %v2348
    %vm2772 = vcmp.eq.s32.totalorder %v51, 5
    %vm2773 = vmand %vm2772, %vm2517
    %v2774 = vsel %vm2773, %v2767, %v2351
    %vm2775 = vcmp.eq.s32.totalorder %v2767, 2
    %vm2776 = vcmp.eq.s32.totalorder %v2767, 0
    %vm2777 = vmor %vm2775, %vm2776
    %vm2778 = vmand %vm2357, %vm2777
    %vm2779 = vmor %vm2356, %vm2778
    %vm2780 = vmxor %vm2779, 1
    %v2781 = vadd.f32 %v2771, %v2518
    %2782 = vmatprep.subr.mxu0 %v66
    %2783 = vmatpush1.msra.mxu0 %v65
    %2784 = vmatprep.subr.mxu0 %v70
    %2785 = vmatpush1.msra.mxu0 %v69
    %2786 = vmatprep.subr.mxu0 %v74
    %2787 = vmatpush1.msra.mxu0 %v73
    %2788 = vmatprep.subr.mxu0 %v78
    %2789 = vmatpush1.msra.mxu0 %v77
    %2790 = vmatprep.subr.mxu0 %v82
    %2791 = vmatpush1.msra.mxu0 %v81
    %2792 = vmatprep.subr.mxu0 %v86
    %2793 = vmatpush1.msra.mxu0 %v85
    %2794 = vmatprep.subr.mxu0 %v90
    %2795 = vmatpush1.msra.mxu0 %v89
    %2796 = vmatprep.subr.mxu0 %v94
    %2797 = vmatpush1.msra.mxu0 %v93
    %2798 = vmatprep.subr.mxu0 %v98
    %2799 = vmatpush1.msra.mxu0 %v97
    %2800 = vmatprep.subr.mxu0 %v102
    %2801 = vmatpush1.msra.mxu0 %v101
    %2802 = vmatprep.subr.mxu0 %v106
    %2803 = vmatpush1.msra.mxu0 %v105
    %2804 = vmatprep.subr.mxu0 %v110
    %2805 = vmatpush1.msra.mxu0 %v109
    %2806 = vmatprep.subr.mxu0 %v114
    %2807 = vmatpush1.msra.mxu0 %v113
    %2808 = vmatprep.subr.mxu0 %v118
    %2809 = vmatpush1.msra.mxu0 %v117
    %2810 = vmatprep.subr.mxu0 %v122
    %2811 = vmatpush1.msra.mxu0 %v121
    %2812 = vmatprep.subr.mxu0 %v126
    %2813 = vmatpush1.msra.mxu0 %v125
    %2814 = vmatprep.subr.mxu0 0.0
    %2815 = vmatpush1.msra.mxu0 0.0
    %2816 = vmatprep.subr.mxu0 0.0
    %2817 = vmatpush1.msra.mxu0 0.0
    %2818 = vmatprep.subr.mxu0 0.0
    %2819 = vmatpush1.msra.mxu0 0.0
    %2820 = vmatprep.subr.mxu0 0.0
    %2821 = vmatpush1.msra.mxu0 0.0
    %2822 = vmatprep.subr.mxu0 0.0
    %2823 = vmatpush1.msra.mxu0 0.0
    %2824 = vmatprep.subr.mxu0 0.0
    %2825 = vmatpush1.msra.mxu0 0.0
    %2826 = vmatprep.subr.mxu0 0.0
    %2827 = vmatpush1.msra.mxu0 0.0
    %2828 = vmatprep.subr.mxu0 0.0
    %2829 = vmatpush1.msra.mxu0 0.0
    %2830 = vmatprep.subr.mxu0 0.0
    %2831 = vmatpush1.msra.mxu0 0.0
    %2832 = vmatprep.subr.mxu0 0.0
    %2833 = vmatpush1.msra.mxu0 0.0
    %2834 = vmatprep.subr.mxu0 0.0
    %2835 = vmatpush1.msra.mxu0 0.0
    %2836 = vmatprep.subr.mxu0 0.0
    %2837 = vmatpush1.msra.mxu0 0.0
    %2838 = vmatprep.subr.mxu0 0.0
    %2839 = vmatpush1.msra.mxu0 0.0
    %2840 = vmatprep.subr.mxu0 0.0
    %2841 = vmatpush1.msra.mxu0 0.0
    %2842 = vmatprep.subr.mxu0 0.0
    %2843 = vmatpush1.msra.mxu0 0.0
    %2844 = vmatprep.subr.mxu0 0.0
    %2845 = vmatpush1.msra.mxu0 0.0
    %2846 = vmatprep.mubr.f32.mxu0 0.0
    %2847 = vmatmul.mubr.f32.gmra.mrb[0].mxu0 %v2781
    %v2848 = vpop.f32.mrb[0].mxu0
    %v2849 = vadd.f32 %v133, %v2848
    %v2850 = vpop.f32.mrb[0].mxu0
    %v2851 = vadd.f32 %v137, %v2850
    %2852 = vdwg.mxu0
    %2853 = vmatprep.subr.mxu0 %v68
    %2854 = vmatpush1.msra.mxu0 %v67
    %2855 = vmatprep.subr.mxu0 %v72
    %2856 = vmatpush1.msra.mxu0 %v71
    %2857 = vmatprep.subr.mxu0 %v76
    %2858 = vmatpush1.msra.mxu0 %v75
    %2859 = vmatprep.subr.mxu0 %v80
    %2860 = vmatpush1.msra.mxu0 %v79
    %2861 = vmatprep.subr.mxu0 %v84
    %2862 = vmatpush1.msra.mxu0 %v83
    %2863 = vmatprep.subr.mxu0 %v88
    %2864 = vmatpush1.msra.mxu0 %v87
    %2865 = vmatprep.subr.mxu0 %v92
    %2866 = vmatpush1.msra.mxu0 %v91
    %2867 = vmatprep.subr.mxu0 %v96
    %2868 = vmatpush1.msra.mxu0 %v95
    %2869 = vmatprep.subr.mxu0 %v100
    %2870 = vmatpush1.msra.mxu0 %v99
    %2871 = vmatprep.subr.mxu0 %v104
    %2872 = vmatpush1.msra.mxu0 %v103
    %2873 = vmatprep.subr.mxu0 %v108
    %2874 = vmatpush1.msra.mxu0 %v107
    %2875 = vmatprep.subr.mxu0 %v112
    %2876 = vmatpush1.msra.mxu0 %v111
    %2877 = vmatprep.subr.mxu0 %v116
    %2878 = vmatpush1.msra.mxu0 %v115
    %2879 = vmatprep.subr.mxu0 %v120
    %2880 = vmatpush1.msra.mxu0 %v119
    %2881 = vmatprep.subr.mxu0 %v124
    %2882 = vmatpush1.msra.mxu0 %v123
    %2883 = vmatprep.subr.mxu0 %v128
    %2884 = vmatpush1.msra.mxu0 %v127
    %2885 = vmatprep.subr.mxu0 0.0
    %2886 = vmatpush1.msra.mxu0 0.0
    %2887 = vmatprep.subr.mxu0 0.0
    %2888 = vmatpush1.msra.mxu0 0.0
    %2889 = vmatprep.subr.mxu0 0.0
    %2890 = vmatpush1.msra.mxu0 0.0
    %2891 = vmatprep.subr.mxu0 0.0
    %2892 = vmatpush1.msra.mxu0 0.0
    %2893 = vmatprep.subr.mxu0 0.0
    %2894 = vmatpush1.msra.mxu0 0.0
    %2895 = vmatprep.subr.mxu0 0.0
    %2896 = vmatpush1.msra.mxu0 0.0
    %2897 = vmatprep.subr.mxu0 0.0
    %2898 = vmatpush1.msra.mxu0 0.0
    %2899 = vmatprep.subr.mxu0 0.0
    %2900 = vmatpush1.msra.mxu0 0.0
    %2901 = vmatprep.subr.mxu0 0.0
    %2902 = vmatpush1.msra.mxu0 0.0
    %2903 = vmatprep.subr.mxu0 0.0
    %2904 = vmatpush1.msra.mxu0 0.0
    %2905 = vmatprep.subr.mxu0 0.0
    %2906 = vmatpush1.msra.mxu0 0.0
    %2907 = vmatprep.subr.mxu0 0.0
    %2908 = vmatpush1.msra.mxu0 0.0
    %2909 = vmatprep.subr.mxu0 0.0
    %2910 = vmatpush1.msra.mxu0 0.0
    %2911 = vmatprep.subr.mxu0 0.0
    %2912 = vmatpush1.msra.mxu0 0.0
    %2913 = vmatprep.subr.mxu0 0.0
    %2914 = vmatpush1.msra.mxu0 0.0
    %2915 = vmatprep.subr.mxu0 0.0
    %2916 = vmatpush1.msra.mxu0 0.0
    %2917 = vmatprep.mubr.f32.mxu0 0.0
    %2918 = vmatmul.mubr.f32.gmra.mrb[0].mxu0 %v2781
    %v2919 = vpop.f32.mrb[0].mxu0
    %v2920 = vadd.f32 %v141, %v2919
    %v2921 = vpop.f32.mrb[0].mxu0
    %v2922 = vadd.f32 %v145, %v2921
    %2923 = vdwg.mxu0
    %v2924 = vmul.f32 %v2849, 0.5
    %v2925 = vtanh.pop %v2924
    %v2926 = vadd.f32 %v2925, 1.0
    %v2927 = vmul.f32 %v2926, 0.5
    %v2928 = vmul.f32 %v2851, 0.5
    %v2929 = vtanh.pop %v2928
    %v2930 = vadd.f32 %v2929, 1.0
    %v2931 = vmul.f32 %v2930, 0.5
    %v2932 = vmul.f32 %v2927, %v2922
    %v2933 = vadd.f32 %v2920, %v2932
    %v2934 = vtanh.pop %v2933
    %v2935 = vsub.f32 1.0, %v2931
    %v2936 = vmul.f32 %v2935, %v2934
    %v2937 = vmul.f32 %v2931, %v2518
    %v2938 = vadd.f32 %v2936, %v2937
    %v2939 = vsel %vm2780, 1, 0
    %vm2940 = vcmp.eq.s32.totalorder %v2939, 1
    %v2941 = vsel %vm2940, %v2938, %v2518
    %v2942 = vadd.f32 %v2938, %v2677
    %2943 = vmatprep.subr.mxu0 %v310
    %2944 = vmatpush1.msra.mxu0 %v309
    %2945 = vmatprep.subr.mxu0 %v314
    %2946 = vmatpush1.msra.mxu0 %v313
    %2947 = vmatprep.subr.mxu0 %v318
    %2948 = vmatpush1.msra.mxu0 %v317
    %2949 = vmatprep.subr.mxu0 %v322
    %2950 = vmatpush1.msra.mxu0 %v321
    %2951 = vmatprep.subr.mxu0 %v326
    %2952 = vmatpush1.msra.mxu0 %v325
    %2953 = vmatprep.subr.mxu0 %v330
    %2954 = vmatpush1.msra.mxu0 %v329
    %2955 = vmatprep.subr.mxu0 %v334
    %2956 = vmatpush1.msra.mxu0 %v333
    %2957 = vmatprep.subr.mxu0 %v338
    %2958 = vmatpush1.msra.mxu0 %v337
    %2959 = vmatprep.subr.mxu0 %v342
    %2960 = vmatpush1.msra.mxu0 %v341
    %2961 = vmatprep.subr.mxu0 %v346
    %2962 = vmatpush1.msra.mxu0 %v345
    %2963 = vmatprep.subr.mxu0 %v350
    %2964 = vmatpush1.msra.mxu0 %v349
    %2965 = vmatprep.subr.mxu0 %v354
    %2966 = vmatpush1.msra.mxu0 %v353
    %2967 = vmatprep.subr.mxu0 %v358
    %2968 = vmatpush1.msra.mxu0 %v357
    %2969 = vmatprep.subr.mxu0 %v362
    %2970 = vmatpush1.msra.mxu0 %v361
    %2971 = vmatprep.subr.mxu0 %v366
    %2972 = vmatpush1.msra.mxu0 %v365
    %2973 = vmatprep.subr.mxu0 %v370
    %2974 = vmatpush1.msra.mxu0 %v369
    %2975 = vmatprep.subr.mxu0 0.0
    %2976 = vmatpush1.msra.mxu0 0.0
    %2977 = vmatprep.subr.mxu0 0.0
    %2978 = vmatpush1.msra.mxu0 0.0
    %2979 = vmatprep.subr.mxu0 0.0
    %2980 = vmatpush1.msra.mxu0 0.0
    %2981 = vmatprep.subr.mxu0 0.0
    %2982 = vmatpush1.msra.mxu0 0.0
    %2983 = vmatprep.subr.mxu0 0.0
    %2984 = vmatpush1.msra.mxu0 0.0
    %2985 = vmatprep.subr.mxu0 0.0
    %2986 = vmatpush1.msra.mxu0 0.0
    %2987 = vmatprep.subr.mxu0 0.0
    %2988 = vmatpush1.msra.mxu0 0.0
    %2989 = vmatprep.subr.mxu0 0.0
    %2990 = vmatpush1.msra.mxu0 0.0
    %2991 = vmatprep.subr.mxu0 0.0
    %2992 = vmatpush1.msra.mxu0 0.0
    %2993 = vmatprep.subr.mxu0 0.0
    %2994 = vmatpush1.msra.mxu0 0.0
    %2995 = vmatprep.subr.mxu0 0.0
    %2996 = vmatpush1.msra.mxu0 0.0
    %2997 = vmatprep.subr.mxu0 0.0
    %2998 = vmatpush1.msra.mxu0 0.0
    %2999 = vmatprep.subr.mxu0 0.0
    %3000 = vmatpush1.msra.mxu0 0.0
    %3001 = vmatprep.subr.mxu0 0.0
    %3002 = vmatpush1.msra.mxu0 0.0
    %3003 = vmatprep.subr.mxu0 0.0
    %3004 = vmatpush1.msra.mxu0 0.0
    %3005 = vmatprep.subr.mxu0 0.0
    %3006 = vmatpush1.msra.mxu0 0.0
    %3007 = vmatprep.mubr.f32.mxu0 0.0
    %3008 = vmatmul.mubr.f32.gmra.mrb[0].mxu0 %v2942
    %v3009 = vpop.f32.mrb[0].mxu0
    %v3010 = vadd.f32 %v377, %v3009
    %v3011 = vpop.f32.mrb[0].mxu0
    %v3012 = vadd.f32 %v381, %v3011
    %3013 = vdwg.mxu0
    %3014 = vmatprep.subr.mxu0 %v312
    %3015 = vmatpush1.msra.mxu0 %v311
    %3016 = vmatprep.subr.mxu0 %v316
    %3017 = vmatpush1.msra.mxu0 %v315
    %3018 = vmatprep.subr.mxu0 %v320
    %3019 = vmatpush1.msra.mxu0 %v319
    %3020 = vmatprep.subr.mxu0 %v324
    %3021 = vmatpush1.msra.mxu0 %v323
    %3022 = vmatprep.subr.mxu0 %v328
    %3023 = vmatpush1.msra.mxu0 %v327
    %3024 = vmatprep.subr.mxu0 %v332
    %3025 = vmatpush1.msra.mxu0 %v331
    %3026 = vmatprep.subr.mxu0 %v336
    %3027 = vmatpush1.msra.mxu0 %v335
    %3028 = vmatprep.subr.mxu0 %v340
    %3029 = vmatpush1.msra.mxu0 %v339
    %3030 = vmatprep.subr.mxu0 %v344
    %3031 = vmatpush1.msra.mxu0 %v343
    %3032 = vmatprep.subr.mxu0 %v348
    %3033 = vmatpush1.msra.mxu0 %v347
    %3034 = vmatprep.subr.mxu0 %v352
    %3035 = vmatpush1.msra.mxu0 %v351
    %3036 = vmatprep.subr.mxu0 %v356
    %3037 = vmatpush1.msra.mxu0 %v355
    %3038 = vmatprep.subr.mxu0 %v360
    %3039 = vmatpush1.msra.mxu0 %v359
    %3040 = vmatprep.subr.mxu0 %v364
    %3041 = vmatpush1.msra.mxu0 %v363
    %3042 = vmatprep.subr.mxu0 %v368
    %3043 = vmatpush1.msra.mxu0 %v367
    %3044 = vmatprep.subr.mxu0 %v372
    %3045 = vmatpush1.msra.mxu0 %v371
    %3046 = vmatprep.subr.mxu0 0.0
    %3047 = vmatpush1.msra.mxu0 0.0
    %3048 = vmatprep.subr.mxu0 0.0
    %3049 = vmatpush1.msra.mxu0 0.0
    %3050 = vmatprep.subr.mxu0 0.0
    %3051 = vmatpush1.msra.mxu0 0.0
    %3052 = vmatprep.subr.mxu0 0.0
    %3053 = vmatpush1.msra.mxu0 0.0
    %3054 = vmatprep.subr.mxu0 0.0
    %3055 = vmatpush1.msra.mxu0 0.0
    %3056 = vmatprep.subr.mxu0 0.0
    %3057 = vmatpush1.msra.mxu0 0.0
    %3058 = vmatprep.subr.mxu0 0.0
    %3059 = vmatpush1.msra.mxu0 0.0
    %3060 = vmatprep.subr.mxu0 0.0
    %3061 = vmatpush1.msra.mxu0 0.0
    %3062 = vmatprep.subr.mxu0 0.0
    %3063 = vmatpush1.msra.mxu0 0.0
    %3064 = vmatprep.subr.mxu0 0.0
    %3065 = vmatpush1.msra.mxu0 0.0
    %3066 = vmatprep.subr.mxu0 0.0
    %3067 = vmatpush1.msra.mxu0 0.0
    %3068 = vmatprep.subr.mxu0 0.0
    %3069 = vmatpush1.msra.mxu0 0.0
    %3070 = vmatprep.subr.mxu0 0.0
    %3071 = vmatpush1.msra.mxu0 0.0
    %3072 = vmatprep.subr.mxu0 0.0
    %3073 = vmatpush1.msra.mxu0 0.0
    %3074 = vmatprep.subr.mxu0 0.0
    %3075 = vmatpush1.msra.mxu0 0.0
    %3076 = vmatprep.subr.mxu0 0.0
    %3077 = vmatpush1.msra.mxu0 0.0
    %3078 = vmatprep.mubr.f32.mxu0 0.0
    %3079 = vmatmul.mubr.f32.gmra.mrb[0].mxu0 %v2942
    %v3080 = vpop.f32.mrb[0].mxu0
    %v3081 = vadd.f32 %v385, %v3080
    %v3082 = vpop.f32.mrb[0].mxu0
    %v3083 = vadd.f32 %v389, %v3082
    %3084 = vdwg.mxu0
    %v3085 = vmul.f32 %v3010, 0.5
    %v3086 = vtanh.pop %v3085
    %v3087 = vadd.f32 %v3086, 1.0
    %v3088 = vmul.f32 %v3087, 0.5
    %v3089 = vmul.f32 %v3012, 0.5
    %v3090 = vtanh.pop %v3089
    %v3091 = vadd.f32 %v3090, 1.0
    %v3092 = vmul.f32 %v3091, 0.5
    %v3093 = vmul.f32 %v3088, %v3083
    %v3094 = vadd.f32 %v3081, %v3093
    %v3095 = vtanh.pop %v3094
    %v3096 = vsub.f32 1.0, %v3092
    %v3097 = vmul.f32 %v3096, %v3095
    %v3098 = vmul.f32 %v3092, %v2677
    %v3099 = vadd.f32 %v3097, %v3098
    %v3100 = vsel %vm2940, %v3099, %v2677
    %3101 = vmatprep.subr.mxu0 0.0
    %3102 = vmatpush1.msra.mxu0 %v551
    %3103 = vmatprep.subr.mxu0 0.0
    %3104 = vmatpush1.msra.mxu0 %v552
    %3105 = vmatprep.subr.mxu0 0.0
    %3106 = vmatpush1.msra.mxu0 %v553
    %3107 = vmatprep.subr.mxu0 0.0
    %3108 = vmatpush1.msra.mxu0 %v554
    %3109 = vmatprep.subr.mxu0 0.0
    %3110 = vmatpush1.msra.mxu0 %v555
    %3111 = vmatprep.subr.mxu0 0.0
    %3112 = vmatpush1.msra.mxu0 %v556
    %3113 = vmatprep.subr.mxu0 0.0
    %3114 = vmatpush1.msra.mxu0 %v557
    %3115 = vmatprep.subr.mxu0 0.0
    %3116 = vmatpush1.msra.mxu0 %v558
    %3117 = vmatprep.subr.mxu0 0.0
    %3118 = vmatpush1.msra.mxu0 %v559
    %3119 = vmatprep.subr.mxu0 0.0
    %3120 = vmatpush1.msra.mxu0 %v560
    %3121 = vmatprep.subr.mxu0 0.0
    %3122 = vmatpush1.msra.mxu0 %v561
    %3123 = vmatprep.subr.mxu0 0.0
    %3124 = vmatpush1.msra.mxu0 %v562
    %3125 = vmatprep.subr.mxu0 0.0
    %3126 = vmatpush1.msra.mxu0 %v563
    %3127 = vmatprep.subr.mxu0 0.0
    %3128 = vmatpush1.msra.mxu0 %v564
    %3129 = vmatprep.subr.mxu0 0.0
    %3130 = vmatpush1.msra.mxu0 %v565
    %3131 = vmatprep.subr.mxu0 0.0
    %3132 = vmatpush1.msra.mxu0 %v566
    %3133 = vmatprep.subr.mxu0 0.0
    %3134 = vmatpush1.msra.mxu0 0.0
    %3135 = vmatprep.subr.mxu0 0.0
    %3136 = vmatpush1.msra.mxu0 0.0
    %3137 = vmatprep.subr.mxu0 0.0
    %3138 = vmatpush1.msra.mxu0 0.0
    %3139 = vmatprep.subr.mxu0 0.0
    %3140 = vmatpush1.msra.mxu0 0.0
    %3141 = vmatprep.subr.mxu0 0.0
    %3142 = vmatpush1.msra.mxu0 0.0
    %3143 = vmatprep.subr.mxu0 0.0
    %3144 = vmatpush1.msra.mxu0 0.0
    %3145 = vmatprep.subr.mxu0 0.0
    %3146 = vmatpush1.msra.mxu0 0.0
    %3147 = vmatprep.subr.mxu0 0.0
    %3148 = vmatpush1.msra.mxu0 0.0
    %3149 = vmatprep.subr.mxu0 0.0
    %3150 = vmatpush1.msra.mxu0 0.0
    %3151 = vmatprep.subr.mxu0 0.0
    %3152 = vmatpush1.msra.mxu0 0.0
    %3153 = vmatprep.subr.mxu0 0.0
    %3154 = vmatpush1.msra.mxu0 0.0
    %3155 = vmatprep.subr.mxu0 0.0
    %3156 = vmatpush1.msra.mxu0 0.0
    %3157 = vmatprep.subr.mxu0 0.0
    %3158 = vmatpush1.msra.mxu0 0.0
    %3159 = vmatprep.subr.mxu0 0.0
    %3160 = vmatpush1.msra.mxu0 0.0
    %3161 = vmatprep.subr.mxu0 0.0
    %3162 = vmatpush1.msra.mxu0 0.0
    %3163 = vmatprep.subr.mxu0 0.0
    %3164 = vmatpush1.msra.mxu0 0.0
    %3165 = vmatprep.mubr.f32.mxu0 0.0
    %3166 = vmatmul.mubr.f32.gmra.mrb[0].mxu0 %v3099
    %v3167 = vpop.f32.mrb[0].mxu0
    %v3168 = vadd.f32 %v63, %v3167
    %v3169 = vpop.f32.mrb[0].mxu0
    %3170 = vdwg.mxu0
    %v3171 = vsel %vm637, %v3168, -inf
    %3172 = vmax.xlane.f32.xlu0 %v3171
    %v3173 = vpop.xlane.xlu0 %3172
    %vm3174 = vcmp.ge.f32.partialorder %v3168, %v3173
    %v3175 = vsel %vm3174, %v51, 128
    %v3176 = vsel %vm637, %v3175, 2147483647
    %v3177 = vand.u32 %v3176, 65535
    %v3178 = vshra.s32 %v3176, 16
    %v3179 = vcvt.s32.f32 %v3177
    %v3180 = vcvt.s32.f32 %v3178
    %3181 = vmin.xlane.f32.xlu0 %v3180
    %v3182 = vpop.xlane.xlu0 %3181
    %vm3183 = vcmp.eq.f32.partialorder %v3180, %v3182
    %v3184 = vsel %vm3183, %v3179, inf
    %3185 = vmin.xlane.f32.xlu0 %v3184
    %v3186 = vpop.xlane.xlu0 %3185
    %v3187 = vcvt.f32.s32 %v3186
    %v3188 = vcvt.f32.s32 %v3182
    %v3189 = vshll.u32 %v3188, 16
    %v3190 = vadd.s32 %v3189, %v3187
    %vm3191 = vcmp.eq.s32.totalorder %v51, %v3190
    %v3192 = vsel %vm3191, 1, 0
    %v3193 = vcvt.s32.f32 %v3192
    %v3194 = vsel %vm2940, %v3193, %v2771
    %vm3195 = vcmp.eq.s32.totalorder %v51, 6
    %vm3196 = vmand %vm3195, %vm2940
    %v3197 = vsel %vm3196, %v3190, %v2774
    %vm3198 = vcmp.eq.s32.totalorder %v3190, 2
    %vm3199 = vcmp.eq.s32.totalorder %v3190, 0
    %vm3200 = vmor %vm3198, %vm3199
    %vm3201 = vmand %vm2780, %vm3200
    %vm3202 = vmor %vm2779, %vm3201
    %vm3203 = vmxor %vm3202, 1
    %v3204 = vadd.f32 %v3194, %v2941
    %3205 = vmatprep.subr.mxu0 %v66
    %3206 = vmatpush1.msra.mxu0 %v65
    %3207 = vmatprep.subr.mxu0 %v70
    %3208 = vmatpush1.msra.mxu0 %v69
    %3209 = vmatprep.subr.mxu0 %v74
    %3210 = vmatpush1.msra.mxu0 %v73
    %3211 = vmatprep.subr.mxu0 %v78
    %3212 = vmatpush1.msra.mxu0 %v77
    %3213 = vmatprep.subr.mxu0 %v82
    %3214 = vmatpush1.msra.mxu0 %v81
    %3215 = vmatprep.subr.mxu0 %v86
    %3216 = vmatpush1.msra.mxu0 %v85
    %3217 = vmatprep.subr.mxu0 %v90
    %3218 = vmatpush1.msra.mxu0 %v89
    %3219 = vmatprep.subr.mxu0 %v94
    %3220 = vmatpush1.msra.mxu0 %v93
    %3221 = vmatprep.subr.mxu0 %v98
    %3222 = vmatpush1.msra.mxu0 %v97
    %3223 = vmatprep.subr.mxu0 %v102
    %3224 = vmatpush1.msra.mxu0 %v101
    %3225 = vmatprep.subr.mxu0 %v106
    %3226 = vmatpush1.msra.mxu0 %v105
    %3227 = vmatprep.subr.mxu0 %v110
    %3228 = vmatpush1.msra.mxu0 %v109
    %3229 = vmatprep.subr.mxu0 %v114
    %3230 = vmatpush1.msra.mxu0 %v113
    %3231 = vmatprep.subr.mxu0 %v118
    %3232 = vmatpush1.msra.mxu0 %v117
    %3233 = vmatprep.subr.mxu0 %v122
    %3234 = vmatpush1.msra.mxu0 %v121
    %3235 = vmatprep.subr.mxu0 %v126
    %3236 = vmatpush1.msra.mxu0 %v125
    %3237 = vmatprep.subr.mxu0 0.0
    %3238 = vmatpush1.msra.mxu0 0.0
    %3239 = vmatprep.subr.mxu0 0.0
    %3240 = vmatpush1.msra.mxu0 0.0
    %3241 = vmatprep.subr.mxu0 0.0
    %3242 = vmatpush1.msra.mxu0 0.0
    %3243 = vmatprep.subr.mxu0 0.0
    %3244 = vmatpush1.msra.mxu0 0.0
    %3245 = vmatprep.subr.mxu0 0.0
    %3246 = vmatpush1.msra.mxu0 0.0
    %3247 = vmatprep.subr.mxu0 0.0
    %3248 = vmatpush1.msra.mxu0 0.0
    %3249 = vmatprep.subr.mxu0 0.0
    %3250 = vmatpush1.msra.mxu0 0.0
    %3251 = vmatprep.subr.mxu0 0.0
    %3252 = vmatpush1.msra.mxu0 0.0
    %3253 = vmatprep.subr.mxu0 0.0
    %3254 = vmatpush1.msra.mxu0 0.0
    %3255 = vmatprep.subr.mxu0 0.0
    %3256 = vmatpush1.msra.mxu0 0.0
    %3257 = vmatprep.subr.mxu0 0.0
    %3258 = vmatpush1.msra.mxu0 0.0
    %3259 = vmatprep.subr.mxu0 0.0
    %3260 = vmatpush1.msra.mxu0 0.0
    %3261 = vmatprep.subr.mxu0 0.0
    %3262 = vmatpush1.msra.mxu0 0.0
    %3263 = vmatprep.subr.mxu0 0.0
    %3264 = vmatpush1.msra.mxu0 0.0
    %3265 = vmatprep.subr.mxu0 0.0
    %3266 = vmatpush1.msra.mxu0 0.0
    %3267 = vmatprep.subr.mxu0 0.0
    %3268 = vmatpush1.msra.mxu0 0.0
    %3269 = vmatprep.mubr.f32.mxu0 0.0
    %3270 = vmatmul.mubr.f32.gmra.mrb[0].mxu0 %v3204
    %v3271 = vpop.f32.mrb[0].mxu0
    %v3272 = vadd.f32 %v133, %v3271
    %v3273 = vpop.f32.mrb[0].mxu0
    %v3274 = vadd.f32 %v137, %v3273
    %3275 = vdwg.mxu0
    %3276 = vmatprep.subr.mxu0 %v68
    %3277 = vmatpush1.msra.mxu0 %v67
    %3278 = vmatprep.subr.mxu0 %v72
    %3279 = vmatpush1.msra.mxu0 %v71
    %3280 = vmatprep.subr.mxu0 %v76
    %3281 = vmatpush1.msra.mxu0 %v75
    %3282 = vmatprep.subr.mxu0 %v80
    %3283 = vmatpush1.msra.mxu0 %v79
    %3284 = vmatprep.subr.mxu0 %v84
    %3285 = vmatpush1.msra.mxu0 %v83
    %3286 = vmatprep.subr.mxu0 %v88
    %3287 = vmatpush1.msra.mxu0 %v87
    %3288 = vmatprep.subr.mxu0 %v92
    %3289 = vmatpush1.msra.mxu0 %v91
    %3290 = vmatprep.subr.mxu0 %v96
    %3291 = vmatpush1.msra.mxu0 %v95
    %3292 = vmatprep.subr.mxu0 %v100
    %3293 = vmatpush1.msra.mxu0 %v99
    %3294 = vmatprep.subr.mxu0 %v104
    %3295 = vmatpush1.msra.mxu0 %v103
    %3296 = vmatprep.subr.mxu0 %v108
    %3297 = vmatpush1.msra.mxu0 %v107
    %3298 = vmatprep.subr.mxu0 %v112
    %3299 = vmatpush1.msra.mxu0 %v111
    %3300 = vmatprep.subr.mxu0 %v116
    %3301 = vmatpush1.msra.mxu0 %v115
    %3302 = vmatprep.subr.mxu0 %v120
    %3303 = vmatpush1.msra.mxu0 %v119
    %3304 = vmatprep.subr.mxu0 %v124
    %3305 = vmatpush1.msra.mxu0 %v123
    %3306 = vmatprep.subr.mxu0 %v128
    %3307 = vmatpush1.msra.mxu0 %v127
    %3308 = vmatprep.subr.mxu0 0.0
    %3309 = vmatpush1.msra.mxu0 0.0
    %3310 = vmatprep.subr.mxu0 0.0
    %3311 = vmatpush1.msra.mxu0 0.0
    %3312 = vmatprep.subr.mxu0 0.0
    %3313 = vmatpush1.msra.mxu0 0.0
    %3314 = vmatprep.subr.mxu0 0.0
    %3315 = vmatpush1.msra.mxu0 0.0
    %3316 = vmatprep.subr.mxu0 0.0
    %3317 = vmatpush1.msra.mxu0 0.0
    %3318 = vmatprep.subr.mxu0 0.0
    %3319 = vmatpush1.msra.mxu0 0.0
    %3320 = vmatprep.subr.mxu0 0.0
    %3321 = vmatpush1.msra.mxu0 0.0
    %3322 = vmatprep.subr.mxu0 0.0
    %3323 = vmatpush1.msra.mxu0 0.0
    %3324 = vmatprep.subr.mxu0 0.0
    %3325 = vmatpush1.msra.mxu0 0.0
    %3326 = vmatprep.subr.mxu0 0.0
    %3327 = vmatpush1.msra.mxu0 0.0
    %3328 = vmatprep.subr.mxu0 0.0
    %3329 = vmatpush1.msra.mxu0 0.0
    %3330 = vmatprep.subr.mxu0 0.0
    %3331 = vmatpush1.msra.mxu0 0.0
    %3332 = vmatprep.subr.mxu0 0.0
    %3333 = vmatpush1.msra.mxu0 0.0
    %3334 = vmatprep.subr.mxu0 0.0
    %3335 = vmatpush1.msra.mxu0 0.0
    %3336 = vmatprep.subr.mxu0 0.0
    %3337 = vmatpush1.msra.mxu0 0.0
    %3338 = vmatprep.subr.mxu0 0.0
    %3339 = vmatpush1.msra.mxu0 0.0
    %3340 = vmatprep.mubr.f32.mxu0 0.0
    %3341 = vmatmul.mubr.f32.gmra.mrb[0].mxu0 %v3204
    %v3342 = vpop.f32.mrb[0].mxu0
    %v3343 = vadd.f32 %v141, %v3342
    %v3344 = vpop.f32.mrb[0].mxu0
    %v3345 = vadd.f32 %v145, %v3344
    %3346 = vdwg.mxu0
    %v3347 = vmul.f32 %v3272, 0.5
    %v3348 = vtanh.pop %v3347
    %v3349 = vadd.f32 %v3348, 1.0
    %v3350 = vmul.f32 %v3349, 0.5
    %v3351 = vmul.f32 %v3274, 0.5
    %v3352 = vtanh.pop %v3351
    %v3353 = vadd.f32 %v3352, 1.0
    %v3354 = vmul.f32 %v3353, 0.5
    %v3355 = vmul.f32 %v3350, %v3345
    %v3356 = vadd.f32 %v3343, %v3355
    %v3357 = vtanh.pop %v3356
    %v3358 = vsub.f32 1.0, %v3354
    %v3359 = vmul.f32 %v3358, %v3357
    %v3360 = vmul.f32 %v3354, %v2941
    %v3361 = vadd.f32 %v3359, %v3360
    %v3362 = vsel %vm3203, 1, 0
    %vm3363 = vcmp.eq.s32.totalorder %v3362, 1
    %v3364 = vsel %vm3363, %v3361, %v2941
    %v3365 = vadd.f32 %v3361, %v3100
    %3366 = vmatprep.subr.mxu0 %v310
    %3367 = vmatpush1.msra.mxu0 %v309
    %3368 = vmatprep.subr.mxu0 %v314
    %3369 = vmatpush1.msra.mxu0 %v313
    %3370 = vmatprep.subr.mxu0 %v318
    %3371 = vmatpush1.msra.mxu0 %v317
    %3372 = vmatprep.subr.mxu0 %v322
    %3373 = vmatpush1.msra.mxu0 %v321
    %3374 = vmatprep.subr.mxu0 %v326
    %3375 = vmatpush1.msra.mxu0 %v325
    %3376 = vmatprep.subr.mxu0 %v330
    %3377 = vmatpush1.msra.mxu0 %v329
    %3378 = vmatprep.subr.mxu0 %v334
    %3379 = vmatpush1.msra.mxu0 %v333
    %3380 = vmatprep.subr.mxu0 %v338
    %3381 = vmatpush1.msra.mxu0 %v337
    %3382 = vmatprep.subr.mxu0 %v342
    %3383 = vmatpush1.msra.mxu0 %v341
    %3384 = vmatprep.subr.mxu0 %v346
    %3385 = vmatpush1.msra.mxu0 %v345
    %3386 = vmatprep.subr.mxu0 %v350
    %3387 = vmatpush1.msra.mxu0 %v349
    %3388 = vmatprep.subr.mxu0 %v354
    %3389 = vmatpush1.msra.mxu0 %v353
    %3390 = vmatprep.subr.mxu0 %v358
    %3391 = vmatpush1.msra.mxu0 %v357
    %3392 = vmatprep.subr.mxu0 %v362
    %3393 = vmatpush1.msra.mxu0 %v361
    %3394 = vmatprep.subr.mxu0 %v366
    %3395 = vmatpush1.msra.mxu0 %v365
    %3396 = vmatprep.subr.mxu0 %v370
    %3397 = vmatpush1.msra.mxu0 %v369
    %3398 = vmatprep.subr.mxu0 0.0
    %3399 = vmatpush1.msra.mxu0 0.0
    %3400 = vmatprep.subr.mxu0 0.0
    %3401 = vmatpush1.msra.mxu0 0.0
    %3402 = vmatprep.subr.mxu0 0.0
    %3403 = vmatpush1.msra.mxu0 0.0
    %3404 = vmatprep.subr.mxu0 0.0
    %3405 = vmatpush1.msra.mxu0 0.0
    %3406 = vmatprep.subr.mxu0 0.0
    %3407 = vmatpush1.msra.mxu0 0.0
    %3408 = vmatprep.subr.mxu0 0.0
    %3409 = vmatpush1.msra.mxu0 0.0
    %3410 = vmatprep.subr.mxu0 0.0
    %3411 = vmatpush1.msra.mxu0 0.0
    %3412 = vmatprep.subr.mxu0 0.0
    %3413 = vmatpush1.msra.mxu0 0.0
    %3414 = vmatprep.subr.mxu0 0.0
    %3415 = vmatpush1.msra.mxu0 0.0
    %3416 = vmatprep.subr.mxu0 0.0
    %3417 = vmatpush1.msra.mxu0 0.0
    %3418 = vmatprep.subr.mxu0 0.0
    %3419 = vmatpush1.msra.mxu0 0.0
    %3420 = vmatprep.subr.mxu0 0.0
    %3421 = vmatpush1.msra.mxu0 0.0
    %3422 = vmatprep.subr.mxu0 0.0
    %3423 = vmatpush1.msra.mxu0 0.0
    %3424 = vmatprep.subr.mxu0 0.0
    %3425 = vmatpush1.msra.mxu0 0.0
    %3426 = vmatprep.subr.mxu0 0.0
    %3427 = vmatpush1.msra.mxu0 0.0
    %3428 = vmatprep.subr.mxu0 0.0
    %3429 = vmatpush1.msra.mxu0 0.0
    %3430 = vmatprep.mubr.f32.mxu0 0.0
    %3431 = vmatmul.mubr.f32.gmra.mrb[0].mxu0 %v3365
    %v3432 = vpop.f32.mrb[0].mxu0
    %v3433 = vadd.f32 %v377, %v3432
    %v3434 = vpop.f32.mrb[0].mxu0
    %v3435 = vadd.f32 %v381, %v3434
    %3436 = vdwg.mxu0
    %3437 = vmatprep.subr.mxu0 %v312
    %3438 = vmatpush1.msra.mxu0 %v311
    %3439 = vmatprep.subr.mxu0 %v316
    %3440 = vmatpush1.msra.mxu0 %v315
    %3441 = vmatprep.subr.mxu0 %v320
    %3442 = vmatpush1.msra.mxu0 %v319
    %3443 = vmatprep.subr.mxu0 %v324
    %3444 = vmatpush1.msra.mxu0 %v323
    %3445 = vmatprep.subr.mxu0 %v328
    %3446 = vmatpush1.msra.mxu0 %v327
    %3447 = vmatprep.subr.mxu0 %v332
    %3448 = vmatpush1.msra.mxu0 %v331
    %3449 = vmatprep.subr.mxu0 %v336
    %3450 = vmatpush1.msra.mxu0 %v335
    %3451 = vmatprep.subr.mxu0 %v340
    %3452 = vmatpush1.msra.mxu0 %v339
    %3453 = vmatprep.subr.mxu0 %v344
    %3454 = vmatpush1.msra.mxu0 %v343
    %3455 = vmatprep.subr.mxu0 %v348
    %3456 = vmatpush1.msra.mxu0 %v347
    %3457 = vmatprep.subr.mxu0 %v352
    %3458 = vmatpush1.msra.mxu0 %v351
    %3459 = vmatprep.subr.mxu0 %v356
    %3460 = vmatpush1.msra.mxu0 %v355
    %3461 = vmatprep.subr.mxu0 %v360
    %3462 = vmatpush1.msra.mxu0 %v359
    %3463 = vmatprep.subr.mxu0 %v364
    %3464 = vmatpush1.msra.mxu0 %v363
    %3465 = vmatprep.subr.mxu0 %v368
    %3466 = vmatpush1.msra.mxu0 %v367
    %3467 = vmatprep.subr.mxu0 %v372
    %3468 = vmatpush1.msra.mxu0 %v371
    %3469 = vmatprep.subr.mxu0 0.0
    %3470 = vmatpush1.msra.mxu0 0.0
    %3471 = vmatprep.subr.mxu0 0.0
    %3472 = vmatpush1.msra.mxu0 0.0
    %3473 = vmatprep.subr.mxu0 0.0
    %3474 = vmatpush1.msra.mxu0 0.0
    %3475 = vmatprep.subr.mxu0 0.0
    %3476 = vmatpush1.msra.mxu0 0.0
    %3477 = vmatprep.subr.mxu0 0.0
    %3478 = vmatpush1.msra.mxu0 0.0
    %3479 = vmatprep.subr.mxu0 0.0
    %3480 = vmatpush1.msra.mxu0 0.0
    %3481 = vmatprep.subr.mxu0 0.0
    %3482 = vmatpush1.msra.mxu0 0.0
    %3483 = vmatprep.subr.mxu0 0.0
    %3484 = vmatpush1.msra.mxu0 0.0
    %3485 = vmatprep.subr.mxu0 0.0
    %3486 = vmatpush1.msra.mxu0 0.0
    %3487 = vmatprep.subr.mxu0 0.0
    %3488 = vmatpush1.msra.mxu0 0.0
    %3489 = vmatprep.subr.mxu0 0.0
    %3490 = vmatpush1.msra.mxu0 0.0
    %3491 = vmatprep.subr.mxu0 0.0
    %3492 = vmatpush1.msra.mxu0 0.0
    %3493 = vmatprep.subr.mxu0 0.0
    %3494 = vmatpush1.msra.mxu0 0.0
    %3495 = vmatprep.subr.mxu0 0.0
    %3496 = vmatpush1.msra.mxu0 0.0
    %3497 = vmatprep.subr.mxu0 0.0
    %3498 = vmatpush1.msra.mxu0 0.0
    %3499 = vmatprep.subr.mxu0 0.0
    %3500 = vmatpush1.msra.mxu0 0.0
    %3501 = vmatprep.mubr.f32.mxu0 0.0
    %3502 = vmatmul.mubr.f32.gmra.mrb[0].mxu0 %v3365
    %v3503 = vpop.f32.mrb[0].mxu0
    %v3504 = vadd.f32 %v385, %v3503
    %v3505 = vpop.f32.mrb[0].mxu0
    %v3506 = vadd.f32 %v389, %v3505
    %3507 = vdwg.mxu0
    %v3508 = vmul.f32 %v3433, 0.5
    %v3509 = vtanh.pop %v3508
    %v3510 = vadd.f32 %v3509, 1.0
    %v3511 = vmul.f32 %v3510, 0.5
    %v3512 = vmul.f32 %v3435, 0.5
    %v3513 = vtanh.pop %v3512
    %v3514 = vadd.f32 %v3513, 1.0
    %v3515 = vmul.f32 %v3514, 0.5
    %v3516 = vmul.f32 %v3511, %v3506
    %v3517 = vadd.f32 %v3504, %v3516
    %v3518 = vtanh.pop %v3517
    %v3519 = vsub.f32 1.0, %v3515
    %v3520 = vmul.f32 %v3519, %v3518
    %v3521 = vmul.f32 %v3515, %v3100
    %v3522 = vadd.f32 %v3520, %v3521
    %v3523 = vsel %vm3363, %v3522, %v3100
    %3524 = vmatprep.subr.mxu0 0.0
    %3525 = vmatpush1.msra.mxu0 %v551
    %3526 = vmatprep.subr.mxu0 0.0
    %3527 = vmatpush1.msra.mxu0 %v552
    %3528 = vmatprep.subr.mxu0 0.0
    %3529 = vmatpush1.msra.mxu0 %v553
    %3530 = vmatprep.subr.mxu0 0.0
    %3531 = vmatpush1.msra.mxu0 %v554
    %3532 = vmatprep.subr.mxu0 0.0
    %3533 = vmatpush1.msra.mxu0 %v555
    %3534 = vmatprep.subr.mxu0 0.0
    %3535 = vmatpush1.msra.mxu0 %v556
    %3536 = vmatprep.subr.mxu0 0.0
    %3537 = vmatpush1.msra.mxu0 %v557
    %3538 = vmatprep.subr.mxu0 0.0
    %3539 = vmatpush1.msra.mxu0 %v558
    %3540 = vmatprep.subr.mxu0 0.0
    %3541 = vmatpush1.msra.mxu0 %v559
    %3542 = vmatprep.subr.mxu0 0.0
    %3543 = vmatpush1.msra.mxu0 %v560
    %3544 = vmatprep.subr.mxu0 0.0
    %3545 = vmatpush1.msra.mxu0 %v561
    %3546 = vmatprep.subr.mxu0 0.0
    %3547 = vmatpush1.msra.mxu0 %v562
    %3548 = vmatprep.subr.mxu0 0.0
    %3549 = vmatpush1.msra.mxu0 %v563
    %3550 = vmatprep.subr.mxu0 0.0
    %3551 = vmatpush1.msra.mxu0 %v564
    %3552 = vmatprep.subr.mxu0 0.0
    %3553 = vmatpush1.msra.mxu0 %v565
    %3554 = vmatprep.subr.mxu0 0.0
    %3555 = vmatpush1.msra.mxu0 %v566
    %3556 = vmatprep.subr.mxu0 0.0
    %3557 = vmatpush1.msra.mxu0 0.0
    %3558 = vmatprep.subr.mxu0 0.0
    %3559 = vmatpush1.msra.mxu0 0.0
    %3560 = vmatprep.subr.mxu0 0.0
    %3561 = vmatpush1.msra.mxu0 0.0
    %3562 = vmatprep.subr.mxu0 0.0
    %3563 = vmatpush1.msra.mxu0 0.0
    %3564 = vmatprep.subr.mxu0 0.0
    %3565 = vmatpush1.msra.mxu0 0.0
    %3566 = vmatprep.subr.mxu0 0.0
    %3567 = vmatpush1.msra.mxu0 0.0
    %3568 = vmatprep.subr.mxu0 0.0
    %3569 = vmatpush1.msra.mxu0 0.0
    %3570 = vmatprep.subr.mxu0 0.0
    %3571 = vmatpush1.msra.mxu0 0.0
    %3572 = vmatprep.subr.mxu0 0.0
    %3573 = vmatpush1.msra.mxu0 0.0
    %3574 = vmatprep.subr.mxu0 0.0
    %3575 = vmatpush1.msra.mxu0 0.0
    %3576 = vmatprep.subr.mxu0 0.0
    %3577 = vmatpush1.msra.mxu0 0.0
    %3578 = vmatprep.subr.mxu0 0.0
    %3579 = vmatpush1.msra.mxu0 0.0
    %3580 = vmatprep.subr.mxu0 0.0
    %3581 = vmatpush1.msra.mxu0 0.0
    %3582 = vmatprep.subr.mxu0 0.0
    %3583 = vmatpush1.msra.mxu0 0.0
    %3584 = vmatprep.subr.mxu0 0.0
    %3585 = vmatpush1.msra.mxu0 0.0
    %3586 = vmatprep.subr.mxu0 0.0
    %3587 = vmatpush1.msra.mxu0 0.0
    %3588 = vmatprep.mubr.f32.mxu0 0.0
    %3589 = vmatmul.mubr.f32.gmra.mrb[0].mxu0 %v3522
    %v3590 = vpop.f32.mrb[0].mxu0
    %v3591 = vadd.f32 %v63, %v3590
    %v3592 = vpop.f32.mrb[0].mxu0
    %3593 = vdwg.mxu0
    %v3594 = vsel %vm637, %v3591, -inf
    %3595 = vmax.xlane.f32.xlu0 %v3594
    %v3596 = vpop.xlane.xlu0 %3595
    %vm3597 = vcmp.ge.f32.partialorder %v3591, %v3596
    %v3598 = vsel %vm3597, %v51, 128
    %v3599 = vsel %vm637, %v3598, 2147483647
    %v3600 = vand.u32 %v3599, 65535
    %v3601 = vshra.s32 %v3599, 16
    %v3602 = vcvt.s32.f32 %v3600
    %v3603 = vcvt.s32.f32 %v3601
    %3604 = vmin.xlane.f32.xlu0 %v3603
    %v3605 = vpop.xlane.xlu0 %3604
    %vm3606 = vcmp.eq.f32.partialorder %v3603, %v3605
    %v3607 = vsel %vm3606, %v3602, inf
    %3608 = vmin.xlane.f32.xlu0 %v3607
    %v3609 = vpop.xlane.xlu0 %3608
    %v3610 = vcvt.f32.s32 %v3609
    %v3611 = vcvt.f32.s32 %v3605
    %v3612 = vshll.u32 %v3611, 16
    %v3613 = vadd.s32 %v3612, %v3610
    %vm3614 = vcmp.eq.s32.totalorder %v51, 7
    %vm3615 = vmand %vm3614, %vm3363
    %v3616 = vsel %vm3615, %v3613, %v3197
    %3617 = vst [vmem:[%s5] sm:$0x1] %v3616
    %3618 = vst [vmem:[%s6] sm:$0x1] %v3364
    %s3619 = scalar_lea.vmem %s6, 1
    %3620 = vst [vmem:[%s3619] sm:$0x1] %v3523
    // Predicated region
    $region30: #{greedy_decode.1} parent=1 // pred_check
      _
    $region31: #{greedy_decode.1} parent=1 // pred_check_branch
      %3622 = sbr.rel (0) target = $region33
    $region32: #{greedy_decode.1} parent=1 // pred_region
      _
    $region33: #{greedy_decode.1} parent=1 // pred_fallthru
      _
    // Predicated region
    $region34: #{greedy_decode.1} parent=1 // pred_check
      _
    $region35: #{greedy_decode.1} parent=1 // pred_check_branch
      %3624 = sbr.rel (0) target = $region37
    $region36: #{greedy_decode.1} parent=1 // pred_region
      _
    $region37: #{greedy_decode.1} parent=1 // pred_fallthru
      _
    // Predicated region
    $region38: #{greedy_decode.1} parent=1 // pred_check
      _
    $region39: #{greedy_decode.1} parent=1 // pred_check_branch
      %3626 = sbr.rel (0) target = $region41
    $region40: #{greedy_decode.1} parent=1 // pred_region
      _
    $region41: #{greedy_decode.1} parent=1 // pred_fallthru
      _
    // Predicated region
    $region42: #{greedy_decode.1} parent=1 // pred_check
      _
    $region43: #{greedy_decode.1} parent=1 // pred_check_branch
      %3628 = sbr.rel (0) target = $region45
    $region44: #{greedy_decode.1} parent=1 // pred_region
      _
    $region45: #{greedy_decode.1} parent=1 // pred_fallthru
      _
    %3629 = vsyncpa [#allocation3], 1
    %3630 = vsyncpa [#allocation5], 1

</llo_original>
